<compile_context>
chip_gen: v6e
topology: v6e:2x2x1
jax: 0.10.0
libtpu: 0.0.40
codegen_flags: <defaults>
</compile_context>

<pallas_src>
import jax
import jax.numpy as jnp
from jax.experimental import pallas as pl
from jax.experimental.pallas import tpu as pltpu

MATMUL_DTYPE = jnp.bfloat16   # bf16-native MXU on v5e/v6e/v7x; math stays f32
_UNROLL_T_MAX = 16            # fully unroll the t-loop up to this length


def _round_up(n, m):
    return ((n + m - 1) // m) * m


# ----------------------------------------------------------------------------
# Single fused kernel: all LSTM layers + final Linear.
# ----------------------------------------------------------------------------
def _fused_lstm_fc_kernel(x_ref, wih0_ref, wihr_ref, whh_ref, b_ref,
                          fcw_ref, fcb_ref, out_ref, hseq_scr, xproj_scr):
    TB, HP = hseq_scr.shape          # TB = T * padded_batch, HP = padded hidden
    L = whh_ref.shape[0]             # number of LSTM layers
    B = out_ref.shape[0]             # padded batch (multiple of 8)
    T = TB // B
    mm = whh_ref.dtype               # MXU operand dtype (bf16)

    h = jnp.zeros((B, HP), jnp.float32)
    for layer in range(L):                       # static layer loop
        # ---- Hoisted input projection: ONE big MXU matmul over the whole
        # sequence, bias folded in here (no per-step broadcast).
        if layer == 0:
            xin, w_in = x_ref[...], wih0_ref[...]          # (TB, WP), (WP, 4HP)
        else:
            xin, w_in = hseq_scr[...], wihr_ref[layer - 1]  # (TB, HP), (HP, 4HP)
        xproj_scr[...] = (jnp.dot(xin.astype(mm), w_in,
                                  preferred_element_type=jnp.float32)
                          + b_ref[layer])                   # (TB, 4HP)

        # ---- Recurrence: only the HP-wide h @ W_hh matmul on the serial chain.
        write_hseq = layer < L - 1

        def step(t, h, c, *, _layer=layer, _write=write_hseq):
            if isinstance(t, int):
                row = t * B                                  # static slice
            else:
                row = pl.multiple_of(t * B, 8)               # B is multiple of 8
            gates = xproj_scr[pl.ds(row, B), :] + jnp.dot(
                h.astype(mm), whh_ref[_layer],
                preferred_element_type=jnp.float32)          # (B, 4HP)
            # PyTorch gate order [i, f, g, o]; 128-lane-aligned (free) slices.
            i_g = jax.nn.sigmoid(gates[:, 0 * HP:1 * HP])
            f_g = jax.nn.sigmoid(gates[:, 1 * HP:2 * HP])
            g_g = jnp.tanh(gates[:, 2 * HP:3 * HP])
            o_g = jax.nn.sigmoid(gates[:, 3 * HP:4 * HP])
            c_new = f_g * c + i_g * g_g
            h_new = o_g * jnp.tanh(c_new)
            if _write:
                # This layer's hidden sequence feeds the next layer's hoisted
                # input projection.
                hseq_scr[pl.ds(row, B), :] = h_new
            return h_new, c_new

        h = jnp.zeros((B, HP), jnp.float32)
        c = jnp.zeros((B, HP), jnp.float32)
        if T <= _UNROLL_T_MAX:
            for t in range(T):                   # static full unroll (small T)
                h, c = step(t, h, c)
        else:
            h, c = jax.lax.fori_loop(
                0, T, lambda t, hc: step(t, hc[0], hc[1]), (h, c), unroll=2)

    # ---- Final Linear on the last timestep's hidden state (lane-dense out).
    out_ref[...] = (jnp.dot(h.astype(fcw_ref.dtype), fcw_ref[...],
                            preferred_element_type=jnp.float32)
                    + fcb_ref[...])


def lstm_model_forward(x_btd, packed, *, output_dim):
    """x_btd: (B, T, D) batch_first, as in the PyTorch module. Returns (B, O)."""
    wih0, wihr, whh = packed["wih0"], packed["wihr"], packed["whh"]
    bias, fc_w, fc_b = packed["bias"], packed["fc_w"], packed["fc_b"]
    B, T, D = x_btd.shape
    WP, G4 = wih0.shape
    HP = G4 // 4
    L = whh.shape[0]
    LR = wihr.shape[0]
    OP = fc_w.shape[1]
    BP = _round_up(B, 8)                                     # sublane-aligned batch

    x = jnp.transpose(x_btd, (1, 0, 2)).astype(jnp.float32)  # (T, B, D)
    x = jnp.pad(x, ((0, 0), (0, BP - B), (0, WP - D)))       # (T, BP, WP) lane-dense
    x = x.reshape(T * BP, WP)                                # flat rows for one matmul

    out_p = pl.pallas_call(
        _fused_lstm_fc_kernel,
        out_shape=jax.ShapeDtypeStruct((BP, OP), jnp.float32),
        in_specs=[
            pl.BlockSpec((T * BP, WP), lambda: (0, 0)),
            pl.BlockSpec((WP, G4), lambda: (0, 0)),
            pl.BlockSpec((LR, HP, G4), lambda: (0, 0, 0)),
            pl.BlockSpec((L, HP, G4), lambda: (0, 0, 0)),
            pl.BlockSpec((L, 1, G4), lambda: (0, 0, 0)),
            pl.BlockSpec((HP, OP), lambda: (0, 0)),
            pl.BlockSpec((1, OP), lambda: (0, 0)),
        ],
        out_specs=pl.BlockSpec((BP, OP), lambda: (0, 0)),
        scratch_shapes=[
            pltpu.VMEM((T * BP, HP), jnp.float32),   # inter-layer hidden sequence
            pltpu.VMEM((T * BP, G4), jnp.float32),   # per-layer input projections
        ],
        compiler_params=pltpu.CompilerParams(
            vmem_limit_bytes=32 * 1024 * 1024),
    )(x, wih0, wihr, whh, bias, fc_w, fc_b)
    return out_p[:B, :output_dim]


# ----------------------------------------------------------------------------
# Parameter init (PyTorch layout) + packing into the padded/split layout.
# ----------------------------------------------------------------------------
def init_params(key, input_dim, hidden_dim, layer_dim, output_dim):
    k = 1.0 / jnp.sqrt(jnp.float32(hidden_dim))
    raw = {"layers": []}
    for l in range(layer_dim):
        d_in = input_dim if l == 0 else hidden_dim
        key, k1, k2, k3, k4 = jax.random.split(key, 5)
        raw["layers"].append({
            "w_ih": jax.random.uniform(k1, (4 * hidden_dim, d_in), jnp.float32, -k, k),
            "w_hh": jax.random.uniform(k2, (4 * hidden_dim, hidden_dim), jnp.float32, -k, k),
            "b_ih": jax.random.uniform(k3, (4 * hidden_dim,), jnp.float32, -k, k),
            "b_hh": jax.random.uniform(k4, (4 * hidden_dim,), jnp.float32, -k, k),
        })
    key, k5, k6 = jax.random.split(key, 3)
    raw["fc_w"] = jax.random.uniform(k5, (output_dim, hidden_dim), jnp.float32, -k, k)
    raw["fc_b"] = jax.random.uniform(k6, (output_dim,), jnp.float32, -k, k)
    return raw


def pack_params(raw, input_dim, hidden_dim, output_dim,
                matmul_dtype=MATMUL_DTYPE):
    """Pad to 128-lane tiles; keep W_ih / W_hh separate (hoisted projection)."""
    HP = _round_up(hidden_dim, 128)
    WP = _round_up(input_dim, 128)
    OP = _round_up(output_dim, 128)

    def pad_gates(w_t, rows_to):                 # (rows, 4H) -> (rows_to, 4*HP)
        r = w_t.shape[0]
        w4 = w_t.reshape(r, 4, hidden_dim)
        w4 = jnp.pad(w4, ((0, 0), (0, 0), (0, HP - hidden_dim)))
        return jnp.pad(w4.reshape(r, 4 * HP), ((0, rows_to - r), (0, 0)))

    layers = raw["layers"]
    wih0 = pad_gates(jnp.transpose(layers[0]["w_ih"]), WP)            # (WP, 4HP)
    wihr = [pad_gates(jnp.transpose(l["w_ih"]), HP) for l in layers[1:]]
    if not wihr:                                                      # L == 1
        wihr = [jnp.zeros((HP, 4 * HP), jnp.float32)]                 # never read
    whh = [pad_gates(jnp.transpose(l["w_hh"]), HP) for l in layers]   # (HP, 4HP)

    bias = []
    for l in layers:
        b = (l["b_ih"] + l["b_hh"]).reshape(4, hidden_dim)
        bias.append(jnp.pad(b, ((0, 0), (0, HP - hidden_dim))).reshape(1, 4 * HP))

    fc_w = jnp.pad(jnp.transpose(raw["fc_w"]),
                   ((0, HP - hidden_dim), (0, OP - output_dim)))      # (HP, OP)
    fc_b = jnp.pad(raw["fc_b"], (0, OP - output_dim)).reshape(1, OP)  # (1, OP)

    return {
        "wih0": wih0.astype(matmul_dtype),                # (WP, 4HP)
        "wihr": jnp.stack(wihr).astype(matmul_dtype),     # (max(L-1,1), HP, 4HP)
        "whh": jnp.stack(whh).astype(matmul_dtype),       # (L, HP, 4HP)
        "bias": jnp.stack(bias),                          # (L, 1, 4HP)  f32
        "fc_w": fc_w.astype(matmul_dtype),                # (HP, OP)
        "fc_b": fc_b,                                     # (1, OP)      f32
    }


# ----------------------------------------------------------------------------
# Pure-JAX reference (unpadded f32, standard LSTM math) for verification.
# ----------------------------------------------------------------------------
def reference_forward(x_btd, raw, hidden_dim):
    x = jnp.transpose(x_btd, (1, 0, 2)).astype(jnp.float32)      # (T, B, D)
    B = x.shape[1]
    for layer in raw["layers"]:
        w_ih_t = jnp.transpose(layer["w_ih"])
        w_hh_t = jnp.transpose(layer["w_hh"])
        bias = (layer["b_ih"] + layer["b_hh"])[None, :]
        h0 = jnp.zeros((B, hidden_dim), jnp.float32)
        c0 = jnp.zeros((B, hidden_dim), jnp.float32)

        def step(carry, x_t, w_ih_t=w_ih_t, w_hh_t=w_hh_t, bias=bias):
            h, c = carry
            g = x_t @ w_ih_t + h @ w_hh_t + bias
            i = jax.nn.sigmoid(g[:, 0 * hidden_dim:1 * hidden_dim])
            f = jax.nn.sigmoid(g[:, 1 * hidden_dim:2 * hidden_dim])
            gg = jnp.tanh(g[:, 2 * hidden_dim:3 * hidden_dim])
            o = jax.nn.sigmoid(g[:, 3 * hidden_dim:4 * hidden_dim])
            c = f * c + i * gg
            h = o * jnp.tanh(c)
            return (h, c), h

        (_, _), ys = jax.lax.scan(step, (h0, c0), x)
        x = ys
    return x[-1] @ jnp.transpose(raw["fc_w"]) + raw["fc_b"][None, :]


if __name__ == "__main__":
    # TODO(synk): nn.Dropout / inter-layer LSTM dropout are train-mode only;
    # this implements inference semantics (identical to module.eval()).
    input_dim, hidden_dim, seq_len, layer_dim, output_dim = 16, 32, 8, 2, 4
    batch = 2

    key = jax.random.PRNGKey(0)
    key, pkey, xkey = jax.random.split(key, 3)
    raw = init_params(pkey, input_dim, hidden_dim, layer_dim, output_dim)
    packed = pack_params(raw, input_dim, hidden_dim, output_dim)
    x = jax.random.normal(xkey, (batch, seq_len, input_dim), jnp.float32)

    fwd = jax.jit(lstm_model_forward, static_argnames=("output_dim",))
    out = jax.block_until_ready(fwd(x, packed, output_dim=output_dim))

    ref = reference_forward(x, raw, hidden_dim)
    assert out.shape == (batch, output_dim), out.shape
    tol = 1e-4 if MATMUL_DTYPE == jnp.float32 else 2e-2   # bf16 MXU operands
    assert jnp.allclose(out, ref, atol=tol, rtol=tol), (
        jnp.max(jnp.abs(out - ref)))

    print("KERNEL_OK")
</pallas_src>

<mosaic_0001>
module attributes {stable_mosaic.version = 11 : i64} {
  func.func @_fused_lstm_fc_kernel(%arg0: memref<64x128xf32, #tpu.memory_space<vmem>>, %arg1: memref<128x512xbf16, #tpu.memory_space<vmem>>, %arg2: memref<1x128x512xbf16, #tpu.memory_space<vmem>>, %arg3: memref<2x128x512xbf16, #tpu.memory_space<vmem>>, %arg4: memref<2x1x512xf32, #tpu.memory_space<vmem>>, %arg5: memref<128x128xbf16, #tpu.memory_space<vmem>>, %arg6: memref<1x128xf32, #tpu.memory_space<vmem>>, %arg7: memref<8x128xf32, #tpu.memory_space<vmem>>, %arg8: memref<64x128xf32, #tpu.memory_space<vmem>>, %arg9: memref<64x512xf32, #tpu.memory_space<vmem>>) attributes {dimension_semantics = [], scalar_prefetch = 0 : i64, scratch_operands = 2 : i64, tpu.core_type = #tpu.core_type<tc>} {
    %c0 = arith.constant 0 : index
    %c0_0 = arith.constant 0 : index
    %0 = vector.load %arg0[%c0, %c0_0] : memref<64x128xf32, #tpu.memory_space<vmem>>, vector<64x128xf32>
    %c0_1 = arith.constant 0 : index
    %c0_2 = arith.constant 0 : index
    %1 = vector.load %arg1[%c0_1, %c0_2] : memref<128x512xbf16, #tpu.memory_space<vmem>>, vector<128x512xbf16>
    %2 = arith.truncf %0 : vector<64x128xf32> to vector<64x128xbf16>
    %cst = arith.constant dense<0.000000e+00> : vector<64x512xf32>
    %3 = tpu.matmul %2, %1, %cst {dimension_numbers = #tpu.dot_dimension_numbers<[1], [0], [0], [1], [0, 0, 1, 1], [], []>} : vector<64x128xbf16>, vector<128x512xbf16>, vector<64x512xf32> -> vector<64x512xf32>
    %c0_3 = arith.constant 0 : index
    %c0_4 = arith.constant 0 : index
    %c0_5 = arith.constant 0 : index
    %4 = vector.load %arg4[%c0_3, %c0_4, %c0_5] : memref<2x1x512xf32, #tpu.memory_space<vmem>>, vector<1x1x512xf32>
    %5 = vector.shape_cast %4 : vector<1x1x512xf32> to vector<1x512xf32>
    %6 = vector.broadcast %5 : vector<1x512xf32> to vector<64x512xf32>
    %7 = arith.addf %3, %6 : vector<64x512xf32>
    %c0_6 = arith.constant 0 : index
    %c0_7 = arith.constant 0 : index
    %8 = vector.load %arg9[%c0_6, %c0_7] : memref<64x512xf32, #tpu.memory_space<vmem>>, vector<64x512xf32>
    tpu.vector_store %arg9[%c0_6, %c0_7], %7 {strides = array<i32>} : memref<64x512xf32, #tpu.memory_space<vmem>>, vector<64x512xf32>,
    %cst_8 = arith.constant 0.000000e+00 : f32
    %9 = vector.broadcast %cst_8 : f32 to vector<8x128xf32>
    %cst_9 = arith.constant 0.000000e+00 : f32
    %10 = vector.broadcast %cst_9 : f32 to vector<8x128xf32>
    %c0_10 = arith.constant 0 : index
    %c0_11 = arith.constant 0 : index
    %11 = vector.load %arg9[%c0_10, %c0_11] : memref<64x512xf32, #tpu.memory_space<vmem>>, vector<8x512xf32>
    %12 = arith.truncf %9 : vector<8x128xf32> to vector<8x128xbf16>
    %c0_12 = arith.constant 0 : index
    %c0_13 = arith.constant 0 : index
    %c0_14 = arith.constant 0 : index
    %13 = vector.load %arg3[%c0_12, %c0_13, %c0_14] : memref<2x128x512xbf16, #tpu.memory_space<vmem>>, vector<1x128x512xbf16>
    %14 = vector.shape_cast %13 : vector<1x128x512xbf16> to vector<128x512xbf16>
    %cst_15 = arith.constant dense<0.000000e+00> : vector<8x512xf32>
    %15 = tpu.matmul %12, %14, %cst_15 {dimension_numbers = #tpu.dot_dimension_numbers<[1], [0], [0], [1], [0, 0, 1, 1], [], []>} : vector<8x128xbf16>, vector<128x512xbf16>, vector<8x512xf32> -> vector<8x512xf32>
    %16 = arith.addf %11, %15 : vector<8x512xf32>
    %17 = vector.extract_strided_slice %16 {offsets = [0, 0], sizes = [8, 128], strides = [1, 1]} : vector<8x512xf32> to vector<8x128xf32>
    %18 = arith.negf %17 : vector<8x128xf32>
    %19 = math.exp %18 : vector<8x128xf32>
    %cst_16 = arith.constant 1.000000e+00 : f32
    %20 = vector.broadcast %cst_16 : f32 to vector<8x128xf32>
    %21 = arith.addf %20, %19 : vector<8x128xf32>
    %22 = arith.divf %20, %21 : vector<8x128xf32>
    %23 = vector.extract_strided_slice %16 {offsets = [0, 128], sizes = [8, 128], strides = [1, 1]} : vector<8x512xf32> to vector<8x128xf32>
    %24 = arith.negf %23 : vector<8x128xf32>
    %25 = math.exp %24 : vector<8x128xf32>
    %cst_17 = arith.constant 1.000000e+00 : f32
    %26 = vector.broadcast %cst_17 : f32 to vector<8x128xf32>
    %27 = arith.addf %26, %25 : vector<8x128xf32>
    %28 = arith.divf %26, %27 : vector<8x128xf32>
    %29 = vector.extract_strided_slice %16 {offsets = [0, 256], sizes = [8, 128], strides = [1, 1]} : vector<8x512xf32> to vector<8x128xf32>
    %30 = math.tanh %29 : vector<8x128xf32>
    %31 = vector.extract_strided_slice %16 {offsets = [0, 384], sizes = [8, 128], strides = [1, 1]} : vector<8x512xf32> to vector<8x128xf32>
    %32 = arith.negf %31 : vector<8x128xf32>
    %33 = math.exp %32 : vector<8x128xf32>
    %cst_18 = arith.constant 1.000000e+00 : f32
    %34 = vector.broadcast %cst_18 : f32 to vector<8x128xf32>
    %35 = arith.addf %34, %33 : vector<8x128xf32>
    %36 = arith.divf %34, %35 : vector<8x128xf32>
    %37 = arith.mulf %28, %10 : vector<8x128xf32>
    %38 = arith.mulf %22, %30 : vector<8x128xf32>
    %39 = arith.addf %37, %38 : vector<8x128xf32>
    %40 = math.tanh %39 : vector<8x128xf32>
    %41 = arith.mulf %36, %40 : vector<8x128xf32>
    %c0_19 = arith.constant 0 : index
    %c0_20 = arith.constant 0 : index
    %42 = vector.load %arg8[%c0_19, %c0_20] : memref<64x128xf32, #tpu.memory_space<vmem>>, vector<8x128xf32>
    tpu.vector_store %arg8[%c0_19, %c0_20], %41 {strides = array<i32>} : memref<64x128xf32, #tpu.memory_space<vmem>>, vector<8x128xf32>,
    %c8 = arith.constant 8 : index
    %c0_21 = arith.constant 0 : index
    %43 = vector.load %arg9[%c8, %c0_21] : memref<64x512xf32, #tpu.memory_space<vmem>>, vector<8x512xf32>
    %44 = arith.truncf %41 : vector<8x128xf32> to vector<8x128xbf16>
    %c0_22 = arith.constant 0 : index
    %c0_23 = arith.constant 0 : index
    %c0_24 = arith.constant 0 : index
    %45 = vector.load %arg3[%c0_22, %c0_23, %c0_24] : memref<2x128x512xbf16, #tpu.memory_space<vmem>>, vector<1x128x512xbf16>
    %46 = vector.shape_cast %45 : vector<1x128x512xbf16> to vector<128x512xbf16>
    %cst_25 = arith.constant dense<0.000000e+00> : vector<8x512xf32>
    %47 = tpu.matmul %44, %46, %cst_25 {dimension_numbers = #tpu.dot_dimension_numbers<[1], [0], [0], [1], [0, 0, 1, 1], [], []>} : vector<8x128xbf16>, vector<128x512xbf16>, vector<8x512xf32> -> vector<8x512xf32>
    %48 = arith.addf %43, %47 : vector<8x512xf32>
    %49 = vector.extract_strided_slice %48 {offsets = [0, 0], sizes = [8, 128], strides = [1, 1]} : vector<8x512xf32> to vector<8x128xf32>
    %50 = arith.negf %49 : vector<8x128xf32>
    %51 = math.exp %50 : vector<8x128xf32>
    %cst_26 = arith.constant 1.000000e+00 : f32
    %52 = vector.broadcast %cst_26 : f32 to vector<8x128xf32>
    %53 = arith.addf %52, %51 : vector<8x128xf32>
    %54 = arith.divf %52, %53 : vector<8x128xf32>
    %55 = vector.extract_strided_slice %48 {offsets = [0, 128], sizes = [8, 128], strides = [1, 1]} : vector<8x512xf32> to vector<8x128xf32>
    %56 = arith.negf %55 : vector<8x128xf32>
    %57 = math.exp %56 : vector<8x128xf32>
    %cst_27 = arith.constant 1.000000e+00 : f32
    %58 = vector.broadcast %cst_27 : f32 to vector<8x128xf32>
    %59 = arith.addf %58, %57 : vector<8x128xf32>
    %60 = arith.divf %58, %59 : vector<8x128xf32>
    %61 = vector.extract_strided_slice %48 {offsets = [0, 256], sizes = [8, 128], strides = [1, 1]} : vector<8x512xf32> to vector<8x128xf32>
    %62 = math.tanh %61 : vector<8x128xf32>
    %63 = vector.extract_strided_slice %48 {offsets = [0, 384], sizes = [8, 128], strides = [1, 1]} : vector<8x512xf32> to vector<8x128xf32>
    %64 = arith.negf %63 : vector<8x128xf32>
    %65 = math.exp %64 : vector<8x128xf32>
    %cst_28 = arith.constant 1.000000e+00 : f32
    %66 = vector.broadcast %cst_28 : f32 to vector<8x128xf32>
    %67 = arith.addf %66, %65 : vector<8x128xf32>
    %68 = arith.divf %66, %67 : vector<8x128xf32>
    %69 = arith.mulf %60, %39 : vector<8x128xf32>
    %70 = arith.mulf %54, %62 : vector<8x128xf32>
    %71 = arith.addf %69, %70 : vector<8x128xf32>
    %72 = math.tanh %71 : vector<8x128xf32>
    %73 = arith.mulf %68, %72 : vector<8x128xf32>
    %c8_29 = arith.constant 8 : index
    %c0_30 = arith.constant 0 : index
    %74 = vector.load %arg8[%c8_29, %c0_30] : memref<64x128xf32, #tpu.memory_space<vmem>>, vector<8x128xf32>
    tpu.vector_store %arg8[%c8_29, %c0_30], %73 {strides = array<i32>} : memref<64x128xf32, #tpu.memory_space<vmem>>, vector<8x128xf32>,
    %c16 = arith.constant 16 : index
    %c0_31 = arith.constant 0 : index
    %75 = vector.load %arg9[%c16, %c0_31] : memref<64x512xf32, #tpu.memory_space<vmem>>, vector<8x512xf32>
    %76 = arith.truncf %73 : vector<8x128xf32> to vector<8x128xbf16>
    %c0_32 = arith.constant 0 : index
    %c0_33 = arith.constant 0 : index
    %c0_34 = arith.constant 0 : index
    %77 = vector.load %arg3[%c0_32, %c0_33, %c0_34] : memref<2x128x512xbf16, #tpu.memory_space<vmem>>, vector<1x128x512xbf16>
    %78 = vector.shape_cast %77 : vector<1x128x512xbf16> to vector<128x512xbf16>
    %cst_35 = arith.constant dense<0.000000e+00> : vector<8x512xf32>
    %79 = tpu.matmul %76, %78, %cst_35 {dimension_numbers = #tpu.dot_dimension_numbers<[1], [0], [0], [1], [0, 0, 1, 1], [], []>} : vector<8x128xbf16>, vector<128x512xbf16>, vector<8x512xf32> -> vector<8x512xf32>
    %80 = arith.addf %75, %79 : vector<8x512xf32>
    %81 = vector.extract_strided_slice %80 {offsets = [0, 0], sizes = [8, 128], strides = [1, 1]} : vector<8x512xf32> to vector<8x128xf32>
    %82 = arith.negf %81 : vector<8x128xf32>
    %83 = math.exp %82 : vector<8x128xf32>
    %cst_36 = arith.constant 1.000000e+00 : f32
    %84 = vector.broadcast %cst_36 : f32 to vector<8x128xf32>
    %85 = arith.addf %84, %83 : vector<8x128xf32>
    %86 = arith.divf %84, %85 : vector<8x128xf32>
    %87 = vector.extract_strided_slice %80 {offsets = [0, 128], sizes = [8, 128], strides = [1, 1]} : vector<8x512xf32> to vector<8x128xf32>
    %88 = arith.negf %87 : vector<8x128xf32>
    %89 = math.exp %88 : vector<8x128xf32>
    %cst_37 = arith.constant 1.000000e+00 : f32
    %90 = vector.broadcast %cst_37 : f32 to vector<8x128xf32>
    %91 = arith.addf %90, %89 : vector<8x128xf32>
    %92 = arith.divf %90, %91 : vector<8x128xf32>
    %93 = vector.extract_strided_slice %80 {offsets = [0, 256], sizes = [8, 128], strides = [1, 1]} : vector<8x512xf32> to vector<8x128xf32>
    %94 = math.tanh %93 : vector<8x128xf32>
    %95 = vector.extract_strided_slice %80 {offsets = [0, 384], sizes = [8, 128], strides = [1, 1]} : vector<8x512xf32> to vector<8x128xf32>
    %96 = arith.negf %95 : vector<8x128xf32>
    %97 = math.exp %96 : vector<8x128xf32>
    %cst_38 = arith.constant 1.000000e+00 : f32
    %98 = vector.broadcast %cst_38 : f32 to vector<8x128xf32>
    %99 = arith.addf %98, %97 : vector<8x128xf32>
    %100 = arith.divf %98, %99 : vector<8x128xf32>
    %101 = arith.mulf %92, %71 : vector<8x128xf32>
    %102 = arith.mulf %86, %94 : vector<8x128xf32>
    %103 = arith.addf %101, %102 : vector<8x128xf32>
    %104 = math.tanh %103 : vector<8x128xf32>
    %105 = arith.mulf %100, %104 : vector<8x128xf32>
    %c16_39 = arith.constant 16 : index
    %c0_40 = arith.constant 0 : index
    %106 = vector.load %arg8[%c16_39, %c0_40] : memref<64x128xf32, #tpu.memory_space<vmem>>, vector<8x128xf32>
    tpu.vector_store %arg8[%c16_39, %c0_40], %105 {strides = array<i32>} : memref<64x128xf32, #tpu.memory_space<vmem>>, vector<8x128xf32>,
    %c24 = arith.constant 24 : index
    %c0_41 = arith.constant 0 : index
    %107 = vector.load %arg9[%c24, %c0_41] : memref<64x512xf32, #tpu.memory_space<vmem>>, vector<8x512xf32>
    %108 = arith.truncf %105 : vector<8x128xf32> to vector<8x128xbf16>
    %c0_42 = arith.constant 0 : index
    %c0_43 = arith.constant 0 : index
    %c0_44 = arith.constant 0 : index
    %109 = vector.load %arg3[%c0_42, %c0_43, %c0_44] : memref<2x128x512xbf16, #tpu.memory_space<vmem>>, vector<1x128x512xbf16>
    %110 = vector.shape_cast %109 : vector<1x128x512xbf16> to vector<128x512xbf16>
    %cst_45 = arith.constant dense<0.000000e+00> : vector<8x512xf32>
    %111 = tpu.matmul %108, %110, %cst_45 {dimension_numbers = #tpu.dot_dimension_numbers<[1], [0], [0], [1], [0, 0, 1, 1], [], []>} : vector<8x128xbf16>, vector<128x512xbf16>, vector<8x512xf32> -> vector<8x512xf32>
    %112 = arith.addf %107, %111 : vector<8x512xf32>
    %113 = vector.extract_strided_slice %112 {offsets = [0, 0], sizes = [8, 128], strides = [1, 1]} : vector<8x512xf32> to vector<8x128xf32>
    %114 = arith.negf %113 : vector<8x128xf32>
    %115 = math.exp %114 : vector<8x128xf32>
    %cst_46 = arith.constant 1.000000e+00 : f32
    %116 = vector.broadcast %cst_46 : f32 to vector<8x128xf32>
    %117 = arith.addf %116, %115 : vector<8x128xf32>
    %118 = arith.divf %116, %117 : vector<8x128xf32>
    %119 = vector.extract_strided_slice %112 {offsets = [0, 128], sizes = [8, 128], strides = [1, 1]} : vector<8x512xf32> to vector<8x128xf32>
    %120 = arith.negf %119 : vector<8x128xf32>
    %121 = math.exp %120 : vector<8x128xf32>
    %cst_47 = arith.constant 1.000000e+00 : f32
    %122 = vector.broadcast %cst_47 : f32 to vector<8x128xf32>
    %123 = arith.addf %122, %121 : vector<8x128xf32>
    %124 = arith.divf %122, %123 : vector<8x128xf32>
    %125 = vector.extract_strided_slice %112 {offsets = [0, 256], sizes = [8, 128], strides = [1, 1]} : vector<8x512xf32> to vector<8x128xf32>
    %126 = math.tanh %125 : vector<8x128xf32>
    %127 = vector.extract_strided_slice %112 {offsets = [0, 384], sizes = [8, 128], strides = [1, 1]} : vector<8x512xf32> to vector<8x128xf32>
    %128 = arith.negf %127 : vector<8x128xf32>
    %129 = math.exp %128 : vector<8x128xf32>
    %cst_48 = arith.constant 1.000000e+00 : f32
    %130 = vector.broadcast %cst_48 : f32 to vector<8x128xf32>
    %131 = arith.addf %130, %129 : vector<8x128xf32>
    %132 = arith.divf %130, %131 : vector<8x128xf32>
    %133 = arith.mulf %124, %103 : vector<8x128xf32>
    %134 = arith.mulf %118, %126 : vector<8x128xf32>
    %135 = arith.addf %133, %134 : vector<8x128xf32>
    %136 = math.tanh %135 : vector<8x128xf32>
    %137 = arith.mulf %132, %136 : vector<8x128xf32>
    %c24_49 = arith.constant 24 : index
    %c0_50 = arith.constant 0 : index
    %138 = vector.load %arg8[%c24_49, %c0_50] : memref<64x128xf32, #tpu.memory_space<vmem>>, vector<8x128xf32>
    tpu.vector_store %arg8[%c24_49, %c0_50], %137 {strides = array<i32>} : memref<64x128xf32, #tpu.memory_space<vmem>>, vector<8x128xf32>,
    %c32 = arith.constant 32 : index
    %c0_51 = arith.constant 0 : index
    %139 = vector.load %arg9[%c32, %c0_51] : memref<64x512xf32, #tpu.memory_space<vmem>>, vector<8x512xf32>
    %140 = arith.truncf %137 : vector<8x128xf32> to vector<8x128xbf16>
    %c0_52 = arith.constant 0 : index
    %c0_53 = arith.constant 0 : index
    %c0_54 = arith.constant 0 : index
    %141 = vector.load %arg3[%c0_52, %c0_53, %c0_54] : memref<2x128x512xbf16, #tpu.memory_space<vmem>>, vector<1x128x512xbf16>
    %142 = vector.shape_cast %141 : vector<1x128x512xbf16> to vector<128x512xbf16>
    %cst_55 = arith.constant dense<0.000000e+00> : vector<8x512xf32>
    %143 = tpu.matmul %140, %142, %cst_55 {dimension_numbers = #tpu.dot_dimension_numbers<[1], [0], [0], [1], [0, 0, 1, 1], [], []>} : vector<8x128xbf16>, vector<128x512xbf16>, vector<8x512xf32> -> vector<8x512xf32>
    %144 = arith.addf %139, %143 : vector<8x512xf32>
    %145 = vector.extract_strided_slice %144 {offsets = [0, 0], sizes = [8, 128], strides = [1, 1]} : vector<8x512xf32> to vector<8x128xf32>
    %146 = arith.negf %145 : vector<8x128xf32>
    %147 = math.exp %146 : vector<8x128xf32>
    %cst_56 = arith.constant 1.000000e+00 : f32
    %148 = vector.broadcast %cst_56 : f32 to vector<8x128xf32>
    %149 = arith.addf %148, %147 : vector<8x128xf32>
    %150 = arith.divf %148, %149 : vector<8x128xf32>
    %151 = vector.extract_strided_slice %144 {offsets = [0, 128], sizes = [8, 128], strides = [1, 1]} : vector<8x512xf32> to vector<8x128xf32>
    %152 = arith.negf %151 : vector<8x128xf32>
    %153 = math.exp %152 : vector<8x128xf32>
    %cst_57 = arith.constant 1.000000e+00 : f32
    %154 = vector.broadcast %cst_57 : f32 to vector<8x128xf32>
    %155 = arith.addf %154, %153 : vector<8x128xf32>
    %156 = arith.divf %154, %155 : vector<8x128xf32>
    %157 = vector.extract_strided_slice %144 {offsets = [0, 256], sizes = [8, 128], strides = [1, 1]} : vector<8x512xf32> to vector<8x128xf32>
    %158 = math.tanh %157 : vector<8x128xf32>
    %159 = vector.extract_strided_slice %144 {offsets = [0, 384], sizes = [8, 128], strides = [1, 1]} : vector<8x512xf32> to vector<8x128xf32>
    %160 = arith.negf %159 : vector<8x128xf32>
    %161 = math.exp %160 : vector<8x128xf32>
    %cst_58 = arith.constant 1.000000e+00 : f32
    %162 = vector.broadcast %cst_58 : f32 to vector<8x128xf32>
    %163 = arith.addf %162, %161 : vector<8x128xf32>
    %164 = arith.divf %162, %163 : vector<8x128xf32>
    %165 = arith.mulf %156, %135 : vector<8x128xf32>
    %166 = arith.mulf %150, %158 : vector<8x128xf32>
    %167 = arith.addf %165, %166 : vector<8x128xf32>
    %168 = math.tanh %167 : vector<8x128xf32>
    %169 = arith.mulf %164, %168 : vector<8x128xf32>
    %c32_59 = arith.constant 32 : index
    %c0_60 = arith.constant 0 : index
    %170 = vector.load %arg8[%c32_59, %c0_60] : memref<64x128xf32, #tpu.memory_space<vmem>>, vector<8x128xf32>
    tpu.vector_store %arg8[%c32_59, %c0_60], %169 {strides = array<i32>} : memref<64x128xf32, #tpu.memory_space<vmem>>, vector<8x128xf32>,
    %c40 = arith.constant 40 : index
    %c0_61 = arith.constant 0 : index
    %171 = vector.load %arg9[%c40, %c0_61] : memref<64x512xf32, #tpu.memory_space<vmem>>, vector<8x512xf32>
    %172 = arith.truncf %169 : vector<8x128xf32> to vector<8x128xbf16>
    %c0_62 = arith.constant 0 : index
    %c0_63 = arith.constant 0 : index
    %c0_64 = arith.constant 0 : index
    %173 = vector.load %arg3[%c0_62, %c0_63, %c0_64] : memref<2x128x512xbf16, #tpu.memory_space<vmem>>, vector<1x128x512xbf16>
    %174 = vector.shape_cast %173 : vector<1x128x512xbf16> to vector<128x512xbf16>
    %cst_65 = arith.constant dense<0.000000e+00> : vector<8x512xf32>
    %175 = tpu.matmul %172, %174, %cst_65 {dimension_numbers = #tpu.dot_dimension_numbers<[1], [0], [0], [1], [0, 0, 1, 1], [], []>} : vector<8x128xbf16>, vector<128x512xbf16>, vector<8x512xf32> -> vector<8x512xf32>
    %176 = arith.addf %171, %175 : vector<8x512xf32>
    %177 = vector.extract_strided_slice %176 {offsets = [0, 0], sizes = [8, 128], strides = [1, 1]} : vector<8x512xf32> to vector<8x128xf32>
    %178 = arith.negf %177 : vector<8x128xf32>
    %179 = math.exp %178 : vector<8x128xf32>
    %cst_66 = arith.constant 1.000000e+00 : f32
    %180 = vector.broadcast %cst_66 : f32 to vector<8x128xf32>
    %181 = arith.addf %180, %179 : vector<8x128xf32>
    %182 = arith.divf %180, %181 : vector<8x128xf32>
    %183 = vector.extract_strided_slice %176 {offsets = [0, 128], sizes = [8, 128], strides = [1, 1]} : vector<8x512xf32> to vector<8x128xf32>
    %184 = arith.negf %183 : vector<8x128xf32>
    %185 = math.exp %184 : vector<8x128xf32>
    %cst_67 = arith.constant 1.000000e+00 : f32
    %186 = vector.broadcast %cst_67 : f32 to vector<8x128xf32>
    %187 = arith.addf %186, %185 : vector<8x128xf32>
    %188 = arith.divf %186, %187 : vector<8x128xf32>
    %189 = vector.extract_strided_slice %176 {offsets = [0, 256], sizes = [8, 128], strides = [1, 1]} : vector<8x512xf32> to vector<8x128xf32>
    %190 = math.tanh %189 : vector<8x128xf32>
    %191 = vector.extract_strided_slice %176 {offsets = [0, 384], sizes = [8, 128], strides = [1, 1]} : vector<8x512xf32> to vector<8x128xf32>
    %192 = arith.negf %191 : vector<8x128xf32>
    %193 = math.exp %192 : vector<8x128xf32>
    %cst_68 = arith.constant 1.000000e+00 : f32
    %194 = vector.broadcast %cst_68 : f32 to vector<8x128xf32>
    %195 = arith.addf %194, %193 : vector<8x128xf32>
    %196 = arith.divf %194, %195 : vector<8x128xf32>
    %197 = arith.mulf %188, %167 : vector<8x128xf32>
    %198 = arith.mulf %182, %190 : vector<8x128xf32>
    %199 = arith.addf %197, %198 : vector<8x128xf32>
    %200 = math.tanh %199 : vector<8x128xf32>
    %201 = arith.mulf %196, %200 : vector<8x128xf32>
    %c40_69 = arith.constant 40 : index
    %c0_70 = arith.constant 0 : index
    %202 = vector.load %arg8[%c40_69, %c0_70] : memref<64x128xf32, #tpu.memory_space<vmem>>, vector<8x128xf32>
    tpu.vector_store %arg8[%c40_69, %c0_70], %201 {strides = array<i32>} : memref<64x128xf32, #tpu.memory_space<vmem>>, vector<8x128xf32>,
    %c48 = arith.constant 48 : index
    %c0_71 = arith.constant 0 : index
    %203 = vector.load %arg9[%c48, %c0_71] : memref<64x512xf32, #tpu.memory_space<vmem>>, vector<8x512xf32>
    %204 = arith.truncf %201 : vector<8x128xf32> to vector<8x128xbf16>
    %c0_72 = arith.constant 0 : index
    %c0_73 = arith.constant 0 : index
    %c0_74 = arith.constant 0 : index
    %205 = vector.load %arg3[%c0_72, %c0_73, %c0_74] : memref<2x128x512xbf16, #tpu.memory_space<vmem>>, vector<1x128x512xbf16>
    %206 = vector.shape_cast %205 : vector<1x128x512xbf16> to vector<128x512xbf16>
    %cst_75 = arith.constant dense<0.000000e+00> : vector<8x512xf32>
    %207 = tpu.matmul %204, %206, %cst_75 {dimension_numbers = #tpu.dot_dimension_numbers<[1], [0], [0], [1], [0, 0, 1, 1], [], []>} : vector<8x128xbf16>, vector<128x512xbf16>, vector<8x512xf32> -> vector<8x512xf32>
    %208 = arith.addf %203, %207 : vector<8x512xf32>
    %209 = vector.extract_strided_slice %208 {offsets = [0, 0], sizes = [8, 128], strides = [1, 1]} : vector<8x512xf32> to vector<8x128xf32>
    %210 = arith.negf %209 : vector<8x128xf32>
    %211 = math.exp %210 : vector<8x128xf32>
    %cst_76 = arith.constant 1.000000e+00 : f32
    %212 = vector.broadcast %cst_76 : f32 to vector<8x128xf32>
    %213 = arith.addf %212, %211 : vector<8x128xf32>
    %214 = arith.divf %212, %213 : vector<8x128xf32>
    %215 = vector.extract_strided_slice %208 {offsets = [0, 128], sizes = [8, 128], strides = [1, 1]} : vector<8x512xf32> to vector<8x128xf32>
    %216 = arith.negf %215 : vector<8x128xf32>
    %217 = math.exp %216 : vector<8x128xf32>
    %cst_77 = arith.constant 1.000000e+00 : f32
    %218 = vector.broadcast %cst_77 : f32 to vector<8x128xf32>
    %219 = arith.addf %218, %217 : vector<8x128xf32>
    %220 = arith.divf %218, %219 : vector<8x128xf32>
    %221 = vector.extract_strided_slice %208 {offsets = [0, 256], sizes = [8, 128], strides = [1, 1]} : vector<8x512xf32> to vector<8x128xf32>
    %222 = math.tanh %221 : vector<8x128xf32>
    %223 = vector.extract_strided_slice %208 {offsets = [0, 384], sizes = [8, 128], strides = [1, 1]} : vector<8x512xf32> to vector<8x128xf32>
    %224 = arith.negf %223 : vector<8x128xf32>
    %225 = math.exp %224 : vector<8x128xf32>
    %cst_78 = arith.constant 1.000000e+00 : f32
    %226 = vector.broadcast %cst_78 : f32 to vector<8x128xf32>
    %227 = arith.addf %226, %225 : vector<8x128xf32>
    %228 = arith.divf %226, %227 : vector<8x128xf32>
    %229 = arith.mulf %220, %199 : vector<8x128xf32>
    %230 = arith.mulf %214, %222 : vector<8x128xf32>
    %231 = arith.addf %229, %230 : vector<8x128xf32>
    %232 = math.tanh %231 : vector<8x128xf32>
    %233 = arith.mulf %228, %232 : vector<8x128xf32>
    %c48_79 = arith.constant 48 : index
    %c0_80 = arith.constant 0 : index
    %234 = vector.load %arg8[%c48_79, %c0_80] : memref<64x128xf32, #tpu.memory_space<vmem>>, vector<8x128xf32>
    tpu.vector_store %arg8[%c48_79, %c0_80], %233 {strides = array<i32>} : memref<64x128xf32, #tpu.memory_space<vmem>>, vector<8x128xf32>,
    %c56 = arith.constant 56 : index
    %c0_81 = arith.constant 0 : index
    %235 = vector.load %arg9[%c56, %c0_81] : memref<64x512xf32, #tpu.memory_space<vmem>>, vector<8x512xf32>
    %236 = arith.truncf %233 : vector<8x128xf32> to vector<8x128xbf16>
    %c0_82 = arith.constant 0 : index
    %c0_83 = arith.constant 0 : index
    %c0_84 = arith.constant 0 : index
    %237 = vector.load %arg3[%c0_82, %c0_83, %c0_84] : memref<2x128x512xbf16, #tpu.memory_space<vmem>>, vector<1x128x512xbf16>
    %238 = vector.shape_cast %237 : vector<1x128x512xbf16> to vector<128x512xbf16>
    %cst_85 = arith.constant dense<0.000000e+00> : vector<8x512xf32>
    %239 = tpu.matmul %236, %238, %cst_85 {dimension_numbers = #tpu.dot_dimension_numbers<[1], [0], [0], [1], [0, 0, 1, 1], [], []>} : vector<8x128xbf16>, vector<128x512xbf16>, vector<8x512xf32> -> vector<8x512xf32>
    %240 = arith.addf %235, %239 : vector<8x512xf32>
    %241 = vector.extract_strided_slice %240 {offsets = [0, 0], sizes = [8, 128], strides = [1, 1]} : vector<8x512xf32> to vector<8x128xf32>
    %242 = arith.negf %241 : vector<8x128xf32>
    %243 = math.exp %242 : vector<8x128xf32>
    %cst_86 = arith.constant 1.000000e+00 : f32
    %244 = vector.broadcast %cst_86 : f32 to vector<8x128xf32>
    %245 = arith.addf %244, %243 : vector<8x128xf32>
    %246 = arith.divf %244, %245 : vector<8x128xf32>
    %247 = vector.extract_strided_slice %240 {offsets = [0, 128], sizes = [8, 128], strides = [1, 1]} : vector<8x512xf32> to vector<8x128xf32>
    %248 = arith.negf %247 : vector<8x128xf32>
    %249 = math.exp %248 : vector<8x128xf32>
    %cst_87 = arith.constant 1.000000e+00 : f32
    %250 = vector.broadcast %cst_87 : f32 to vector<8x128xf32>
    %251 = arith.addf %250, %249 : vector<8x128xf32>
    %252 = arith.divf %250, %251 : vector<8x128xf32>
    %253 = vector.extract_strided_slice %240 {offsets = [0, 256], sizes = [8, 128], strides = [1, 1]} : vector<8x512xf32> to vector<8x128xf32>
    %254 = math.tanh %253 : vector<8x128xf32>
    %255 = vector.extract_strided_slice %240 {offsets = [0, 384], sizes = [8, 128], strides = [1, 1]} : vector<8x512xf32> to vector<8x128xf32>
    %256 = arith.negf %255 : vector<8x128xf32>
    %257 = math.exp %256 : vector<8x128xf32>
    %cst_88 = arith.constant 1.000000e+00 : f32
    %258 = vector.broadcast %cst_88 : f32 to vector<8x128xf32>
    %259 = arith.addf %258, %257 : vector<8x128xf32>
    %260 = arith.divf %258, %259 : vector<8x128xf32>
    %261 = arith.mulf %252, %231 : vector<8x128xf32>
    %262 = arith.mulf %246, %254 : vector<8x128xf32>
    %263 = arith.addf %261, %262 : vector<8x128xf32>
    %264 = math.tanh %263 : vector<8x128xf32>
    %265 = arith.mulf %260, %264 : vector<8x128xf32>
    %c56_89 = arith.constant 56 : index
    %c0_90 = arith.constant 0 : index
    %266 = vector.load %arg8[%c56_89, %c0_90] : memref<64x128xf32, #tpu.memory_space<vmem>>, vector<8x128xf32>
    tpu.vector_store %arg8[%c56_89, %c0_90], %265 {strides = array<i32>} : memref<64x128xf32, #tpu.memory_space<vmem>>, vector<8x128xf32>,
    %c0_91 = arith.constant 0 : index
    %c0_92 = arith.constant 0 : index
    %267 = vector.load %arg8[%c0_91, %c0_92] : memref<64x128xf32, #tpu.memory_space<vmem>>, vector<64x128xf32>
    %c0_93 = arith.constant 0 : index
    %c0_94 = arith.constant 0 : index
    %c0_95 = arith.constant 0 : index
    %268 = vector.load %arg2[%c0_93, %c0_94, %c0_95] : memref<1x128x512xbf16, #tpu.memory_space<vmem>>, vector<1x128x512xbf16>
    %269 = vector.shape_cast %268 : vector<1x128x512xbf16> to vector<128x512xbf16>
    %270 = arith.truncf %267 : vector<64x128xf32> to vector<64x128xbf16>
    %cst_96 = arith.constant dense<0.000000e+00> : vector<64x512xf32>
    %271 = tpu.matmul %270, %269, %cst_96 {dimension_numbers = #tpu.dot_dimension_numbers<[1], [0], [0], [1], [0, 0, 1, 1], [], []>} : vector<64x128xbf16>, vector<128x512xbf16>, vector<64x512xf32> -> vector<64x512xf32>
    %c1 = arith.constant 1 : index
    %c0_97 = arith.constant 0 : index
    %c0_98 = arith.constant 0 : index
    %272 = vector.load %arg4[%c1, %c0_97, %c0_98] : memref<2x1x512xf32, #tpu.memory_space<vmem>>, vector<1x1x512xf32>
    %273 = vector.shape_cast %272 : vector<1x1x512xf32> to vector<1x512xf32>
    %274 = vector.broadcast %273 : vector<1x512xf32> to vector<64x512xf32>
    %275 = arith.addf %271, %274 : vector<64x512xf32>
    %c0_99 = arith.constant 0 : index
    %c0_100 = arith.constant 0 : index
    %276 = vector.load %arg9[%c0_99, %c0_100] : memref<64x512xf32, #tpu.memory_space<vmem>>, vector<64x512xf32>
    tpu.vector_store %arg9[%c0_99, %c0_100], %275 {strides = array<i32>} : memref<64x512xf32, #tpu.memory_space<vmem>>, vector<64x512xf32>,
    %cst_101 = arith.constant 0.000000e+00 : f32
    %277 = vector.broadcast %cst_101 : f32 to vector<8x128xf32>
    %cst_102 = arith.constant 0.000000e+00 : f32
    %278 = vector.broadcast %cst_102 : f32 to vector<8x128xf32>
    %c0_103 = arith.constant 0 : index
    %c0_104 = arith.constant 0 : index
    %279 = vector.load %arg9[%c0_103, %c0_104] : memref<64x512xf32, #tpu.memory_space<vmem>>, vector<8x512xf32>
    %280 = arith.truncf %277 : vector<8x128xf32> to vector<8x128xbf16>
    %c1_105 = arith.constant 1 : index
    %c0_106 = arith.constant 0 : index
    %c0_107 = arith.constant 0 : index
    %281 = vector.load %arg3[%c1_105, %c0_106, %c0_107] : memref<2x128x512xbf16, #tpu.memory_space<vmem>>, vector<1x128x512xbf16>
    %282 = vector.shape_cast %281 : vector<1x128x512xbf16> to vector<128x512xbf16>
    %cst_108 = arith.constant dense<0.000000e+00> : vector<8x512xf32>
    %283 = tpu.matmul %280, %282, %cst_108 {dimension_numbers = #tpu.dot_dimension_numbers<[1], [0], [0], [1], [0, 0, 1, 1], [], []>} : vector<8x128xbf16>, vector<128x512xbf16>, vector<8x512xf32> -> vector<8x512xf32>
    %284 = arith.addf %279, %283 : vector<8x512xf32>
    %285 = vector.extract_strided_slice %284 {offsets = [0, 0], sizes = [8, 128], strides = [1, 1]} : vector<8x512xf32> to vector<8x128xf32>
    %286 = arith.negf %285 : vector<8x128xf32>
    %287 = math.exp %286 : vector<8x128xf32>
    %cst_109 = arith.constant 1.000000e+00 : f32
    %288 = vector.broadcast %cst_109 : f32 to vector<8x128xf32>
    %289 = arith.addf %288, %287 : vector<8x128xf32>
    %290 = arith.divf %288, %289 : vector<8x128xf32>
    %291 = vector.extract_strided_slice %284 {offsets = [0, 128], sizes = [8, 128], strides = [1, 1]} : vector<8x512xf32> to vector<8x128xf32>
    %292 = arith.negf %291 : vector<8x128xf32>
    %293 = math.exp %292 : vector<8x128xf32>
    %cst_110 = arith.constant 1.000000e+00 : f32
    %294 = vector.broadcast %cst_110 : f32 to vector<8x128xf32>
    %295 = arith.addf %294, %293 : vector<8x128xf32>
    %296 = arith.divf %294, %295 : vector<8x128xf32>
    %297 = vector.extract_strided_slice %284 {offsets = [0, 256], sizes = [8, 128], strides = [1, 1]} : vector<8x512xf32> to vector<8x128xf32>
    %298 = math.tanh %297 : vector<8x128xf32>
    %299 = vector.extract_strided_slice %284 {offsets = [0, 384], sizes = [8, 128], strides = [1, 1]} : vector<8x512xf32> to vector<8x128xf32>
    %300 = arith.negf %299 : vector<8x128xf32>
    %301 = math.exp %300 : vector<8x128xf32>
    %cst_111 = arith.constant 1.000000e+00 : f32
    %302 = vector.broadcast %cst_111 : f32 to vector<8x128xf32>
    %303 = arith.addf %302, %301 : vector<8x128xf32>
    %304 = arith.divf %302, %303 : vector<8x128xf32>
    %305 = arith.mulf %296, %278 : vector<8x128xf32>
    %306 = arith.mulf %290, %298 : vector<8x128xf32>
    %307 = arith.addf %305, %306 : vector<8x128xf32>
    %308 = math.tanh %307 : vector<8x128xf32>
    %309 = arith.mulf %304, %308 : vector<8x128xf32>
    %c8_112 = arith.constant 8 : index
    %c0_113 = arith.constant 0 : index
    %310 = vector.load %arg9[%c8_112, %c0_113] : memref<64x512xf32, #tpu.memory_space<vmem>>, vector<8x512xf32>
    %311 = arith.truncf %309 : vector<8x128xf32> to vector<8x128xbf16>
    %c1_114 = arith.constant 1 : index
    %c0_115 = arith.constant 0 : index
    %c0_116 = arith.constant 0 : index
    %312 = vector.load %arg3[%c1_114, %c0_115, %c0_116] : memref<2x128x512xbf16, #tpu.memory_space<vmem>>, vector<1x128x512xbf16>
    %313 = vector.shape_cast %312 : vector<1x128x512xbf16> to vector<128x512xbf16>
    %cst_117 = arith.constant dense<0.000000e+00> : vector<8x512xf32>
    %314 = tpu.matmul %311, %313, %cst_117 {dimension_numbers = #tpu.dot_dimension_numbers<[1], [0], [0], [1], [0, 0, 1, 1], [], []>} : vector<8x128xbf16>, vector<128x512xbf16>, vector<8x512xf32> -> vector<8x512xf32>
    %315 = arith.addf %310, %314 : vector<8x512xf32>
    %316 = vector.extract_strided_slice %315 {offsets = [0, 0], sizes = [8, 128], strides = [1, 1]} : vector<8x512xf32> to vector<8x128xf32>
    %317 = arith.negf %316 : vector<8x128xf32>
    %318 = math.exp %317 : vector<8x128xf32>
    %cst_118 = arith.constant 1.000000e+00 : f32
    %319 = vector.broadcast %cst_118 : f32 to vector<8x128xf32>
    %320 = arith.addf %319, %318 : vector<8x128xf32>
    %321 = arith.divf %319, %320 : vector<8x128xf32>
    %322 = vector.extract_strided_slice %315 {offsets = [0, 128], sizes = [8, 128], strides = [1, 1]} : vector<8x512xf32> to vector<8x128xf32>
    %323 = arith.negf %322 : vector<8x128xf32>
    %324 = math.exp %323 : vector<8x128xf32>
    %cst_119 = arith.constant 1.000000e+00 : f32
    %325 = vector.broadcast %cst_119 : f32 to vector<8x128xf32>
    %326 = arith.addf %325, %324 : vector<8x128xf32>
    %327 = arith.divf %325, %326 : vector<8x128xf32>
    %328 = vector.extract_strided_slice %315 {offsets = [0, 256], sizes = [8, 128], strides = [1, 1]} : vector<8x512xf32> to vector<8x128xf32>
    %329 = math.tanh %328 : vector<8x128xf32>
    %330 = vector.extract_strided_slice %315 {offsets = [0, 384], sizes = [8, 128], strides = [1, 1]} : vector<8x512xf32> to vector<8x128xf32>
    %331 = arith.negf %330 : vector<8x128xf32>
    %332 = math.exp %331 : vector<8x128xf32>
    %cst_120 = arith.constant 1.000000e+00 : f32
    %333 = vector.broadcast %cst_120 : f32 to vector<8x128xf32>
    %334 = arith.addf %333, %332 : vector<8x128xf32>
    %335 = arith.divf %333, %334 : vector<8x128xf32>
    %336 = arith.mulf %327, %307 : vector<8x128xf32>
    %337 = arith.mulf %321, %329 : vector<8x128xf32>
    %338 = arith.addf %336, %337 : vector<8x128xf32>
    %339 = math.tanh %338 : vector<8x128xf32>
    %340 = arith.mulf %335, %339 : vector<8x128xf32>
    %c16_121 = arith.constant 16 : index
    %c0_122 = arith.constant 0 : index
    %341 = vector.load %arg9[%c16_121, %c0_122] : memref<64x512xf32, #tpu.memory_space<vmem>>, vector<8x512xf32>
    %342 = arith.truncf %340 : vector<8x128xf32> to vector<8x128xbf16>
    %c1_123 = arith.constant 1 : index
    %c0_124 = arith.constant 0 : index
    %c0_125 = arith.constant 0 : index
    %343 = vector.load %arg3[%c1_123, %c0_124, %c0_125] : memref<2x128x512xbf16, #tpu.memory_space<vmem>>, vector<1x128x512xbf16>
    %344 = vector.shape_cast %343 : vector<1x128x512xbf16> to vector<128x512xbf16>
    %cst_126 = arith.constant dense<0.000000e+00> : vector<8x512xf32>
    %345 = tpu.matmul %342, %344, %cst_126 {dimension_numbers = #tpu.dot_dimension_numbers<[1], [0], [0], [1], [0, 0, 1, 1], [], []>} : vector<8x128xbf16>, vector<128x512xbf16>, vector<8x512xf32> -> vector<8x512xf32>
    %346 = arith.addf %341, %345 : vector<8x512xf32>
    %347 = vector.extract_strided_slice %346 {offsets = [0, 0], sizes = [8, 128], strides = [1, 1]} : vector<8x512xf32> to vector<8x128xf32>
    %348 = arith.negf %347 : vector<8x128xf32>
    %349 = math.exp %348 : vector<8x128xf32>
    %cst_127 = arith.constant 1.000000e+00 : f32
    %350 = vector.broadcast %cst_127 : f32 to vector<8x128xf32>
    %351 = arith.addf %350, %349 : vector<8x128xf32>
    %352 = arith.divf %350, %351 : vector<8x128xf32>
    %353 = vector.extract_strided_slice %346 {offsets = [0, 128], sizes = [8, 128], strides = [1, 1]} : vector<8x512xf32> to vector<8x128xf32>
    %354 = arith.negf %353 : vector<8x128xf32>
    %355 = math.exp %354 : vector<8x128xf32>
    %cst_128 = arith.constant 1.000000e+00 : f32
    %356 = vector.broadcast %cst_128 : f32 to vector<8x128xf32>
    %357 = arith.addf %356, %355 : vector<8x128xf32>
    %358 = arith.divf %356, %357 : vector<8x128xf32>
    %359 = vector.extract_strided_slice %346 {offsets = [0, 256], sizes = [8, 128], strides = [1, 1]} : vector<8x512xf32> to vector<8x128xf32>
    %360 = math.tanh %359 : vector<8x128xf32>
    %361 = vector.extract_strided_slice %346 {offsets = [0, 384], sizes = [8, 128], strides = [1, 1]} : vector<8x512xf32> to vector<8x128xf32>
    %362 = arith.negf %361 : vector<8x128xf32>
    %363 = math.exp %362 : vector<8x128xf32>
    %cst_129 = arith.constant 1.000000e+00 : f32
    %364 = vector.broadcast %cst_129 : f32 to vector<8x128xf32>
    %365 = arith.addf %364, %363 : vector<8x128xf32>
    %366 = arith.divf %364, %365 : vector<8x128xf32>
    %367 = arith.mulf %358, %338 : vector<8x128xf32>
    %368 = arith.mulf %352, %360 : vector<8x128xf32>
    %369 = arith.addf %367, %368 : vector<8x128xf32>
    %370 = math.tanh %369 : vector<8x128xf32>
    %371 = arith.mulf %366, %370 : vector<8x128xf32>
    %c24_130 = arith.constant 24 : index
    %c0_131 = arith.constant 0 : index
    %372 = vector.load %arg9[%c24_130, %c0_131] : memref<64x512xf32, #tpu.memory_space<vmem>>, vector<8x512xf32>
    %373 = arith.truncf %371 : vector<8x128xf32> to vector<8x128xbf16>
    %c1_132 = arith.constant 1 : index
    %c0_133 = arith.constant 0 : index
    %c0_134 = arith.constant 0 : index
    %374 = vector.load %arg3[%c1_132, %c0_133, %c0_134] : memref<2x128x512xbf16, #tpu.memory_space<vmem>>, vector<1x128x512xbf16>
    %375 = vector.shape_cast %374 : vector<1x128x512xbf16> to vector<128x512xbf16>
    %cst_135 = arith.constant dense<0.000000e+00> : vector<8x512xf32>
    %376 = tpu.matmul %373, %375, %cst_135 {dimension_numbers = #tpu.dot_dimension_numbers<[1], [0], [0], [1], [0, 0, 1, 1], [], []>} : vector<8x128xbf16>, vector<128x512xbf16>, vector<8x512xf32> -> vector<8x512xf32>
    %377 = arith.addf %372, %376 : vector<8x512xf32>
    %378 = vector.extract_strided_slice %377 {offsets = [0, 0], sizes = [8, 128], strides = [1, 1]} : vector<8x512xf32> to vector<8x128xf32>
    %379 = arith.negf %378 : vector<8x128xf32>
    %380 = math.exp %379 : vector<8x128xf32>
    %cst_136 = arith.constant 1.000000e+00 : f32
    %381 = vector.broadcast %cst_136 : f32 to vector<8x128xf32>
    %382 = arith.addf %381, %380 : vector<8x128xf32>
    %383 = arith.divf %381, %382 : vector<8x128xf32>
    %384 = vector.extract_strided_slice %377 {offsets = [0, 128], sizes = [8, 128], strides = [1, 1]} : vector<8x512xf32> to vector<8x128xf32>
    %385 = arith.negf %384 : vector<8x128xf32>
    %386 = math.exp %385 : vector<8x128xf32>
    %cst_137 = arith.constant 1.000000e+00 : f32
    %387 = vector.broadcast %cst_137 : f32 to vector<8x128xf32>
    %388 = arith.addf %387, %386 : vector<8x128xf32>
    %389 = arith.divf %387, %388 : vector<8x128xf32>
    %390 = vector.extract_strided_slice %377 {offsets = [0, 256], sizes = [8, 128], strides = [1, 1]} : vector<8x512xf32> to vector<8x128xf32>
    %391 = math.tanh %390 : vector<8x128xf32>
    %392 = vector.extract_strided_slice %377 {offsets = [0, 384], sizes = [8, 128], strides = [1, 1]} : vector<8x512xf32> to vector<8x128xf32>
    %393 = arith.negf %392 : vector<8x128xf32>
    %394 = math.exp %393 : vector<8x128xf32>
    %cst_138 = arith.constant 1.000000e+00 : f32
    %395 = vector.broadcast %cst_138 : f32 to vector<8x128xf32>
    %396 = arith.addf %395, %394 : vector<8x128xf32>
    %397 = arith.divf %395, %396 : vector<8x128xf32>
    %398 = arith.mulf %389, %369 : vector<8x128xf32>
    %399 = arith.mulf %383, %391 : vector<8x128xf32>
    %400 = arith.addf %398, %399 : vector<8x128xf32>
    %401 = math.tanh %400 : vector<8x128xf32>
    %402 = arith.mulf %397, %401 : vector<8x128xf32>
    %c32_139 = arith.constant 32 : index
    %c0_140 = arith.constant 0 : index
    %403 = vector.load %arg9[%c32_139, %c0_140] : memref<64x512xf32, #tpu.memory_space<vmem>>, vector<8x512xf32>
    %404 = arith.truncf %402 : vector<8x128xf32> to vector<8x128xbf16>
    %c1_141 = arith.constant 1 : index
    %c0_142 = arith.constant 0 : index
    %c0_143 = arith.constant 0 : index
    %405 = vector.load %arg3[%c1_141, %c0_142, %c0_143] : memref<2x128x512xbf16, #tpu.memory_space<vmem>>, vector<1x128x512xbf16>
    %406 = vector.shape_cast %405 : vector<1x128x512xbf16> to vector<128x512xbf16>
    %cst_144 = arith.constant dense<0.000000e+00> : vector<8x512xf32>
    %407 = tpu.matmul %404, %406, %cst_144 {dimension_numbers = #tpu.dot_dimension_numbers<[1], [0], [0], [1], [0, 0, 1, 1], [], []>} : vector<8x128xbf16>, vector<128x512xbf16>, vector<8x512xf32> -> vector<8x512xf32>
    %408 = arith.addf %403, %407 : vector<8x512xf32>
    %409 = vector.extract_strided_slice %408 {offsets = [0, 0], sizes = [8, 128], strides = [1, 1]} : vector<8x512xf32> to vector<8x128xf32>
    %410 = arith.negf %409 : vector<8x128xf32>
    %411 = math.exp %410 : vector<8x128xf32>
    %cst_145 = arith.constant 1.000000e+00 : f32
    %412 = vector.broadcast %cst_145 : f32 to vector<8x128xf32>
    %413 = arith.addf %412, %411 : vector<8x128xf32>
    %414 = arith.divf %412, %413 : vector<8x128xf32>
    %415 = vector.extract_strided_slice %408 {offsets = [0, 128], sizes = [8, 128], strides = [1, 1]} : vector<8x512xf32> to vector<8x128xf32>
    %416 = arith.negf %415 : vector<8x128xf32>
    %417 = math.exp %416 : vector<8x128xf32>
    %cst_146 = arith.constant 1.000000e+00 : f32
    %418 = vector.broadcast %cst_146 : f32 to vector<8x128xf32>
    %419 = arith.addf %418, %417 : vector<8x128xf32>
    %420 = arith.divf %418, %419 : vector<8x128xf32>
    %421 = vector.extract_strided_slice %408 {offsets = [0, 256], sizes = [8, 128], strides = [1, 1]} : vector<8x512xf32> to vector<8x128xf32>
    %422 = math.tanh %421 : vector<8x128xf32>
    %423 = vector.extract_strided_slice %408 {offsets = [0, 384], sizes = [8, 128], strides = [1, 1]} : vector<8x512xf32> to vector<8x128xf32>
    %424 = arith.negf %423 : vector<8x128xf32>
    %425 = math.exp %424 : vector<8x128xf32>
    %cst_147 = arith.constant 1.000000e+00 : f32
    %426 = vector.broadcast %cst_147 : f32 to vector<8x128xf32>
    %427 = arith.addf %426, %425 : vector<8x128xf32>
    %428 = arith.divf %426, %427 : vector<8x128xf32>
    %429 = arith.mulf %420, %400 : vector<8x128xf32>
    %430 = arith.mulf %414, %422 : vector<8x128xf32>
    %431 = arith.addf %429, %430 : vector<8x128xf32>
    %432 = math.tanh %431 : vector<8x128xf32>
    %433 = arith.mulf %428, %432 : vector<8x128xf32>
    %c40_148 = arith.constant 40 : index
    %c0_149 = arith.constant 0 : index
    %434 = vector.load %arg9[%c40_148, %c0_149] : memref<64x512xf32, #tpu.memory_space<vmem>>, vector<8x512xf32>
    %435 = arith.truncf %433 : vector<8x128xf32> to vector<8x128xbf16>
    %c1_150 = arith.constant 1 : index
    %c0_151 = arith.constant 0 : index
    %c0_152 = arith.constant 0 : index
    %436 = vector.load %arg3[%c1_150, %c0_151, %c0_152] : memref<2x128x512xbf16, #tpu.memory_space<vmem>>, vector<1x128x512xbf16>
    %437 = vector.shape_cast %436 : vector<1x128x512xbf16> to vector<128x512xbf16>
    %cst_153 = arith.constant dense<0.000000e+00> : vector<8x512xf32>
    %438 = tpu.matmul %435, %437, %cst_153 {dimension_numbers = #tpu.dot_dimension_numbers<[1], [0], [0], [1], [0, 0, 1, 1], [], []>} : vector<8x128xbf16>, vector<128x512xbf16>, vector<8x512xf32> -> vector<8x512xf32>
    %439 = arith.addf %434, %438 : vector<8x512xf32>
    %440 = vector.extract_strided_slice %439 {offsets = [0, 0], sizes = [8, 128], strides = [1, 1]} : vector<8x512xf32> to vector<8x128xf32>
    %441 = arith.negf %440 : vector<8x128xf32>
    %442 = math.exp %441 : vector<8x128xf32>
    %cst_154 = arith.constant 1.000000e+00 : f32
    %443 = vector.broadcast %cst_154 : f32 to vector<8x128xf32>
    %444 = arith.addf %443, %442 : vector<8x128xf32>
    %445 = arith.divf %443, %444 : vector<8x128xf32>
    %446 = vector.extract_strided_slice %439 {offsets = [0, 128], sizes = [8, 128], strides = [1, 1]} : vector<8x512xf32> to vector<8x128xf32>
    %447 = arith.negf %446 : vector<8x128xf32>
    %448 = math.exp %447 : vector<8x128xf32>
    %cst_155 = arith.constant 1.000000e+00 : f32
    %449 = vector.broadcast %cst_155 : f32 to vector<8x128xf32>
    %450 = arith.addf %449, %448 : vector<8x128xf32>
    %451 = arith.divf %449, %450 : vector<8x128xf32>
    %452 = vector.extract_strided_slice %439 {offsets = [0, 256], sizes = [8, 128], strides = [1, 1]} : vector<8x512xf32> to vector<8x128xf32>
    %453 = math.tanh %452 : vector<8x128xf32>
    %454 = vector.extract_strided_slice %439 {offsets = [0, 384], sizes = [8, 128], strides = [1, 1]} : vector<8x512xf32> to vector<8x128xf32>
    %455 = arith.negf %454 : vector<8x128xf32>
    %456 = math.exp %455 : vector<8x128xf32>
    %cst_156 = arith.constant 1.000000e+00 : f32
    %457 = vector.broadcast %cst_156 : f32 to vector<8x128xf32>
    %458 = arith.addf %457, %456 : vector<8x128xf32>
    %459 = arith.divf %457, %458 : vector<8x128xf32>
    %460 = arith.mulf %451, %431 : vector<8x128xf32>
    %461 = arith.mulf %445, %453 : vector<8x128xf32>
    %462 = arith.addf %460, %461 : vector<8x128xf32>
    %463 = math.tanh %462 : vector<8x128xf32>
    %464 = arith.mulf %459, %463 : vector<8x128xf32>
    %c48_157 = arith.constant 48 : index
    %c0_158 = arith.constant 0 : index
    %465 = vector.load %arg9[%c48_157, %c0_158] : memref<64x512xf32, #tpu.memory_space<vmem>>, vector<8x512xf32>
    %466 = arith.truncf %464 : vector<8x128xf32> to vector<8x128xbf16>
    %c1_159 = arith.constant 1 : index
    %c0_160 = arith.constant 0 : index
    %c0_161 = arith.constant 0 : index
    %467 = vector.load %arg3[%c1_159, %c0_160, %c0_161] : memref<2x128x512xbf16, #tpu.memory_space<vmem>>, vector<1x128x512xbf16>
    %468 = vector.shape_cast %467 : vector<1x128x512xbf16> to vector<128x512xbf16>
    %cst_162 = arith.constant dense<0.000000e+00> : vector<8x512xf32>
    %469 = tpu.matmul %466, %468, %cst_162 {dimension_numbers = #tpu.dot_dimension_numbers<[1], [0], [0], [1], [0, 0, 1, 1], [], []>} : vector<8x128xbf16>, vector<128x512xbf16>, vector<8x512xf32> -> vector<8x512xf32>
    %470 = arith.addf %465, %469 : vector<8x512xf32>
    %471 = vector.extract_strided_slice %470 {offsets = [0, 0], sizes = [8, 128], strides = [1, 1]} : vector<8x512xf32> to vector<8x128xf32>
    %472 = arith.negf %471 : vector<8x128xf32>
    %473 = math.exp %472 : vector<8x128xf32>
    %cst_163 = arith.constant 1.000000e+00 : f32
    %474 = vector.broadcast %cst_163 : f32 to vector<8x128xf32>
    %475 = arith.addf %474, %473 : vector<8x128xf32>
    %476 = arith.divf %474, %475 : vector<8x128xf32>
    %477 = vector.extract_strided_slice %470 {offsets = [0, 128], sizes = [8, 128], strides = [1, 1]} : vector<8x512xf32> to vector<8x128xf32>
    %478 = arith.negf %477 : vector<8x128xf32>
    %479 = math.exp %478 : vector<8x128xf32>
    %cst_164 = arith.constant 1.000000e+00 : f32
    %480 = vector.broadcast %cst_164 : f32 to vector<8x128xf32>
    %481 = arith.addf %480, %479 : vector<8x128xf32>
    %482 = arith.divf %480, %481 : vector<8x128xf32>
    %483 = vector.extract_strided_slice %470 {offsets = [0, 256], sizes = [8, 128], strides = [1, 1]} : vector<8x512xf32> to vector<8x128xf32>
    %484 = math.tanh %483 : vector<8x128xf32>
    %485 = vector.extract_strided_slice %470 {offsets = [0, 384], sizes = [8, 128], strides = [1, 1]} : vector<8x512xf32> to vector<8x128xf32>
    %486 = arith.negf %485 : vector<8x128xf32>
    %487 = math.exp %486 : vector<8x128xf32>
    %cst_165 = arith.constant 1.000000e+00 : f32
    %488 = vector.broadcast %cst_165 : f32 to vector<8x128xf32>
    %489 = arith.addf %488, %487 : vector<8x128xf32>
    %490 = arith.divf %488, %489 : vector<8x128xf32>
    %491 = arith.mulf %482, %462 : vector<8x128xf32>
    %492 = arith.mulf %476, %484 : vector<8x128xf32>
    %493 = arith.addf %491, %492 : vector<8x128xf32>
    %494 = math.tanh %493 : vector<8x128xf32>
    %495 = arith.mulf %490, %494 : vector<8x128xf32>
    %c56_166 = arith.constant 56 : index
    %c0_167 = arith.constant 0 : index
    %496 = vector.load %arg9[%c56_166, %c0_167] : memref<64x512xf32, #tpu.memory_space<vmem>>, vector<8x512xf32>
    %497 = arith.truncf %495 : vector<8x128xf32> to vector<8x128xbf16>
    %c1_168 = arith.constant 1 : index
    %c0_169 = arith.constant 0 : index
    %c0_170 = arith.constant 0 : index
    %498 = vector.load %arg3[%c1_168, %c0_169, %c0_170] : memref<2x128x512xbf16, #tpu.memory_space<vmem>>, vector<1x128x512xbf16>
    %499 = vector.shape_cast %498 : vector<1x128x512xbf16> to vector<128x512xbf16>
    %cst_171 = arith.constant dense<0.000000e+00> : vector<8x512xf32>
    %500 = tpu.matmul %497, %499, %cst_171 {dimension_numbers = #tpu.dot_dimension_numbers<[1], [0], [0], [1], [0, 0, 1, 1], [], []>} : vector<8x128xbf16>, vector<128x512xbf16>, vector<8x512xf32> -> vector<8x512xf32>
    %501 = arith.addf %496, %500 : vector<8x512xf32>
    %502 = vector.extract_strided_slice %501 {offsets = [0, 0], sizes = [8, 128], strides = [1, 1]} : vector<8x512xf32> to vector<8x128xf32>
    %503 = arith.negf %502 : vector<8x128xf32>
    %504 = math.exp %503 : vector<8x128xf32>
    %cst_172 = arith.constant 1.000000e+00 : f32
    %505 = vector.broadcast %cst_172 : f32 to vector<8x128xf32>
    %506 = arith.addf %505, %504 : vector<8x128xf32>
    %507 = arith.divf %505, %506 : vector<8x128xf32>
    %508 = vector.extract_strided_slice %501 {offsets = [0, 128], sizes = [8, 128], strides = [1, 1]} : vector<8x512xf32> to vector<8x128xf32>
    %509 = arith.negf %508 : vector<8x128xf32>
    %510 = math.exp %509 : vector<8x128xf32>
    %cst_173 = arith.constant 1.000000e+00 : f32
    %511 = vector.broadcast %cst_173 : f32 to vector<8x128xf32>
    %512 = arith.addf %511, %510 : vector<8x128xf32>
    %513 = arith.divf %511, %512 : vector<8x128xf32>
    %514 = vector.extract_strided_slice %501 {offsets = [0, 256], sizes = [8, 128], strides = [1, 1]} : vector<8x512xf32> to vector<8x128xf32>
    %515 = math.tanh %514 : vector<8x128xf32>
    %516 = vector.extract_strided_slice %501 {offsets = [0, 384], sizes = [8, 128], strides = [1, 1]} : vector<8x512xf32> to vector<8x128xf32>
    %517 = arith.negf %516 : vector<8x128xf32>
    %518 = math.exp %517 : vector<8x128xf32>
    %cst_174 = arith.constant 1.000000e+00 : f32
    %519 = vector.broadcast %cst_174 : f32 to vector<8x128xf32>
    %520 = arith.addf %519, %518 : vector<8x128xf32>
    %521 = arith.divf %519, %520 : vector<8x128xf32>
    %522 = arith.mulf %513, %493 : vector<8x128xf32>
    %523 = arith.mulf %507, %515 : vector<8x128xf32>
    %524 = arith.addf %522, %523 : vector<8x128xf32>
    %525 = math.tanh %524 : vector<8x128xf32>
    %526 = arith.mulf %521, %525 : vector<8x128xf32>
    %527 = arith.truncf %526 : vector<8x128xf32> to vector<8x128xbf16>
    %c0_175 = arith.constant 0 : index
    %c0_176 = arith.constant 0 : index
    %528 = vector.load %arg5[%c0_175, %c0_176] : memref<128x128xbf16, #tpu.memory_space<vmem>>, vector<128x128xbf16>
    %cst_177 = arith.constant dense<0.000000e+00> : vector<8x128xf32>
    %529 = tpu.matmul %527, %528, %cst_177 {dimension_numbers = #tpu.dot_dimension_numbers<[1], [0], [0], [1], [0, 0, 1, 1], [], []>} : vector<8x128xbf16>, vector<128x128xbf16>, vector<8x128xf32> -> vector<8x128xf32>
    %c0_178 = arith.constant 0 : index
    %c0_179 = arith.constant 0 : index
    %530 = vector.load %arg6[%c0_178, %c0_179] : memref<1x128xf32, #tpu.memory_space<vmem>>, vector<1x128xf32>
    %531 = vector.broadcast %530 : vector<1x128xf32> to vector<8x128xf32>
    %532 = arith.addf %529, %531 : vector<8x128xf32>
    %c0_180 = arith.constant 0 : index
    %c0_181 = arith.constant 0 : index
    %533 = vector.load %arg7[%c0_180, %c0_181] : memref<8x128xf32, #tpu.memory_space<vmem>>, vector<8x128xf32>
    tpu.vector_store %arg7[%c0_180, %c0_181], %532 {strides = array<i32>} : memref<8x128xf32, #tpu.memory_space<vmem>>, vector<8x128xf32>,
    return
  }
}

</mosaic_0001>

<llo_original>
// kernel: lstm_model_forward.1
$region0: #{lstm_model_forward.1}
  #allocation0 [shape = 'u32[]', space=smem, size = 0x4, offset = 0x4, fixed_abs, tag = 'smem constant byte address 0x4 - core index']
  #allocation1 [shape = 'u32[144,128]{1,0:T(1,128)}', space=vmem, size = 0x12000, scoped, tag = 'internal scratch']
  #allocation2 [shape = 'f32[64,128]{1,0:T(8,128)}', space=vmem, size = 0x8000, scoped, tag = 'scratch operand']
  #allocation3 [shape = 'f32[64,512]{1,0:T(8,128)}', space=vmem, size = 0x20000, scoped, tag = 'scratch operand']
  %s0 = inlined_call_operand.vmem [shape: f32[64,128], index: 0, kind: input, shape index: {}]
  %s1 = inlined_call_operand.hbm [shape: bf16[128,512], index: 1, kind: input, shape index: {}]
  %s2 = inlined_call_operand.hbm [shape: bf16[1,128,512], index: 2, kind: input, shape index: {}]
  %s3 = inlined_call_operand.hbm [shape: bf16[2,128,512], index: 3, kind: input, shape index: {}]
  %s4 = inlined_call_operand.vmem [shape: f32[2,1,512], index: 4, kind: input, shape index: {}]
  %s5 = inlined_call_operand.vmem [shape: bf16[128,128], index: 5, kind: input, shape index: {}]
  %s6 = inlined_call_operand.vmem [shape: f32[1,128], index: 6, kind: input, shape index: {}]
  %s7 = inlined_call_operand.vmem [shape: f32[8,128], index: 7, kind: output, shape index: {}]
  %s8 = sld [smem:[#allocation0]]
  $region50: #{lstm_model_forward.1} parent=0
    _
  %s10 = ssub.s32 1, %s8
  %s11 = scalar_select 0, %s10, %s8
  $region1: #{lstm_model_forward.1} parent=0
    #allocation4 [shape = 'u8[131072]{0}', space=vmem, size = 0x20000, scoped, tag = 'input window, operand 1, single buffered']
    #allocation5 [shape = 's32[1]{0}', space=sflag, size = 0x4, scoped, tag = 'scoped memory for lstm_model_forward.1']
    #allocation6 [shape = 'u8[131072]{0}', space=vmem, size = 0x20000, scoped, tag = 'input window, operand 2, single buffered']
    #allocation7 [shape = 's32[1]{0}', space=sflag, size = 0x4, scoped, tag = 'scoped memory for lstm_model_forward.1']
    #allocation8 [shape = 'u8[262144]{0}', space=vmem, size = 0x40000, scoped, tag = 'input window, operand 3, single buffered']
    %12 = vsyncpa [#allocation5], 0
    %13 = vsyncpa [#allocation7], 0
    // Predicated region
    $region2: #{lstm_model_forward.1} parent=1 // pred_check
      _
    $region3: #{lstm_model_forward.1} parent=1 // pred_check_branch
      %15 = sbr.rel (0) target = $region5
    $region4: #{lstm_model_forward.1} parent=1 // pred_region
      _
    $region5: #{lstm_model_forward.1} parent=1 // pred_fallthru
      _
    // Predicated region
    $region6: #{lstm_model_forward.1} parent=1 // pred_check
      _
    $region7: #{lstm_model_forward.1} parent=1 // pred_check_branch
      %17 = sbr.rel (0) target = $region9
    $region8: #{lstm_model_forward.1} parent=1 // pred_region
      %s19 = ssub.s32 4096, 4096
      %20 = vsyncadd [#allocation5], %s19
      %s21 = sshll.u32 [#allocation4], 4
      %s22 = int_to_ptr.vmem [resolvable:$true] %s21
      %27 = dma.hbm_to_vmem [thread:$0]  %s1, 4096, %s22, [#allocation5], 256, 256, 16
    $region9: #{lstm_model_forward.1} parent=1 // pred_fallthru
      _
    // Predicated region
    $region10: #{lstm_model_forward.1} parent=1 // pred_check
      _
    $region11: #{lstm_model_forward.1} parent=1 // pred_check_branch
      %29 = sbr.rel (0) target = $region13
    $region12: #{lstm_model_forward.1} parent=1 // pred_region
      %s31 = ssub.s32 4096, 4096
      %32 = vsyncadd [#allocation7], %s31
      %s33 = sshll.u32 [#allocation6], 4
      %s34 = int_to_ptr.vmem [resolvable:$true] %s33
      %39 = dma.hbm_to_vmem [thread:$0]  %s2, 4096, %s34, [#allocation7], 256, 256, 16
    $region13: #{lstm_model_forward.1} parent=1 // pred_fallthru
      _
    // Predicated region
    $region14: #{lstm_model_forward.1} parent=1 // pred_check
      _
    $region15: #{lstm_model_forward.1} parent=1 // pred_check_branch
      %41 = sbr.rel (0) target = $region17
    $region16: #{lstm_model_forward.1} parent=1 // pred_region
      %s43 = ssub.s32 8192, 8192
      %44 = vsyncadd [#allocation7], %s43
      %s45 = sshll.u32 [#allocation8], 4
      %s46 = int_to_ptr.vmem [resolvable:$true] %s45
      %51 = dma.hbm_to_vmem [thread:$0]  %s3, 8192, %s46, [#allocation7], 256, 256, 16
    $region17: #{lstm_model_forward.1} parent=1 // pred_fallthru
      _
    // Predicated region
    $region18: #{lstm_model_forward.1} parent=1 // pred_check
      _
    $region19: #{lstm_model_forward.1} parent=1 // pred_check_branch
      %53 = sbr.rel (0) target = $region21
    $region20: #{lstm_model_forward.1} parent=1 // pred_region
      _
    $region21: #{lstm_model_forward.1} parent=1 // pred_fallthru
      _
    // Predicated region
    $region22: #{lstm_model_forward.1} parent=1 // pred_check
      _
    $region23: #{lstm_model_forward.1} parent=1 // pred_check_branch
      %55 = sbr.rel (0) target = $region25
    $region24: #{lstm_model_forward.1} parent=1 // pred_region
      _
    $region25: #{lstm_model_forward.1} parent=1 // pred_fallthru
      _
    // Predicated region
    $region26: #{lstm_model_forward.1} parent=1 // pred_check
      _
    $region27: #{lstm_model_forward.1} parent=1 // pred_check_branch
      %57 = sbr.rel (0) target = $region29
    $region28: #{lstm_model_forward.1} parent=1 // pred_region
      _
    $region29: #{lstm_model_forward.1} parent=1 // pred_fallthru
      _
    // Predicated region
    $region30: #{lstm_model_forward.1} parent=1 // pred_check
      _
    $region31: #{lstm_model_forward.1} parent=1 // pred_check_branch
      %59 = sbr.rel (0) target = $region33
    $region32: #{lstm_model_forward.1} parent=1 // pred_region
      %60 = dma.done [#allocation5], 4096
    $region33: #{lstm_model_forward.1} parent=1 // pred_fallthru
      _
    // Predicated region
    $region34: #{lstm_model_forward.1} parent=1 // pred_check
      _
    $region35: #{lstm_model_forward.1} parent=1 // pred_check_branch
      %62 = sbr.rel (0) target = $region37
    $region36: #{lstm_model_forward.1} parent=1 // pred_region
      %63 = dma.done [#allocation7], 4096
    $region37: #{lstm_model_forward.1} parent=1 // pred_fallthru
      _
    // Predicated region
    $region38: #{lstm_model_forward.1} parent=1 // pred_check
      _
    $region39: #{lstm_model_forward.1} parent=1 // pred_check_branch
      %65 = sbr.rel (0) target = $region41
    $region40: #{lstm_model_forward.1} parent=1 // pred_region
      %66 = dma.done [#allocation7], 8192
    $region41: #{lstm_model_forward.1} parent=1 // pred_fallthru
      _
    %v68 = vld [vmem:[%s0] sm:$0xff]
    %v69 = vld [vmem:[%s0 + $0x8] sm:$0xff]
    %v70 = vld [vmem:[%s0 + $0x10] sm:$0xff]
    %v71 = vld [vmem:[%s0 + $0x18] sm:$0xff]
    %v72 = vld [vmem:[%s0 + $0x20] sm:$0xff]
    %v73 = vld [vmem:[%s0 + $0x28] sm:$0xff]
    %v74 = vld [vmem:[%s0 + $0x30] sm:$0xff]
    %v75 = vld [vmem:[%s0 + $0x38] sm:$0xff]
    %v76 = vld [vmem:[#allocation4] sm:$0xff]
    %v77 = vld [vmem:[#allocation4 + $0x8] sm:$0xff]
    %v78 = vld [vmem:[#allocation4 + $0x10] sm:$0xff]
    %v79 = vld [vmem:[#allocation4 + $0x18] sm:$0xff]
    %v80 = vld [vmem:[#allocation4 + $0x20] sm:$0xff]
    %v81 = vld [vmem:[#allocation4 + $0x28] sm:$0xff]
    %v82 = vld [vmem:[#allocation4 + $0x30] sm:$0xff]
    %v83 = vld [vmem:[#allocation4 + $0x38] sm:$0xff]
    %v84 = vld [vmem:[#allocation4 + $0x40] sm:$0xff]
    %v85 = vld [vmem:[#allocation4 + $0x48] sm:$0xff]
    %v86 = vld [vmem:[#allocation4 + $0x50] sm:$0xff]
    %v87 = vld [vmem:[#allocation4 + $0x58] sm:$0xff]
    %v88 = vld [vmem:[#allocation4 + $0x60] sm:$0xff]
    %v89 = vld [vmem:[#allocation4 + $0x68] sm:$0xff]
    %v90 = vld [vmem:[#allocation4 + $0x70] sm:$0xff]
    %v91 = vld [vmem:[#allocation4 + $0x78] sm:$0xff]
    %v92 = vld [vmem:[#allocation4 + $0x80] sm:$0xff]
    %v93 = vld [vmem:[#allocation4 + $0x88] sm:$0xff]
    %v94 = vld [vmem:[#allocation4 + $0x90] sm:$0xff]
    %v95 = vld [vmem:[#allocation4 + $0x98] sm:$0xff]
    %v96 = vld [vmem:[#allocation4 + $0xa0] sm:$0xff]
    %v97 = vld [vmem:[#allocation4 + $0xa8] sm:$0xff]
    %v98 = vld [vmem:[#allocation4 + $0xb0] sm:$0xff]
    %v99 = vld [vmem:[#allocation4 + $0xb8] sm:$0xff]
    %v100 = vld [vmem:[#allocation4 + $0xc0] sm:$0xff]
    %v101 = vld [vmem:[#allocation4 + $0xc8] sm:$0xff]
    %v102 = vld [vmem:[#allocation4 + $0xd0] sm:$0xff]
    %v103 = vld [vmem:[#allocation4 + $0xd8] sm:$0xff]
    %v104 = vld [vmem:[#allocation4 + $0xe0] sm:$0xff]
    %v105 = vld [vmem:[#allocation4 + $0xe8] sm:$0xff]
    %v106 = vld [vmem:[#allocation4 + $0xf0] sm:$0xff]
    %v107 = vld [vmem:[#allocation4 + $0xf8] sm:$0xff]
    %v108 = vpack.c.bf16 %v69, %v68
    %v109 = vpack.c.bf16 %v71, %v70
    %v110 = vpack.c.bf16 %v73, %v72
    %v111 = vpack.c.bf16 %v75, %v74
    %v112 = vld [vmem:[%s4] sm:$0xf]
    %v114 = vlaneseq
    %v115 = vshrl.u32 %v114, 7
    %v116 = vsub.s32 0, %v115
    %v117 = vrot.slane %v112, %v116
    %v118 = vlaneseq
    %v119 = vshrl.u32 %v118, 7
    %v120 = vsub.s32 1, %v119
    %v121 = vrot.slane %v112, %v120
    %v122 = vlaneseq
    %v123 = vshrl.u32 %v122, 7
    %v124 = vsub.s32 2, %v123
    %v125 = vrot.slane %v112, %v124
    %v126 = vlaneseq
    %v127 = vshrl.u32 %v126, 7
    %v128 = vsub.s32 3, %v127
    %v129 = vrot.slane %v112, %v128
    %v166 = vunpack.c.l.b16 %v76
    %v167 = vunpack.c.h.b16 %v76
    %v168 = vunpack.c.l.b16 %v77
    %v169 = vunpack.c.h.b16 %v77
    %v170 = vunpack.c.l.b16 %v78
    %v171 = vunpack.c.h.b16 %v78
    %v172 = vunpack.c.l.b16 %v79
    %v173 = vunpack.c.h.b16 %v79
    %v174 = vunpack.c.l.b16 %v80
    %v175 = vunpack.c.h.b16 %v80
    %v176 = vunpack.c.l.b16 %v81
    %v177 = vunpack.c.h.b16 %v81
    %v178 = vunpack.c.l.b16 %v82
    %v179 = vunpack.c.h.b16 %v82
    %v180 = vunpack.c.l.b16 %v83
    %v181 = vunpack.c.h.b16 %v83
    %v182 = vunpack.c.l.b16 %v84
    %v183 = vunpack.c.h.b16 %v84
    %v184 = vunpack.c.l.b16 %v85
    %v185 = vunpack.c.h.b16 %v85
    %v186 = vunpack.c.l.b16 %v86
    %v187 = vunpack.c.h.b16 %v86
    %v188 = vunpack.c.l.b16 %v87
    %v189 = vunpack.c.h.b16 %v87
    %v190 = vunpack.c.l.b16 %v88
    %v191 = vunpack.c.h.b16 %v88
    %v192 = vunpack.c.l.b16 %v89
    %v193 = vunpack.c.h.b16 %v89
    %v194 = vunpack.c.l.b16 %v90
    %v195 = vunpack.c.h.b16 %v90
    %v196 = vunpack.c.l.b16 %v91
    %v197 = vunpack.c.h.b16 %v91
    %v198 = vunpack.c.l.b16 %v92
    %v199 = vunpack.c.h.b16 %v92
    %v200 = vunpack.c.l.b16 %v93
    %v201 = vunpack.c.h.b16 %v93
    %v202 = vunpack.c.l.b16 %v94
    %v203 = vunpack.c.h.b16 %v94
    %v204 = vunpack.c.l.b16 %v95
    %v205 = vunpack.c.h.b16 %v95
    %v206 = vunpack.c.l.b16 %v96
    %v207 = vunpack.c.h.b16 %v96
    %v208 = vunpack.c.l.b16 %v97
    %v209 = vunpack.c.h.b16 %v97
    %v210 = vunpack.c.l.b16 %v98
    %v211 = vunpack.c.h.b16 %v98
    %v212 = vunpack.c.l.b16 %v99
    %v213 = vunpack.c.h.b16 %v99
    %v214 = vunpack.c.l.b16 %v100
    %v215 = vunpack.c.h.b16 %v100
    %v216 = vunpack.c.l.b16 %v101
    %v217 = vunpack.c.h.b16 %v101
    %v218 = vunpack.c.l.b16 %v102
    %v219 = vunpack.c.h.b16 %v102
    %v220 = vunpack.c.l.b16 %v103
    %v221 = vunpack.c.h.b16 %v103
    %v222 = vunpack.c.l.b16 %v104
    %v223 = vunpack.c.h.b16 %v104
    %v224 = vunpack.c.l.b16 %v105
    %v225 = vunpack.c.h.b16 %v105
    %v226 = vunpack.c.l.b16 %v106
    %v227 = vunpack.c.h.b16 %v106
    %v228 = vunpack.c.l.b16 %v107
    %v229 = vunpack.c.h.b16 %v107
    %v230 = vpack.c.b16 %v170, %v166
    %v231 = vpack.c.b16 %v171, %v167
    %v232 = vpack.c.b16 %v172, %v168
    %v233 = vpack.c.b16 %v173, %v169
    %v234 = vpack.c.b16 %v178, %v174
    %v235 = vpack.c.b16 %v179, %v175
    %v236 = vpack.c.b16 %v180, %v176
    %v237 = vpack.c.b16 %v181, %v177
    %v238 = vpack.c.b16 %v186, %v182
    %v239 = vpack.c.b16 %v187, %v183
    %v240 = vpack.c.b16 %v188, %v184
    %v241 = vpack.c.b16 %v189, %v185
    %v242 = vpack.c.b16 %v194, %v190
    %v243 = vpack.c.b16 %v195, %v191
    %v244 = vpack.c.b16 %v196, %v192
    %v245 = vpack.c.b16 %v197, %v193
    %v246 = vpack.c.b16 %v202, %v198
    %v247 = vpack.c.b16 %v203, %v199
    %v248 = vpack.c.b16 %v204, %v200
    %v249 = vpack.c.b16 %v205, %v201
    %v250 = vpack.c.b16 %v210, %v206
    %v251 = vpack.c.b16 %v211, %v207
    %v252 = vpack.c.b16 %v212, %v208
    %v253 = vpack.c.b16 %v213, %v209
    %v254 = vpack.c.b16 %v218, %v214
    %v255 = vpack.c.b16 %v219, %v215
    %v256 = vpack.c.b16 %v220, %v216
    %v257 = vpack.c.b16 %v221, %v217
    %v258 = vpack.c.b16 %v226, %v222
    %v259 = vpack.c.b16 %v227, %v223
    %v260 = vpack.c.b16 %v228, %v224
    %v261 = vpack.c.b16 %v229, %v225
    %294 = vmatprep.subr.bf16.mxu0 %v259
    %295 = vmatpush1.bf16.msra.mxu0 %v258
    %296 = vmatprep.subr.bf16.mxu0 %v255
    %297 = vmatpush1.bf16.msra.mxu0 %v254
    %298 = vmatprep.subr.bf16.mxu0 %v251
    %299 = vmatpush1.bf16.msra.mxu0 %v250
    %300 = vmatprep.subr.bf16.mxu0 %v247
    %301 = vmatpush1.bf16.msra.mxu0 %v246
    %302 = vmatprep.subr.bf16.mxu0 %v243
    %303 = vmatpush1.bf16.msra.mxu0 %v242
    %304 = vmatprep.subr.bf16.mxu0 %v239
    %305 = vmatpush1.bf16.msra.mxu0 %v238
    %306 = vmatprep.subr.bf16.mxu0 %v235
    %307 = vmatpush1.bf16.msra.mxu0 %v234
    %308 = vmatprep.subr.bf16.mxu0 %v231
    %309 = vmatpush1.bf16.msra.mxu0 %v230
    %310 = vmatprep.subr.bf16.mxu0 0
    %311 = vmatpush2.bf16.msra.mxu0 0
    %312 = vmatprep.subr.bf16.mxu0 0
    %313 = vmatpush2.bf16.msra.mxu0 0
    %314 = vmatprep.subr.bf16.mxu0 0
    %315 = vmatpush2.bf16.msra.mxu0 0
    %316 = vmatprep.subr.bf16.mxu0 0
    %317 = vmatpush2.bf16.msra.mxu0 0
    %318 = vmatprep.subr.bf16.mxu0 0
    %319 = vmatpush2.bf16.msra.mxu0 0
    %320 = vmatprep.subr.bf16.mxu0 0
    %321 = vmatpush2.bf16.msra.mxu0 0
    %322 = vmatprep.subr.bf16.mxu0 0
    %323 = vmatpush2.bf16.msra.mxu0 0
    %324 = vmatprep.subr.bf16.mxu0 0
    %325 = vmatpush2.bf16.msra.mxu0 0
    %326 = vmatprep.mubr.bf16.mxu0 0
    %327 = vmatmul.mubr.bf16.gmra.mxu0 %v108
    %v328 = vpop.f32.mrf.mxu0
    %v329 = vadd.f32 %v117, %v328
    %v330 = vpop.f32.mrf.mxu0
    %v331 = vadd.f32 %v121, %v330
    %v332 = vpop.f32.mrf.mxu0
    %v333 = vadd.f32 %v117, %v332
    %v334 = vpop.f32.mrf.mxu0
    %v335 = vadd.f32 %v121, %v334
    %336 = vmatprep.mubr.bf16.mxu0 0
    %337 = vmatmul.mubr.bf16.gmra.mxu0 %v109
    %v338 = vpop.f32.mrf.mxu0
    %v339 = vadd.f32 %v117, %v338
    %v340 = vpop.f32.mrf.mxu0
    %v341 = vadd.f32 %v121, %v340
    %v342 = vpop.f32.mrf.mxu0
    %v343 = vadd.f32 %v117, %v342
    %v344 = vpop.f32.mrf.mxu0
    %v345 = vadd.f32 %v121, %v344
    %346 = vmatprep.mubr.bf16.mxu0 0
    %347 = vmatmul.mubr.bf16.gmra.mxu0 %v110
    %v348 = vpop.f32.mrf.mxu0
    %v349 = vadd.f32 %v117, %v348
    %v350 = vpop.f32.mrf.mxu0
    %v351 = vadd.f32 %v121, %v350
    %v352 = vpop.f32.mrf.mxu0
    %v353 = vadd.f32 %v117, %v352
    %v354 = vpop.f32.mrf.mxu0
    %v355 = vadd.f32 %v121, %v354
    %356 = vmatprep.mubr.bf16.mxu0 0
    %357 = vmatmul.mubr.bf16.gmra.mxu0 %v111
    %v358 = vpop.f32.mrf.mxu0
    %v359 = vadd.f32 %v117, %v358
    %v360 = vpop.f32.mrf.mxu0
    %v361 = vadd.f32 %v121, %v360
    %v362 = vpop.f32.mrf.mxu0
    %v363 = vadd.f32 %v117, %v362
    %v364 = vpop.f32.mrf.mxu0
    %v365 = vadd.f32 %v121, %v364
    %366 = vdwg.mxu0
    %367 = vmatprep.subr.bf16.mxu0 %v261
    %368 = vmatpush1.bf16.msra.mxu0 %v260
    %369 = vmatprep.subr.bf16.mxu0 %v257
    %370 = vmatpush1.bf16.msra.mxu0 %v256
    %371 = vmatprep.subr.bf16.mxu0 %v253
    %372 = vmatpush1.bf16.msra.mxu0 %v252
    %373 = vmatprep.subr.bf16.mxu0 %v249
    %374 = vmatpush1.bf16.msra.mxu0 %v248
    %375 = vmatprep.subr.bf16.mxu0 %v245
    %376 = vmatpush1.bf16.msra.mxu0 %v244
    %377 = vmatprep.subr.bf16.mxu0 %v241
    %378 = vmatpush1.bf16.msra.mxu0 %v240
    %379 = vmatprep.subr.bf16.mxu0 %v237
    %380 = vmatpush1.bf16.msra.mxu0 %v236
    %381 = vmatprep.subr.bf16.mxu0 %v233
    %382 = vmatpush1.bf16.msra.mxu0 %v232
    %383 = vmatprep.subr.bf16.mxu0 0
    %384 = vmatpush2.bf16.msra.mxu0 0
    %385 = vmatprep.subr.bf16.mxu0 0
    %386 = vmatpush2.bf16.msra.mxu0 0
    %387 = vmatprep.subr.bf16.mxu0 0
    %388 = vmatpush2.bf16.msra.mxu0 0
    %389 = vmatprep.subr.bf16.mxu0 0
    %390 = vmatpush2.bf16.msra.mxu0 0
    %391 = vmatprep.subr.bf16.mxu0 0
    %392 = vmatpush2.bf16.msra.mxu0 0
    %393 = vmatprep.subr.bf16.mxu0 0
    %394 = vmatpush2.bf16.msra.mxu0 0
    %395 = vmatprep.subr.bf16.mxu0 0
    %396 = vmatpush2.bf16.msra.mxu0 0
    %397 = vmatprep.subr.bf16.mxu0 0
    %398 = vmatpush2.bf16.msra.mxu0 0
    %399 = vmatprep.mubr.bf16.mxu0 0
    %400 = vmatmul.mubr.bf16.gmra.mxu0 %v108
    %v401 = vpop.f32.mrf.mxu0
    %v402 = vadd.f32 %v125, %v401
    %v403 = vpop.f32.mrf.mxu0
    %v404 = vadd.f32 %v129, %v403
    %v405 = vpop.f32.mrf.mxu0
    %v406 = vadd.f32 %v125, %v405
    %v407 = vpop.f32.mrf.mxu0
    %v408 = vadd.f32 %v129, %v407
    %409 = vmatprep.mubr.bf16.mxu0 0
    %410 = vmatmul.mubr.bf16.gmra.mxu0 %v109
    %v411 = vpop.f32.mrf.mxu0
    %v412 = vadd.f32 %v125, %v411
    %v413 = vpop.f32.mrf.mxu0
    %v414 = vadd.f32 %v129, %v413
    %v415 = vpop.f32.mrf.mxu0
    %v416 = vadd.f32 %v125, %v415
    %v417 = vpop.f32.mrf.mxu0
    %v418 = vadd.f32 %v129, %v417
    %419 = vmatprep.mubr.bf16.mxu0 0
    %420 = vmatmul.mubr.bf16.gmra.mxu0 %v110
    %v421 = vpop.f32.mrf.mxu0
    %v422 = vadd.f32 %v125, %v421
    %v423 = vpop.f32.mrf.mxu0
    %v424 = vadd.f32 %v129, %v423
    %v425 = vpop.f32.mrf.mxu0
    %v426 = vadd.f32 %v125, %v425
    %v427 = vpop.f32.mrf.mxu0
    %v428 = vadd.f32 %v129, %v427
    %429 = vmatprep.mubr.bf16.mxu0 0
    %430 = vmatmul.mubr.bf16.gmra.mxu0 %v111
    %v431 = vpop.f32.mrf.mxu0
    %v432 = vadd.f32 %v125, %v431
    %v433 = vpop.f32.mrf.mxu0
    %v434 = vadd.f32 %v129, %v433
    %v435 = vpop.f32.mrf.mxu0
    %v436 = vadd.f32 %v125, %v435
    %v437 = vpop.f32.mrf.mxu0
    %v438 = vadd.f32 %v129, %v437
    %439 = vdwg.mxu0
    %440 = vst [vmem:[#allocation3] sm:$0xff] %v329
    %441 = vst [vmem:[#allocation3 + $0x8] sm:$0xff] %v331
    %442 = vst [vmem:[#allocation3 + $0x10] sm:$0xff] %v402
    %443 = vst [vmem:[#allocation3 + $0x18] sm:$0xff] %v404
    %444 = vst [vmem:[#allocation3 + $0x20] sm:$0xff] %v333
    %445 = vst [vmem:[#allocation3 + $0x28] sm:$0xff] %v335
    %446 = vst [vmem:[#allocation3 + $0x30] sm:$0xff] %v406
    %447 = vst [vmem:[#allocation3 + $0x38] sm:$0xff] %v408
    %448 = vst [vmem:[#allocation3 + $0x40] sm:$0xff] %v339
    %449 = vst [vmem:[#allocation3 + $0x48] sm:$0xff] %v341
    %450 = vst [vmem:[#allocation3 + $0x50] sm:$0xff] %v412
    %451 = vst [vmem:[#allocation3 + $0x58] sm:$0xff] %v414
    %452 = vst [vmem:[#allocation3 + $0x60] sm:$0xff] %v343
    %453 = vst [vmem:[#allocation3 + $0x68] sm:$0xff] %v345
    %454 = vst [vmem:[#allocation3 + $0x70] sm:$0xff] %v416
    %455 = vst [vmem:[#allocation3 + $0x78] sm:$0xff] %v418
    %456 = vst [vmem:[#allocation3 + $0x80] sm:$0xff] %v349
    %457 = vst [vmem:[#allocation3 + $0x88] sm:$0xff] %v351
    %458 = vst [vmem:[#allocation3 + $0x90] sm:$0xff] %v422
    %459 = vst [vmem:[#allocation3 + $0x98] sm:$0xff] %v424
    %460 = vst [vmem:[#allocation3 + $0xa0] sm:$0xff] %v353
    %461 = vst [vmem:[#allocation3 + $0xa8] sm:$0xff] %v355
    %462 = vst [vmem:[#allocation3 + $0xb0] sm:$0xff] %v426
    %463 = vst [vmem:[#allocation3 + $0xb8] sm:$0xff] %v428
    %464 = vst [vmem:[#allocation3 + $0xc0] sm:$0xff] %v359
    %465 = vst [vmem:[#allocation3 + $0xc8] sm:$0xff] %v361
    %466 = vst [vmem:[#allocation3 + $0xd0] sm:$0xff] %v432
    %467 = vst [vmem:[#allocation3 + $0xd8] sm:$0xff] %v434
    %468 = vst [vmem:[#allocation3 + $0xe0] sm:$0xff] %v363
    %469 = vst [vmem:[#allocation3 + $0xe8] sm:$0xff] %v365
    %470 = vst [vmem:[#allocation3 + $0xf0] sm:$0xff] %v436
    %471 = vst [vmem:[#allocation3 + $0xf8] sm:$0xff] %v438
    %v472 = vld [vmem:[#allocation3] sm:$0xff]
    %v473 = vld [vmem:[#allocation3 + $0x8] sm:$0xff]
    %v474 = vld [vmem:[#allocation3 + $0x10] sm:$0xff]
    %v475 = vld [vmem:[#allocation3 + $0x18] sm:$0xff]
    %v476 = vld [vmem:[#allocation8] sm:$0xff]
    %v477 = vld [vmem:[#allocation8 + $0x8] sm:$0xff]
    %v478 = vld [vmem:[#allocation8 + $0x10] sm:$0xff]
    %v479 = vld [vmem:[#allocation8 + $0x18] sm:$0xff]
    %v480 = vld [vmem:[#allocation8 + $0x20] sm:$0xff]
    %v481 = vld [vmem:[#allocation8 + $0x28] sm:$0xff]
    %v482 = vld [vmem:[#allocation8 + $0x30] sm:$0xff]
    %v483 = vld [vmem:[#allocation8 + $0x38] sm:$0xff]
    %v484 = vld [vmem:[#allocation8 + $0x40] sm:$0xff]
    %v485 = vld [vmem:[#allocation8 + $0x48] sm:$0xff]
    %v486 = vld [vmem:[#allocation8 + $0x50] sm:$0xff]
    %v487 = vld [vmem:[#allocation8 + $0x58] sm:$0xff]
    %v488 = vld [vmem:[#allocation8 + $0x60] sm:$0xff]
    %v489 = vld [vmem:[#allocation8 + $0x68] sm:$0xff]
    %v490 = vld [vmem:[#allocation8 + $0x70] sm:$0xff]
    %v491 = vld [vmem:[#allocation8 + $0x78] sm:$0xff]
    %v492 = vld [vmem:[#allocation8 + $0x80] sm:$0xff]
    %v493 = vld [vmem:[#allocation8 + $0x88] sm:$0xff]
    %v494 = vld [vmem:[#allocation8 + $0x90] sm:$0xff]
    %v495 = vld [vmem:[#allocation8 + $0x98] sm:$0xff]
    %v496 = vld [vmem:[#allocation8 + $0xa0] sm:$0xff]
    %v497 = vld [vmem:[#allocation8 + $0xa8] sm:$0xff]
    %v498 = vld [vmem:[#allocation8 + $0xb0] sm:$0xff]
    %v499 = vld [vmem:[#allocation8 + $0xb8] sm:$0xff]
    %v500 = vld [vmem:[#allocation8 + $0xc0] sm:$0xff]
    %v501 = vld [vmem:[#allocation8 + $0xc8] sm:$0xff]
    %v502 = vld [vmem:[#allocation8 + $0xd0] sm:$0xff]
    %v503 = vld [vmem:[#allocation8 + $0xd8] sm:$0xff]
    %v504 = vld [vmem:[#allocation8 + $0xe0] sm:$0xff]
    %v505 = vld [vmem:[#allocation8 + $0xe8] sm:$0xff]
    %v506 = vld [vmem:[#allocation8 + $0xf0] sm:$0xff]
    %v507 = vld [vmem:[#allocation8 + $0xf8] sm:$0xff]
    %v540 = vunpack.c.l.b16 %v476
    %v541 = vunpack.c.h.b16 %v476
    %v542 = vunpack.c.l.b16 %v477
    %v543 = vunpack.c.h.b16 %v477
    %v544 = vunpack.c.l.b16 %v478
    %v545 = vunpack.c.h.b16 %v478
    %v546 = vunpack.c.l.b16 %v479
    %v547 = vunpack.c.h.b16 %v479
    %v548 = vunpack.c.l.b16 %v480
    %v549 = vunpack.c.h.b16 %v480
    %v550 = vunpack.c.l.b16 %v481
    %v551 = vunpack.c.h.b16 %v481
    %v552 = vunpack.c.l.b16 %v482
    %v553 = vunpack.c.h.b16 %v482
    %v554 = vunpack.c.l.b16 %v483
    %v555 = vunpack.c.h.b16 %v483
    %v556 = vunpack.c.l.b16 %v484
    %v557 = vunpack.c.h.b16 %v484
    %v558 = vunpack.c.l.b16 %v485
    %v559 = vunpack.c.h.b16 %v485
    %v560 = vunpack.c.l.b16 %v486
    %v561 = vunpack.c.h.b16 %v486
    %v562 = vunpack.c.l.b16 %v487
    %v563 = vunpack.c.h.b16 %v487
    %v564 = vunpack.c.l.b16 %v488
    %v565 = vunpack.c.h.b16 %v488
    %v566 = vunpack.c.l.b16 %v489
    %v567 = vunpack.c.h.b16 %v489
    %v568 = vunpack.c.l.b16 %v490
    %v569 = vunpack.c.h.b16 %v490
    %v570 = vunpack.c.l.b16 %v491
    %v571 = vunpack.c.h.b16 %v491
    %v572 = vunpack.c.l.b16 %v492
    %v573 = vunpack.c.h.b16 %v492
    %v574 = vunpack.c.l.b16 %v493
    %v575 = vunpack.c.h.b16 %v493
    %v576 = vunpack.c.l.b16 %v494
    %v577 = vunpack.c.h.b16 %v494
    %v578 = vunpack.c.l.b16 %v495
    %v579 = vunpack.c.h.b16 %v495
    %v580 = vunpack.c.l.b16 %v496
    %v581 = vunpack.c.h.b16 %v496
    %v582 = vunpack.c.l.b16 %v497
    %v583 = vunpack.c.h.b16 %v497
    %v584 = vunpack.c.l.b16 %v498
    %v585 = vunpack.c.h.b16 %v498
    %v586 = vunpack.c.l.b16 %v499
    %v587 = vunpack.c.h.b16 %v499
    %v588 = vunpack.c.l.b16 %v500
    %v589 = vunpack.c.h.b16 %v500
    %v590 = vunpack.c.l.b16 %v501
    %v591 = vunpack.c.h.b16 %v501
    %v592 = vunpack.c.l.b16 %v502
    %v593 = vunpack.c.h.b16 %v502
    %v594 = vunpack.c.l.b16 %v503
    %v595 = vunpack.c.h.b16 %v503
    %v596 = vunpack.c.l.b16 %v504
    %v597 = vunpack.c.h.b16 %v504
    %v598 = vunpack.c.l.b16 %v505
    %v599 = vunpack.c.h.b16 %v505
    %v600 = vunpack.c.l.b16 %v506
    %v601 = vunpack.c.h.b16 %v506
    %v602 = vunpack.c.l.b16 %v507
    %v603 = vunpack.c.h.b16 %v507
    %v604 = vpack.c.b16 %v544, %v540
    %v605 = vpack.c.b16 %v545, %v541
    %v606 = vpack.c.b16 %v546, %v542
    %v607 = vpack.c.b16 %v547, %v543
    %v608 = vpack.c.b16 %v552, %v548
    %v609 = vpack.c.b16 %v553, %v549
    %v610 = vpack.c.b16 %v554, %v550
    %v611 = vpack.c.b16 %v555, %v551
    %v612 = vpack.c.b16 %v560, %v556
    %v613 = vpack.c.b16 %v561, %v557
    %v614 = vpack.c.b16 %v562, %v558
    %v615 = vpack.c.b16 %v563, %v559
    %v616 = vpack.c.b16 %v568, %v564
    %v617 = vpack.c.b16 %v569, %v565
    %v618 = vpack.c.b16 %v570, %v566
    %v619 = vpack.c.b16 %v571, %v567
    %v620 = vpack.c.b16 %v576, %v572
    %v621 = vpack.c.b16 %v577, %v573
    %v622 = vpack.c.b16 %v578, %v574
    %v623 = vpack.c.b16 %v579, %v575
    %v624 = vpack.c.b16 %v584, %v580
    %v625 = vpack.c.b16 %v585, %v581
    %v626 = vpack.c.b16 %v586, %v582
    %v627 = vpack.c.b16 %v587, %v583
    %v628 = vpack.c.b16 %v592, %v588
    %v629 = vpack.c.b16 %v593, %v589
    %v630 = vpack.c.b16 %v594, %v590
    %v631 = vpack.c.b16 %v595, %v591
    %v632 = vpack.c.b16 %v600, %v596
    %v633 = vpack.c.b16 %v601, %v597
    %v634 = vpack.c.b16 %v602, %v598
    %v635 = vpack.c.b16 %v603, %v599
    %668 = vmatprep.subr.bf16.mxu0 %v633
    %669 = vmatpush1.bf16.msra.mxu0 %v632
    %670 = vmatprep.subr.bf16.mxu0 %v629
    %671 = vmatpush1.bf16.msra.mxu0 %v628
    %672 = vmatprep.subr.bf16.mxu0 %v625
    %673 = vmatpush1.bf16.msra.mxu0 %v624
    %674 = vmatprep.subr.bf16.mxu0 %v621
    %675 = vmatpush1.bf16.msra.mxu0 %v620
    %676 = vmatprep.subr.bf16.mxu0 %v617
    %677 = vmatpush1.bf16.msra.mxu0 %v616
    %678 = vmatprep.subr.bf16.mxu0 %v613
    %679 = vmatpush1.bf16.msra.mxu0 %v612
    %680 = vmatprep.subr.bf16.mxu0 %v609
    %681 = vmatpush1.bf16.msra.mxu0 %v608
    %682 = vmatprep.subr.bf16.mxu0 %v605
    %683 = vmatpush1.bf16.msra.mxu0 %v604
    %684 = vmatprep.subr.bf16.mxu0 0
    %685 = vmatpush2.bf16.msra.mxu0 0
    %686 = vmatprep.subr.bf16.mxu0 0
    %687 = vmatpush2.bf16.msra.mxu0 0
    %688 = vmatprep.subr.bf16.mxu0 0
    %689 = vmatpush2.bf16.msra.mxu0 0
    %690 = vmatprep.subr.bf16.mxu0 0
    %691 = vmatpush2.bf16.msra.mxu0 0
    %692 = vmatprep.subr.bf16.mxu0 0
    %693 = vmatpush2.bf16.msra.mxu0 0
    %694 = vmatprep.subr.bf16.mxu0 0
    %695 = vmatpush2.bf16.msra.mxu0 0
    %696 = vmatprep.subr.bf16.mxu0 0
    %697 = vmatpush2.bf16.msra.mxu0 0
    %698 = vmatprep.subr.bf16.mxu0 0
    %699 = vmatpush2.bf16.msra.mxu0 0
    %700 = vmatprep.mubr.bf16.mxu0 0
    %701 = vmatmul.mubr.bf16.gmra.mxu0 0
    %v702 = vpop.f32.mrf.mxu0
    %v703 = vadd.f32 0.0, %v702
    %v704 = vpop.f32.mrf.mxu0
    %v705 = vadd.f32 0.0, %v704
    %v706 = vpop.f32.mrf.mxu0
    %v707 = vpop.f32.mrf.mxu0
    %708 = vdwg.mxu0
    %709 = vmatprep.subr.bf16.mxu0 %v635
    %710 = vmatpush1.bf16.msra.mxu0 %v634
    %711 = vmatprep.subr.bf16.mxu0 %v631
    %712 = vmatpush1.bf16.msra.mxu0 %v630
    %713 = vmatprep.subr.bf16.mxu0 %v627
    %714 = vmatpush1.bf16.msra.mxu0 %v626
    %715 = vmatprep.subr.bf16.mxu0 %v623
    %716 = vmatpush1.bf16.msra.mxu0 %v622
    %717 = vmatprep.subr.bf16.mxu0 %v619
    %718 = vmatpush1.bf16.msra.mxu0 %v618
    %719 = vmatprep.subr.bf16.mxu0 %v615
    %720 = vmatpush1.bf16.msra.mxu0 %v614
    %721 = vmatprep.subr.bf16.mxu0 %v611
    %722 = vmatpush1.bf16.msra.mxu0 %v610
    %723 = vmatprep.subr.bf16.mxu0 %v607
    %724 = vmatpush1.bf16.msra.mxu0 %v606
    %725 = vmatprep.subr.bf16.mxu0 0
    %726 = vmatpush2.bf16.msra.mxu0 0
    %727 = vmatprep.subr.bf16.mxu0 0
    %728 = vmatpush2.bf16.msra.mxu0 0
    %729 = vmatprep.subr.bf16.mxu0 0
    %730 = vmatpush2.bf16.msra.mxu0 0
    %731 = vmatprep.subr.bf16.mxu0 0
    %732 = vmatpush2.bf16.msra.mxu0 0
    %733 = vmatprep.subr.bf16.mxu0 0
    %734 = vmatpush2.bf16.msra.mxu0 0
    %735 = vmatprep.subr.bf16.mxu0 0
    %736 = vmatpush2.bf16.msra.mxu0 0
    %737 = vmatprep.subr.bf16.mxu0 0
    %738 = vmatpush2.bf16.msra.mxu0 0
    %739 = vmatprep.subr.bf16.mxu0 0
    %740 = vmatpush2.bf16.msra.mxu0 0
    %741 = vmatprep.mubr.bf16.mxu0 0
    %742 = vmatmul.mubr.bf16.gmra.mxu0 0
    %v743 = vpop.f32.mrf.mxu0
    %v744 = vadd.f32 0.0, %v743
    %v745 = vpop.f32.mrf.mxu0
    %v746 = vadd.f32 0.0, %v745
    %v747 = vpop.f32.mrf.mxu0
    %v748 = vpop.f32.mrf.mxu0
    %749 = vdwg.mxu0
    %v750 = vadd.f32 %v472, %v703
    %v751 = vadd.f32 %v473, %v705
    %v752 = vadd.f32 %v474, %v744
    %v753 = vadd.f32 %v475, %v746
    %v754 = vxor.u32 %v750, 2147483648
    %v755 = vmul.f32 %v754, 1.442695
    %v756 = vpow.pop %v755
    %v757 = vadd.f32 %v756, 1.0
    %v758 = vrcp.pop %v757
    %v759 = vmul.f32 1.0, %v758
    %v760 = vxor.u32 %v751, 2147483648
    %v761 = vmul.f32 %v760, 1.442695
    %v762 = vpow.pop %v761
    %v763 = vadd.f32 %v762, 1.0
    %v764 = vrcp.pop %v763
    %v765 = vmul.f32 1.0, %v764
    %v766 = vtanh.pop %v752
    %v767 = vxor.u32 %v753, 2147483648
    %v768 = vmul.f32 %v767, 1.442695
    %v769 = vpow.pop %v768
    %v770 = vadd.f32 %v769, 1.0
    %v771 = vrcp.pop %v770
    %v772 = vmul.f32 1.0, %v771
    %v773 = vmul.f32 %v765, 0.0
    %v774 = vmul.f32 %v759, %v766
    %v775 = vadd.f32 %v773, %v774
    %v776 = vtanh.pop %v775
    %v777 = vmul.f32 %v772, %v776
    %778 = vst [vmem:[#allocation2] sm:$0xff] %v777
    %v779 = vld [vmem:[#allocation3 + $0x20] sm:$0xff]
    %v780 = vld [vmem:[#allocation3 + $0x28] sm:$0xff]
    %v781 = vld [vmem:[#allocation3 + $0x30] sm:$0xff]
    %v782 = vld [vmem:[#allocation3 + $0x38] sm:$0xff]
    %v783 = vpack.c.bf16 %v777, %v777
    %v784 = vld [vmem:[#allocation8] sm:$0xff]
    %v785 = vld [vmem:[#allocation8 + $0x8] sm:$0xff]
    %v786 = vld [vmem:[#allocation8 + $0x10] sm:$0xff]
    %v787 = vld [vmem:[#allocation8 + $0x18] sm:$0xff]
    %v788 = vld [vmem:[#allocation8 + $0x20] sm:$0xff]
    %v789 = vld [vmem:[#allocation8 + $0x28] sm:$0xff]
    %v790 = vld [vmem:[#allocation8 + $0x30] sm:$0xff]
    %v791 = vld [vmem:[#allocation8 + $0x38] sm:$0xff]
    %v792 = vld [vmem:[#allocation8 + $0x40] sm:$0xff]
    %v793 = vld [vmem:[#allocation8 + $0x48] sm:$0xff]
    %v794 = vld [vmem:[#allocation8 + $0x50] sm:$0xff]
    %v795 = vld [vmem:[#allocation8 + $0x58] sm:$0xff]
    %v796 = vld [vmem:[#allocation8 + $0x60] sm:$0xff]
    %v797 = vld [vmem:[#allocation8 + $0x68] sm:$0xff]
    %v798 = vld [vmem:[#allocation8 + $0x70] sm:$0xff]
    %v799 = vld [vmem:[#allocation8 + $0x78] sm:$0xff]
    %v800 = vld [vmem:[#allocation8 + $0x80] sm:$0xff]
    %v801 = vld [vmem:[#allocation8 + $0x88] sm:$0xff]
    %v802 = vld [vmem:[#allocation8 + $0x90] sm:$0xff]
    %v803 = vld [vmem:[#allocation8 + $0x98] sm:$0xff]
    %v804 = vld [vmem:[#allocation8 + $0xa0] sm:$0xff]
    %v805 = vld [vmem:[#allocation8 + $0xa8] sm:$0xff]
    %v806 = vld [vmem:[#allocation8 + $0xb0] sm:$0xff]
    %v807 = vld [vmem:[#allocation8 + $0xb8] sm:$0xff]
    %v808 = vld [vmem:[#allocation8 + $0xc0] sm:$0xff]
    %v809 = vld [vmem:[#allocation8 + $0xc8] sm:$0xff]
    %v810 = vld [vmem:[#allocation8 + $0xd0] sm:$0xff]
    %v811 = vld [vmem:[#allocation8 + $0xd8] sm:$0xff]
    %v812 = vld [vmem:[#allocation8 + $0xe0] sm:$0xff]
    %v813 = vld [vmem:[#allocation8 + $0xe8] sm:$0xff]
    %v814 = vld [vmem:[#allocation8 + $0xf0] sm:$0xff]
    %v815 = vld [vmem:[#allocation8 + $0xf8] sm:$0xff]
    %v848 = vunpack.c.l.b16 %v784
    %v849 = vunpack.c.h.b16 %v784
    %v850 = vunpack.c.l.b16 %v785
    %v851 = vunpack.c.h.b16 %v785
    %v852 = vunpack.c.l.b16 %v786
    %v853 = vunpack.c.h.b16 %v786
    %v854 = vunpack.c.l.b16 %v787
    %v855 = vunpack.c.h.b16 %v787
    %v856 = vunpack.c.l.b16 %v788
    %v857 = vunpack.c.h.b16 %v788
    %v858 = vunpack.c.l.b16 %v789
    %v859 = vunpack.c.h.b16 %v789
    %v860 = vunpack.c.l.b16 %v790
    %v861 = vunpack.c.h.b16 %v790
    %v862 = vunpack.c.l.b16 %v791
    %v863 = vunpack.c.h.b16 %v791
    %v864 = vunpack.c.l.b16 %v792
    %v865 = vunpack.c.h.b16 %v792
    %v866 = vunpack.c.l.b16 %v793
    %v867 = vunpack.c.h.b16 %v793
    %v868 = vunpack.c.l.b16 %v794
    %v869 = vunpack.c.h.b16 %v794
    %v870 = vunpack.c.l.b16 %v795
    %v871 = vunpack.c.h.b16 %v795
    %v872 = vunpack.c.l.b16 %v796
    %v873 = vunpack.c.h.b16 %v796
    %v874 = vunpack.c.l.b16 %v797
    %v875 = vunpack.c.h.b16 %v797
    %v876 = vunpack.c.l.b16 %v798
    %v877 = vunpack.c.h.b16 %v798
    %v878 = vunpack.c.l.b16 %v799
    %v879 = vunpack.c.h.b16 %v799
    %v880 = vunpack.c.l.b16 %v800
    %v881 = vunpack.c.h.b16 %v800
    %v882 = vunpack.c.l.b16 %v801
    %v883 = vunpack.c.h.b16 %v801
    %v884 = vunpack.c.l.b16 %v802
    %v885 = vunpack.c.h.b16 %v802
    %v886 = vunpack.c.l.b16 %v803
    %v887 = vunpack.c.h.b16 %v803
    %v888 = vunpack.c.l.b16 %v804
    %v889 = vunpack.c.h.b16 %v804
    %v890 = vunpack.c.l.b16 %v805
    %v891 = vunpack.c.h.b16 %v805
    %v892 = vunpack.c.l.b16 %v806
    %v893 = vunpack.c.h.b16 %v806
    %v894 = vunpack.c.l.b16 %v807
    %v895 = vunpack.c.h.b16 %v807
    %v896 = vunpack.c.l.b16 %v808
    %v897 = vunpack.c.h.b16 %v808
    %v898 = vunpack.c.l.b16 %v809
    %v899 = vunpack.c.h.b16 %v809
    %v900 = vunpack.c.l.b16 %v810
    %v901 = vunpack.c.h.b16 %v810
    %v902 = vunpack.c.l.b16 %v811
    %v903 = vunpack.c.h.b16 %v811
    %v904 = vunpack.c.l.b16 %v812
    %v905 = vunpack.c.h.b16 %v812
    %v906 = vunpack.c.l.b16 %v813
    %v907 = vunpack.c.h.b16 %v813
    %v908 = vunpack.c.l.b16 %v814
    %v909 = vunpack.c.h.b16 %v814
    %v910 = vunpack.c.l.b16 %v815
    %v911 = vunpack.c.h.b16 %v815
    %v912 = vpack.c.b16 %v852, %v848
    %v913 = vpack.c.b16 %v853, %v849
    %v914 = vpack.c.b16 %v854, %v850
    %v915 = vpack.c.b16 %v855, %v851
    %v916 = vpack.c.b16 %v860, %v856
    %v917 = vpack.c.b16 %v861, %v857
    %v918 = vpack.c.b16 %v862, %v858
    %v919 = vpack.c.b16 %v863, %v859
    %v920 = vpack.c.b16 %v868, %v864
    %v921 = vpack.c.b16 %v869, %v865
    %v922 = vpack.c.b16 %v870, %v866
    %v923 = vpack.c.b16 %v871, %v867
    %v924 = vpack.c.b16 %v876, %v872
    %v925 = vpack.c.b16 %v877, %v873
    %v926 = vpack.c.b16 %v878, %v874
    %v927 = vpack.c.b16 %v879, %v875
    %v928 = vpack.c.b16 %v884, %v880
    %v929 = vpack.c.b16 %v885, %v881
    %v930 = vpack.c.b16 %v886, %v882
    %v931 = vpack.c.b16 %v887, %v883
    %v932 = vpack.c.b16 %v892, %v888
    %v933 = vpack.c.b16 %v893, %v889
    %v934 = vpack.c.b16 %v894, %v890
    %v935 = vpack.c.b16 %v895, %v891
    %v936 = vpack.c.b16 %v900, %v896
    %v937 = vpack.c.b16 %v901, %v897
    %v938 = vpack.c.b16 %v902, %v898
    %v939 = vpack.c.b16 %v903, %v899
    %v940 = vpack.c.b16 %v908, %v904
    %v941 = vpack.c.b16 %v909, %v905
    %v942 = vpack.c.b16 %v910, %v906
    %v943 = vpack.c.b16 %v911, %v907
    %976 = vmatprep.subr.bf16.mxu0 %v941
    %977 = vmatpush1.bf16.msra.mxu0 %v940
    %978 = vmatprep.subr.bf16.mxu0 %v937
    %979 = vmatpush1.bf16.msra.mxu0 %v936
    %980 = vmatprep.subr.bf16.mxu0 %v933
    %981 = vmatpush1.bf16.msra.mxu0 %v932
    %982 = vmatprep.subr.bf16.mxu0 %v929
    %983 = vmatpush1.bf16.msra.mxu0 %v928
    %984 = vmatprep.subr.bf16.mxu0 %v925
    %985 = vmatpush1.bf16.msra.mxu0 %v924
    %986 = vmatprep.subr.bf16.mxu0 %v921
    %987 = vmatpush1.bf16.msra.mxu0 %v920
    %988 = vmatprep.subr.bf16.mxu0 %v917
    %989 = vmatpush1.bf16.msra.mxu0 %v916
    %990 = vmatprep.subr.bf16.mxu0 %v913
    %991 = vmatpush1.bf16.msra.mxu0 %v912
    %992 = vmatprep.subr.bf16.mxu0 0
    %993 = vmatpush2.bf16.msra.mxu0 0
    %994 = vmatprep.subr.bf16.mxu0 0
    %995 = vmatpush2.bf16.msra.mxu0 0
    %996 = vmatprep.subr.bf16.mxu0 0
    %997 = vmatpush2.bf16.msra.mxu0 0
    %998 = vmatprep.subr.bf16.mxu0 0
    %999 = vmatpush2.bf16.msra.mxu0 0
    %1000 = vmatprep.subr.bf16.mxu0 0
    %1001 = vmatpush2.bf16.msra.mxu0 0
    %1002 = vmatprep.subr.bf16.mxu0 0
    %1003 = vmatpush2.bf16.msra.mxu0 0
    %1004 = vmatprep.subr.bf16.mxu0 0
    %1005 = vmatpush2.bf16.msra.mxu0 0
    %1006 = vmatprep.subr.bf16.mxu0 0
    %1007 = vmatpush2.bf16.msra.mxu0 0
    %1008 = vmatprep.mubr.bf16.mxu0 0
    %1009 = vmatmul.mubr.bf16.gmra.mxu0 %v783
    %v1010 = vpop.f32.mrf.mxu0
    %v1011 = vadd.f32 0.0, %v1010
    %v1012 = vpop.f32.mrf.mxu0
    %v1013 = vadd.f32 0.0, %v1012
    %v1014 = vpop.f32.mrf.mxu0
    %v1015 = vpop.f32.mrf.mxu0
    %1016 = vdwg.mxu0
    %1017 = vmatprep.subr.bf16.mxu0 %v943
    %1018 = vmatpush1.bf16.msra.mxu0 %v942
    %1019 = vmatprep.subr.bf16.mxu0 %v939
    %1020 = vmatpush1.bf16.msra.mxu0 %v938
    %1021 = vmatprep.subr.bf16.mxu0 %v935
    %1022 = vmatpush1.bf16.msra.mxu0 %v934
    %1023 = vmatprep.subr.bf16.mxu0 %v931
    %1024 = vmatpush1.bf16.msra.mxu0 %v930
    %1025 = vmatprep.subr.bf16.mxu0 %v927
    %1026 = vmatpush1.bf16.msra.mxu0 %v926
    %1027 = vmatprep.subr.bf16.mxu0 %v923
    %1028 = vmatpush1.bf16.msra.mxu0 %v922
    %1029 = vmatprep.subr.bf16.mxu0 %v919
    %1030 = vmatpush1.bf16.msra.mxu0 %v918
    %1031 = vmatprep.subr.bf16.mxu0 %v915
    %1032 = vmatpush1.bf16.msra.mxu0 %v914
    %1033 = vmatprep.subr.bf16.mxu0 0
    %1034 = vmatpush2.bf16.msra.mxu0 0
    %1035 = vmatprep.subr.bf16.mxu0 0
    %1036 = vmatpush2.bf16.msra.mxu0 0
    %1037 = vmatprep.subr.bf16.mxu0 0
    %1038 = vmatpush2.bf16.msra.mxu0 0
    %1039 = vmatprep.subr.bf16.mxu0 0
    %1040 = vmatpush2.bf16.msra.mxu0 0
    %1041 = vmatprep.subr.bf16.mxu0 0
    %1042 = vmatpush2.bf16.msra.mxu0 0
    %1043 = vmatprep.subr.bf16.mxu0 0
    %1044 = vmatpush2.bf16.msra.mxu0 0
    %1045 = vmatprep.subr.bf16.mxu0 0
    %1046 = vmatpush2.bf16.msra.mxu0 0
    %1047 = vmatprep.subr.bf16.mxu0 0
    %1048 = vmatpush2.bf16.msra.mxu0 0
    %1049 = vmatprep.mubr.bf16.mxu0 0
    %1050 = vmatmul.mubr.bf16.gmra.mxu0 %v783
    %v1051 = vpop.f32.mrf.mxu0
    %v1052 = vadd.f32 0.0, %v1051
    %v1053 = vpop.f32.mrf.mxu0
    %v1054 = vadd.f32 0.0, %v1053
    %v1055 = vpop.f32.mrf.mxu0
    %v1056 = vpop.f32.mrf.mxu0
    %1057 = vdwg.mxu0
    %v1058 = vadd.f32 %v779, %v1011
    %v1059 = vadd.f32 %v780, %v1013
    %v1060 = vadd.f32 %v781, %v1052
    %v1061 = vadd.f32 %v782, %v1054
    %v1062 = vxor.u32 %v1058, 2147483648
    %v1063 = vmul.f32 %v1062, 1.442695
    %v1064 = vpow.pop %v1063
    %v1065 = vadd.f32 %v1064, 1.0
    %v1066 = vrcp.pop %v1065
    %v1067 = vmul.f32 1.0, %v1066
    %v1068 = vxor.u32 %v1059, 2147483648
    %v1069 = vmul.f32 %v1068, 1.442695
    %v1070 = vpow.pop %v1069
    %v1071 = vadd.f32 %v1070, 1.0
    %v1072 = vrcp.pop %v1071
    %v1073 = vmul.f32 1.0, %v1072
    %v1074 = vtanh.pop %v1060
    %v1075 = vxor.u32 %v1061, 2147483648
    %v1076 = vmul.f32 %v1075, 1.442695
    %v1077 = vpow.pop %v1076
    %v1078 = vadd.f32 %v1077, 1.0
    %v1079 = vrcp.pop %v1078
    %v1080 = vmul.f32 1.0, %v1079
    %v1081 = vmul.f32 %v1073, %v775
    %v1082 = vmul.f32 %v1067, %v1074
    %v1083 = vadd.f32 %v1081, %v1082
    %v1084 = vtanh.pop %v1083
    %v1085 = vmul.f32 %v1080, %v1084
    %1086 = vst [vmem:[#allocation2 + $0x8] sm:$0xff] %v1085
    %v1087 = vld [vmem:[#allocation3 + $0x40] sm:$0xff]
    %v1088 = vld [vmem:[#allocation3 + $0x48] sm:$0xff]
    %v1089 = vld [vmem:[#allocation3 + $0x50] sm:$0xff]
    %v1090 = vld [vmem:[#allocation3 + $0x58] sm:$0xff]
    %v1091 = vpack.c.bf16 %v1085, %v1085
    %v1092 = vld [vmem:[#allocation8] sm:$0xff]
    %v1093 = vld [vmem:[#allocation8 + $0x8] sm:$0xff]
    %v1094 = vld [vmem:[#allocation8 + $0x10] sm:$0xff]
    %v1095 = vld [vmem:[#allocation8 + $0x18] sm:$0xff]
    %v1096 = vld [vmem:[#allocation8 + $0x20] sm:$0xff]
    %v1097 = vld [vmem:[#allocation8 + $0x28] sm:$0xff]
    %v1098 = vld [vmem:[#allocation8 + $0x30] sm:$0xff]
    %v1099 = vld [vmem:[#allocation8 + $0x38] sm:$0xff]
    %v1100 = vld [vmem:[#allocation8 + $0x40] sm:$0xff]
    %v1101 = vld [vmem:[#allocation8 + $0x48] sm:$0xff]
    %v1102 = vld [vmem:[#allocation8 + $0x50] sm:$0xff]
    %v1103 = vld [vmem:[#allocation8 + $0x58] sm:$0xff]
    %v1104 = vld [vmem:[#allocation8 + $0x60] sm:$0xff]
    %v1105 = vld [vmem:[#allocation8 + $0x68] sm:$0xff]
    %v1106 = vld [vmem:[#allocation8 + $0x70] sm:$0xff]
    %v1107 = vld [vmem:[#allocation8 + $0x78] sm:$0xff]
    %v1108 = vld [vmem:[#allocation8 + $0x80] sm:$0xff]
    %v1109 = vld [vmem:[#allocation8 + $0x88] sm:$0xff]
    %v1110 = vld [vmem:[#allocation8 + $0x90] sm:$0xff]
    %v1111 = vld [vmem:[#allocation8 + $0x98] sm:$0xff]
    %v1112 = vld [vmem:[#allocation8 + $0xa0] sm:$0xff]
    %v1113 = vld [vmem:[#allocation8 + $0xa8] sm:$0xff]
    %v1114 = vld [vmem:[#allocation8 + $0xb0] sm:$0xff]
    %v1115 = vld [vmem:[#allocation8 + $0xb8] sm:$0xff]
    %v1116 = vld [vmem:[#allocation8 + $0xc0] sm:$0xff]
    %v1117 = vld [vmem:[#allocation8 + $0xc8] sm:$0xff]
    %v1118 = vld [vmem:[#allocation8 + $0xd0] sm:$0xff]
    %v1119 = vld [vmem:[#allocation8 + $0xd8] sm:$0xff]
    %v1120 = vld [vmem:[#allocation8 + $0xe0] sm:$0xff]
    %v1121 = vld [vmem:[#allocation8 + $0xe8] sm:$0xff]
    %v1122 = vld [vmem:[#allocation8 + $0xf0] sm:$0xff]
    %v1123 = vld [vmem:[#allocation8 + $0xf8] sm:$0xff]
    %v1156 = vunpack.c.l.b16 %v1092
    %v1157 = vunpack.c.h.b16 %v1092
    %v1158 = vunpack.c.l.b16 %v1093
    %v1159 = vunpack.c.h.b16 %v1093
    %v1160 = vunpack.c.l.b16 %v1094
    %v1161 = vunpack.c.h.b16 %v1094
    %v1162 = vunpack.c.l.b16 %v1095
    %v1163 = vunpack.c.h.b16 %v1095
    %v1164 = vunpack.c.l.b16 %v1096
    %v1165 = vunpack.c.h.b16 %v1096
    %v1166 = vunpack.c.l.b16 %v1097
    %v1167 = vunpack.c.h.b16 %v1097
    %v1168 = vunpack.c.l.b16 %v1098
    %v1169 = vunpack.c.h.b16 %v1098
    %v1170 = vunpack.c.l.b16 %v1099
    %v1171 = vunpack.c.h.b16 %v1099
    %v1172 = vunpack.c.l.b16 %v1100
    %v1173 = vunpack.c.h.b16 %v1100
    %v1174 = vunpack.c.l.b16 %v1101
    %v1175 = vunpack.c.h.b16 %v1101
    %v1176 = vunpack.c.l.b16 %v1102
    %v1177 = vunpack.c.h.b16 %v1102
    %v1178 = vunpack.c.l.b16 %v1103
    %v1179 = vunpack.c.h.b16 %v1103
    %v1180 = vunpack.c.l.b16 %v1104
    %v1181 = vunpack.c.h.b16 %v1104
    %v1182 = vunpack.c.l.b16 %v1105
    %v1183 = vunpack.c.h.b16 %v1105
    %v1184 = vunpack.c.l.b16 %v1106
    %v1185 = vunpack.c.h.b16 %v1106
    %v1186 = vunpack.c.l.b16 %v1107
    %v1187 = vunpack.c.h.b16 %v1107
    %v1188 = vunpack.c.l.b16 %v1108
    %v1189 = vunpack.c.h.b16 %v1108
    %v1190 = vunpack.c.l.b16 %v1109
    %v1191 = vunpack.c.h.b16 %v1109
    %v1192 = vunpack.c.l.b16 %v1110
    %v1193 = vunpack.c.h.b16 %v1110
    %v1194 = vunpack.c.l.b16 %v1111
    %v1195 = vunpack.c.h.b16 %v1111
    %v1196 = vunpack.c.l.b16 %v1112
    %v1197 = vunpack.c.h.b16 %v1112
    %v1198 = vunpack.c.l.b16 %v1113
    %v1199 = vunpack.c.h.b16 %v1113
    %v1200 = vunpack.c.l.b16 %v1114
    %v1201 = vunpack.c.h.b16 %v1114
    %v1202 = vunpack.c.l.b16 %v1115
    %v1203 = vunpack.c.h.b16 %v1115
    %v1204 = vunpack.c.l.b16 %v1116
    %v1205 = vunpack.c.h.b16 %v1116
    %v1206 = vunpack.c.l.b16 %v1117
    %v1207 = vunpack.c.h.b16 %v1117
    %v1208 = vunpack.c.l.b16 %v1118
    %v1209 = vunpack.c.h.b16 %v1118
    %v1210 = vunpack.c.l.b16 %v1119
    %v1211 = vunpack.c.h.b16 %v1119
    %v1212 = vunpack.c.l.b16 %v1120
    %v1213 = vunpack.c.h.b16 %v1120
    %v1214 = vunpack.c.l.b16 %v1121
    %v1215 = vunpack.c.h.b16 %v1121
    %v1216 = vunpack.c.l.b16 %v1122
    %v1217 = vunpack.c.h.b16 %v1122
    %v1218 = vunpack.c.l.b16 %v1123
    %v1219 = vunpack.c.h.b16 %v1123
    %v1220 = vpack.c.b16 %v1160, %v1156
    %v1221 = vpack.c.b16 %v1161, %v1157
    %v1222 = vpack.c.b16 %v1162, %v1158
    %v1223 = vpack.c.b16 %v1163, %v1159
    %v1224 = vpack.c.b16 %v1168, %v1164
    %v1225 = vpack.c.b16 %v1169, %v1165
    %v1226 = vpack.c.b16 %v1170, %v1166
    %v1227 = vpack.c.b16 %v1171, %v1167
    %v1228 = vpack.c.b16 %v1176, %v1172
    %v1229 = vpack.c.b16 %v1177, %v1173
    %v1230 = vpack.c.b16 %v1178, %v1174
    %v1231 = vpack.c.b16 %v1179, %v1175
    %v1232 = vpack.c.b16 %v1184, %v1180
    %v1233 = vpack.c.b16 %v1185, %v1181
    %v1234 = vpack.c.b16 %v1186, %v1182
    %v1235 = vpack.c.b16 %v1187, %v1183
    %v1236 = vpack.c.b16 %v1192, %v1188
    %v1237 = vpack.c.b16 %v1193, %v1189
    %v1238 = vpack.c.b16 %v1194, %v1190
    %v1239 = vpack.c.b16 %v1195, %v1191
    %v1240 = vpack.c.b16 %v1200, %v1196
    %v1241 = vpack.c.b16 %v1201, %v1197
    %v1242 = vpack.c.b16 %v1202, %v1198
    %v1243 = vpack.c.b16 %v1203, %v1199
    %v1244 = vpack.c.b16 %v1208, %v1204
    %v1245 = vpack.c.b16 %v1209, %v1205
    %v1246 = vpack.c.b16 %v1210, %v1206
    %v1247 = vpack.c.b16 %v1211, %v1207
    %v1248 = vpack.c.b16 %v1216, %v1212
    %v1249 = vpack.c.b16 %v1217, %v1213
    %v1250 = vpack.c.b16 %v1218, %v1214
    %v1251 = vpack.c.b16 %v1219, %v1215
    %1284 = vmatprep.subr.bf16.mxu0 %v1249
    %1285 = vmatpush1.bf16.msra.mxu0 %v1248
    %1286 = vmatprep.subr.bf16.mxu0 %v1245
    %1287 = vmatpush1.bf16.msra.mxu0 %v1244
    %1288 = vmatprep.subr.bf16.mxu0 %v1241
    %1289 = vmatpush1.bf16.msra.mxu0 %v1240
    %1290 = vmatprep.subr.bf16.mxu0 %v1237
    %1291 = vmatpush1.bf16.msra.mxu0 %v1236
    %1292 = vmatprep.subr.bf16.mxu0 %v1233
    %1293 = vmatpush1.bf16.msra.mxu0 %v1232
    %1294 = vmatprep.subr.bf16.mxu0 %v1229
    %1295 = vmatpush1.bf16.msra.mxu0 %v1228
    %1296 = vmatprep.subr.bf16.mxu0 %v1225
    %1297 = vmatpush1.bf16.msra.mxu0 %v1224
    %1298 = vmatprep.subr.bf16.mxu0 %v1221
    %1299 = vmatpush1.bf16.msra.mxu0 %v1220
    %1300 = vmatprep.subr.bf16.mxu0 0
    %1301 = vmatpush2.bf16.msra.mxu0 0
    %1302 = vmatprep.subr.bf16.mxu0 0
    %1303 = vmatpush2.bf16.msra.mxu0 0
    %1304 = vmatprep.subr.bf16.mxu0 0
    %1305 = vmatpush2.bf16.msra.mxu0 0
    %1306 = vmatprep.subr.bf16.mxu0 0
    %1307 = vmatpush2.bf16.msra.mxu0 0
    %1308 = vmatprep.subr.bf16.mxu0 0
    %1309 = vmatpush2.bf16.msra.mxu0 0
    %1310 = vmatprep.subr.bf16.mxu0 0
    %1311 = vmatpush2.bf16.msra.mxu0 0
    %1312 = vmatprep.subr.bf16.mxu0 0
    %1313 = vmatpush2.bf16.msra.mxu0 0
    %1314 = vmatprep.subr.bf16.mxu0 0
    %1315 = vmatpush2.bf16.msra.mxu0 0
    %1316 = vmatprep.mubr.bf16.mxu0 0
    %1317 = vmatmul.mubr.bf16.gmra.mxu0 %v1091
    %v1318 = vpop.f32.mrf.mxu0
    %v1319 = vadd.f32 0.0, %v1318
    %v1320 = vpop.f32.mrf.mxu0
    %v1321 = vadd.f32 0.0, %v1320
    %v1322 = vpop.f32.mrf.mxu0
    %v1323 = vpop.f32.mrf.mxu0
    %1324 = vdwg.mxu0
    %1325 = vmatprep.subr.bf16.mxu0 %v1251
    %1326 = vmatpush1.bf16.msra.mxu0 %v1250
    %1327 = vmatprep.subr.bf16.mxu0 %v1247
    %1328 = vmatpush1.bf16.msra.mxu0 %v1246
    %1329 = vmatprep.subr.bf16.mxu0 %v1243
    %1330 = vmatpush1.bf16.msra.mxu0 %v1242
    %1331 = vmatprep.subr.bf16.mxu0 %v1239
    %1332 = vmatpush1.bf16.msra.mxu0 %v1238
    %1333 = vmatprep.subr.bf16.mxu0 %v1235
    %1334 = vmatpush1.bf16.msra.mxu0 %v1234
    %1335 = vmatprep.subr.bf16.mxu0 %v1231
    %1336 = vmatpush1.bf16.msra.mxu0 %v1230
    %1337 = vmatprep.subr.bf16.mxu0 %v1227
    %1338 = vmatpush1.bf16.msra.mxu0 %v1226
    %1339 = vmatprep.subr.bf16.mxu0 %v1223
    %1340 = vmatpush1.bf16.msra.mxu0 %v1222
    %1341 = vmatprep.subr.bf16.mxu0 0
    %1342 = vmatpush2.bf16.msra.mxu0 0
    %1343 = vmatprep.subr.bf16.mxu0 0
    %1344 = vmatpush2.bf16.msra.mxu0 0
    %1345 = vmatprep.subr.bf16.mxu0 0
    %1346 = vmatpush2.bf16.msra.mxu0 0
    %1347 = vmatprep.subr.bf16.mxu0 0
    %1348 = vmatpush2.bf16.msra.mxu0 0
    %1349 = vmatprep.subr.bf16.mxu0 0
    %1350 = vmatpush2.bf16.msra.mxu0 0
    %1351 = vmatprep.subr.bf16.mxu0 0
    %1352 = vmatpush2.bf16.msra.mxu0 0
    %1353 = vmatprep.subr.bf16.mxu0 0
    %1354 = vmatpush2.bf16.msra.mxu0 0
    %1355 = vmatprep.subr.bf16.mxu0 0
    %1356 = vmatpush2.bf16.msra.mxu0 0
    %1357 = vmatprep.mubr.bf16.mxu0 0
    %1358 = vmatmul.mubr.bf16.gmra.mxu0 %v1091
    %v1359 = vpop.f32.mrf.mxu0
    %v1360 = vadd.f32 0.0, %v1359
    %v1361 = vpop.f32.mrf.mxu0
    %v1362 = vadd.f32 0.0, %v1361
    %v1363 = vpop.f32.mrf.mxu0
    %v1364 = vpop.f32.mrf.mxu0
    %1365 = vdwg.mxu0
    %v1366 = vadd.f32 %v1087, %v1319
    %v1367 = vadd.f32 %v1088, %v1321
    %v1368 = vadd.f32 %v1089, %v1360
    %v1369 = vadd.f32 %v1090, %v1362
    %v1370 = vxor.u32 %v1366, 2147483648
    %v1371 = vmul.f32 %v1370, 1.442695
    %v1372 = vpow.pop %v1371
    %v1373 = vadd.f32 %v1372, 1.0
    %v1374 = vrcp.pop %v1373
    %v1375 = vmul.f32 1.0, %v1374
    %v1376 = vxor.u32 %v1367, 2147483648
    %v1377 = vmul.f32 %v1376, 1.442695
    %v1378 = vpow.pop %v1377
    %v1379 = vadd.f32 %v1378, 1.0
    %v1380 = vrcp.pop %v1379
    %v1381 = vmul.f32 1.0, %v1380
    %v1382 = vtanh.pop %v1368
    %v1383 = vxor.u32 %v1369, 2147483648
    %v1384 = vmul.f32 %v1383, 1.442695
    %v1385 = vpow.pop %v1384
    %v1386 = vadd.f32 %v1385, 1.0
    %v1387 = vrcp.pop %v1386
    %v1388 = vmul.f32 1.0, %v1387
    %v1389 = vmul.f32 %v1381, %v1083
    %v1390 = vmul.f32 %v1375, %v1382
    %v1391 = vadd.f32 %v1389, %v1390
    %v1392 = vtanh.pop %v1391
    %v1393 = vmul.f32 %v1388, %v1392
    %1394 = vst [vmem:[#allocation2 + $0x10] sm:$0xff] %v1393
    %v1395 = vld [vmem:[#allocation3 + $0x60] sm:$0xff]
    %v1396 = vld [vmem:[#allocation3 + $0x68] sm:$0xff]
    %v1397 = vld [vmem:[#allocation3 + $0x70] sm:$0xff]
    %v1398 = vld [vmem:[#allocation3 + $0x78] sm:$0xff]
    %v1399 = vpack.c.bf16 %v1393, %v1393
    %v1400 = vld [vmem:[#allocation8] sm:$0xff]
    %v1401 = vld [vmem:[#allocation8 + $0x8] sm:$0xff]
    %v1402 = vld [vmem:[#allocation8 + $0x10] sm:$0xff]
    %v1403 = vld [vmem:[#allocation8 + $0x18] sm:$0xff]
    %v1404 = vld [vmem:[#allocation8 + $0x20] sm:$0xff]
    %v1405 = vld [vmem:[#allocation8 + $0x28] sm:$0xff]
    %v1406 = vld [vmem:[#allocation8 + $0x30] sm:$0xff]
    %v1407 = vld [vmem:[#allocation8 + $0x38] sm:$0xff]
    %v1408 = vld [vmem:[#allocation8 + $0x40] sm:$0xff]
    %v1409 = vld [vmem:[#allocation8 + $0x48] sm:$0xff]
    %v1410 = vld [vmem:[#allocation8 + $0x50] sm:$0xff]
    %v1411 = vld [vmem:[#allocation8 + $0x58] sm:$0xff]
    %v1412 = vld [vmem:[#allocation8 + $0x60] sm:$0xff]
    %v1413 = vld [vmem:[#allocation8 + $0x68] sm:$0xff]
    %v1414 = vld [vmem:[#allocation8 + $0x70] sm:$0xff]
    %v1415 = vld [vmem:[#allocation8 + $0x78] sm:$0xff]
    %v1416 = vld [vmem:[#allocation8 + $0x80] sm:$0xff]
    %v1417 = vld [vmem:[#allocation8 + $0x88] sm:$0xff]
    %v1418 = vld [vmem:[#allocation8 + $0x90] sm:$0xff]
    %v1419 = vld [vmem:[#allocation8 + $0x98] sm:$0xff]
    %v1420 = vld [vmem:[#allocation8 + $0xa0] sm:$0xff]
    %v1421 = vld [vmem:[#allocation8 + $0xa8] sm:$0xff]
    %v1422 = vld [vmem:[#allocation8 + $0xb0] sm:$0xff]
    %v1423 = vld [vmem:[#allocation8 + $0xb8] sm:$0xff]
    %v1424 = vld [vmem:[#allocation8 + $0xc0] sm:$0xff]
    %v1425 = vld [vmem:[#allocation8 + $0xc8] sm:$0xff]
    %v1426 = vld [vmem:[#allocation8 + $0xd0] sm:$0xff]
    %v1427 = vld [vmem:[#allocation8 + $0xd8] sm:$0xff]
    %v1428 = vld [vmem:[#allocation8 + $0xe0] sm:$0xff]
    %v1429 = vld [vmem:[#allocation8 + $0xe8] sm:$0xff]
    %v1430 = vld [vmem:[#allocation8 + $0xf0] sm:$0xff]
    %v1431 = vld [vmem:[#allocation8 + $0xf8] sm:$0xff]
    %v1464 = vunpack.c.l.b16 %v1400
    %v1465 = vunpack.c.h.b16 %v1400
    %v1466 = vunpack.c.l.b16 %v1401
    %v1467 = vunpack.c.h.b16 %v1401
    %v1468 = vunpack.c.l.b16 %v1402
    %v1469 = vunpack.c.h.b16 %v1402
    %v1470 = vunpack.c.l.b16 %v1403
    %v1471 = vunpack.c.h.b16 %v1403
    %v1472 = vunpack.c.l.b16 %v1404
    %v1473 = vunpack.c.h.b16 %v1404
    %v1474 = vunpack.c.l.b16 %v1405
    %v1475 = vunpack.c.h.b16 %v1405
    %v1476 = vunpack.c.l.b16 %v1406
    %v1477 = vunpack.c.h.b16 %v1406
    %v1478 = vunpack.c.l.b16 %v1407
    %v1479 = vunpack.c.h.b16 %v1407
    %v1480 = vunpack.c.l.b16 %v1408
    %v1481 = vunpack.c.h.b16 %v1408
    %v1482 = vunpack.c.l.b16 %v1409
    %v1483 = vunpack.c.h.b16 %v1409
    %v1484 = vunpack.c.l.b16 %v1410
    %v1485 = vunpack.c.h.b16 %v1410
    %v1486 = vunpack.c.l.b16 %v1411
    %v1487 = vunpack.c.h.b16 %v1411
    %v1488 = vunpack.c.l.b16 %v1412
    %v1489 = vunpack.c.h.b16 %v1412
    %v1490 = vunpack.c.l.b16 %v1413
    %v1491 = vunpack.c.h.b16 %v1413
    %v1492 = vunpack.c.l.b16 %v1414
    %v1493 = vunpack.c.h.b16 %v1414
    %v1494 = vunpack.c.l.b16 %v1415
    %v1495 = vunpack.c.h.b16 %v1415
    %v1496 = vunpack.c.l.b16 %v1416
    %v1497 = vunpack.c.h.b16 %v1416
    %v1498 = vunpack.c.l.b16 %v1417
    %v1499 = vunpack.c.h.b16 %v1417
    %v1500 = vunpack.c.l.b16 %v1418
    %v1501 = vunpack.c.h.b16 %v1418
    %v1502 = vunpack.c.l.b16 %v1419
    %v1503 = vunpack.c.h.b16 %v1419
    %v1504 = vunpack.c.l.b16 %v1420
    %v1505 = vunpack.c.h.b16 %v1420
    %v1506 = vunpack.c.l.b16 %v1421
    %v1507 = vunpack.c.h.b16 %v1421
    %v1508 = vunpack.c.l.b16 %v1422
    %v1509 = vunpack.c.h.b16 %v1422
    %v1510 = vunpack.c.l.b16 %v1423
    %v1511 = vunpack.c.h.b16 %v1423
    %v1512 = vunpack.c.l.b16 %v1424
    %v1513 = vunpack.c.h.b16 %v1424
    %v1514 = vunpack.c.l.b16 %v1425
    %v1515 = vunpack.c.h.b16 %v1425
    %v1516 = vunpack.c.l.b16 %v1426
    %v1517 = vunpack.c.h.b16 %v1426
    %v1518 = vunpack.c.l.b16 %v1427
    %v1519 = vunpack.c.h.b16 %v1427
    %v1520 = vunpack.c.l.b16 %v1428
    %v1521 = vunpack.c.h.b16 %v1428
    %v1522 = vunpack.c.l.b16 %v1429
    %v1523 = vunpack.c.h.b16 %v1429
    %v1524 = vunpack.c.l.b16 %v1430
    %v1525 = vunpack.c.h.b16 %v1430
    %v1526 = vunpack.c.l.b16 %v1431
    %v1527 = vunpack.c.h.b16 %v1431
    %v1528 = vpack.c.b16 %v1468, %v1464
    %v1529 = vpack.c.b16 %v1469, %v1465
    %v1530 = vpack.c.b16 %v1470, %v1466
    %v1531 = vpack.c.b16 %v1471, %v1467
    %v1532 = vpack.c.b16 %v1476, %v1472
    %v1533 = vpack.c.b16 %v1477, %v1473
    %v1534 = vpack.c.b16 %v1478, %v1474
    %v1535 = vpack.c.b16 %v1479, %v1475
    %v1536 = vpack.c.b16 %v1484, %v1480
    %v1537 = vpack.c.b16 %v1485, %v1481
    %v1538 = vpack.c.b16 %v1486, %v1482
    %v1539 = vpack.c.b16 %v1487, %v1483
    %v1540 = vpack.c.b16 %v1492, %v1488
    %v1541 = vpack.c.b16 %v1493, %v1489
    %v1542 = vpack.c.b16 %v1494, %v1490
    %v1543 = vpack.c.b16 %v1495, %v1491
    %v1544 = vpack.c.b16 %v1500, %v1496
    %v1545 = vpack.c.b16 %v1501, %v1497
    %v1546 = vpack.c.b16 %v1502, %v1498
    %v1547 = vpack.c.b16 %v1503, %v1499
    %v1548 = vpack.c.b16 %v1508, %v1504
    %v1549 = vpack.c.b16 %v1509, %v1505
    %v1550 = vpack.c.b16 %v1510, %v1506
    %v1551 = vpack.c.b16 %v1511, %v1507
    %v1552 = vpack.c.b16 %v1516, %v1512
    %v1553 = vpack.c.b16 %v1517, %v1513
    %v1554 = vpack.c.b16 %v1518, %v1514
    %v1555 = vpack.c.b16 %v1519, %v1515
    %v1556 = vpack.c.b16 %v1524, %v1520
    %v1557 = vpack.c.b16 %v1525, %v1521
    %v1558 = vpack.c.b16 %v1526, %v1522
    %v1559 = vpack.c.b16 %v1527, %v1523
    %1592 = vmatprep.subr.bf16.mxu0 %v1557
    %1593 = vmatpush1.bf16.msra.mxu0 %v1556
    %1594 = vmatprep.subr.bf16.mxu0 %v1553
    %1595 = vmatpush1.bf16.msra.mxu0 %v1552
    %1596 = vmatprep.subr.bf16.mxu0 %v1549
    %1597 = vmatpush1.bf16.msra.mxu0 %v1548
    %1598 = vmatprep.subr.bf16.mxu0 %v1545
    %1599 = vmatpush1.bf16.msra.mxu0 %v1544
    %1600 = vmatprep.subr.bf16.mxu0 %v1541
    %1601 = vmatpush1.bf16.msra.mxu0 %v1540
    %1602 = vmatprep.subr.bf16.mxu0 %v1537
    %1603 = vmatpush1.bf16.msra.mxu0 %v1536
    %1604 = vmatprep.subr.bf16.mxu0 %v1533
    %1605 = vmatpush1.bf16.msra.mxu0 %v1532
    %1606 = vmatprep.subr.bf16.mxu0 %v1529
    %1607 = vmatpush1.bf16.msra.mxu0 %v1528
    %1608 = vmatprep.subr.bf16.mxu0 0
    %1609 = vmatpush2.bf16.msra.mxu0 0
    %1610 = vmatprep.subr.bf16.mxu0 0
    %1611 = vmatpush2.bf16.msra.mxu0 0
    %1612 = vmatprep.subr.bf16.mxu0 0
    %1613 = vmatpush2.bf16.msra.mxu0 0
    %1614 = vmatprep.subr.bf16.mxu0 0
    %1615 = vmatpush2.bf16.msra.mxu0 0
    %1616 = vmatprep.subr.bf16.mxu0 0
    %1617 = vmatpush2.bf16.msra.mxu0 0
    %1618 = vmatprep.subr.bf16.mxu0 0
    %1619 = vmatpush2.bf16.msra.mxu0 0
    %1620 = vmatprep.subr.bf16.mxu0 0
    %1621 = vmatpush2.bf16.msra.mxu0 0
    %1622 = vmatprep.subr.bf16.mxu0 0
    %1623 = vmatpush2.bf16.msra.mxu0 0
    %1624 = vmatprep.mubr.bf16.mxu0 0
    %1625 = vmatmul.mubr.bf16.gmra.mxu0 %v1399
    %v1626 = vpop.f32.mrf.mxu0
    %v1627 = vadd.f32 0.0, %v1626
    %v1628 = vpop.f32.mrf.mxu0
    %v1629 = vadd.f32 0.0, %v1628
    %v1630 = vpop.f32.mrf.mxu0
    %v1631 = vpop.f32.mrf.mxu0
    %1632 = vdwg.mxu0
    %1633 = vmatprep.subr.bf16.mxu0 %v1559
    %1634 = vmatpush1.bf16.msra.mxu0 %v1558
    %1635 = vmatprep.subr.bf16.mxu0 %v1555
    %1636 = vmatpush1.bf16.msra.mxu0 %v1554
    %1637 = vmatprep.subr.bf16.mxu0 %v1551
    %1638 = vmatpush1.bf16.msra.mxu0 %v1550
    %1639 = vmatprep.subr.bf16.mxu0 %v1547
    %1640 = vmatpush1.bf16.msra.mxu0 %v1546
    %1641 = vmatprep.subr.bf16.mxu0 %v1543
    %1642 = vmatpush1.bf16.msra.mxu0 %v1542
    %1643 = vmatprep.subr.bf16.mxu0 %v1539
    %1644 = vmatpush1.bf16.msra.mxu0 %v1538
    %1645 = vmatprep.subr.bf16.mxu0 %v1535
    %1646 = vmatpush1.bf16.msra.mxu0 %v1534
    %1647 = vmatprep.subr.bf16.mxu0 %v1531
    %1648 = vmatpush1.bf16.msra.mxu0 %v1530
    %1649 = vmatprep.subr.bf16.mxu0 0
    %1650 = vmatpush2.bf16.msra.mxu0 0
    %1651 = vmatprep.subr.bf16.mxu0 0
    %1652 = vmatpush2.bf16.msra.mxu0 0
    %1653 = vmatprep.subr.bf16.mxu0 0
    %1654 = vmatpush2.bf16.msra.mxu0 0
    %1655 = vmatprep.subr.bf16.mxu0 0
    %1656 = vmatpush2.bf16.msra.mxu0 0
    %1657 = vmatprep.subr.bf16.mxu0 0
    %1658 = vmatpush2.bf16.msra.mxu0 0
    %1659 = vmatprep.subr.bf16.mxu0 0
    %1660 = vmatpush2.bf16.msra.mxu0 0
    %1661 = vmatprep.subr.bf16.mxu0 0
    %1662 = vmatpush2.bf16.msra.mxu0 0
    %1663 = vmatprep.subr.bf16.mxu0 0
    %1664 = vmatpush2.bf16.msra.mxu0 0
    %1665 = vmatprep.mubr.bf16.mxu0 0
    %1666 = vmatmul.mubr.bf16.gmra.mxu0 %v1399
    %v1667 = vpop.f32.mrf.mxu0
    %v1668 = vadd.f32 0.0, %v1667
    %v1669 = vpop.f32.mrf.mxu0
    %v1670 = vadd.f32 0.0, %v1669
    %v1671 = vpop.f32.mrf.mxu0
    %v1672 = vpop.f32.mrf.mxu0
    %1673 = vdwg.mxu0
    %v1674 = vadd.f32 %v1395, %v1627
    %v1675 = vadd.f32 %v1396, %v1629
    %v1676 = vadd.f32 %v1397, %v1668
    %v1677 = vadd.f32 %v1398, %v1670
    %v1678 = vxor.u32 %v1674, 2147483648
    %v1679 = vmul.f32 %v1678, 1.442695
    %v1680 = vpow.pop %v1679
    %v1681 = vadd.f32 %v1680, 1.0
    %v1682 = vrcp.pop %v1681
    %v1683 = vmul.f32 1.0, %v1682
    %v1684 = vxor.u32 %v1675, 2147483648
    %v1685 = vmul.f32 %v1684, 1.442695
    %v1686 = vpow.pop %v1685
    %v1687 = vadd.f32 %v1686, 1.0
    %v1688 = vrcp.pop %v1687
    %v1689 = vmul.f32 1.0, %v1688
    %v1690 = vtanh.pop %v1676
    %v1691 = vxor.u32 %v1677, 2147483648
    %v1692 = vmul.f32 %v1691, 1.442695
    %v1693 = vpow.pop %v1692
    %v1694 = vadd.f32 %v1693, 1.0
    %v1695 = vrcp.pop %v1694
    %v1696 = vmul.f32 1.0, %v1695
    %v1697 = vmul.f32 %v1689, %v1391
    %v1698 = vmul.f32 %v1683, %v1690
    %v1699 = vadd.f32 %v1697, %v1698
    %v1700 = vtanh.pop %v1699
    %v1701 = vmul.f32 %v1696, %v1700
    %1702 = vst [vmem:[#allocation2 + $0x18] sm:$0xff] %v1701
    %v1703 = vld [vmem:[#allocation3 + $0x80] sm:$0xff]
    %v1704 = vld [vmem:[#allocation3 + $0x88] sm:$0xff]
    %v1705 = vld [vmem:[#allocation3 + $0x90] sm:$0xff]
    %v1706 = vld [vmem:[#allocation3 + $0x98] sm:$0xff]
    %v1707 = vpack.c.bf16 %v1701, %v1701
    %v1708 = vld [vmem:[#allocation8] sm:$0xff]
    %v1709 = vld [vmem:[#allocation8 + $0x8] sm:$0xff]
    %v1710 = vld [vmem:[#allocation8 + $0x10] sm:$0xff]
    %v1711 = vld [vmem:[#allocation8 + $0x18] sm:$0xff]
    %v1712 = vld [vmem:[#allocation8 + $0x20] sm:$0xff]
    %v1713 = vld [vmem:[#allocation8 + $0x28] sm:$0xff]
    %v1714 = vld [vmem:[#allocation8 + $0x30] sm:$0xff]
    %v1715 = vld [vmem:[#allocation8 + $0x38] sm:$0xff]
    %v1716 = vld [vmem:[#allocation8 + $0x40] sm:$0xff]
    %v1717 = vld [vmem:[#allocation8 + $0x48] sm:$0xff]
    %v1718 = vld [vmem:[#allocation8 + $0x50] sm:$0xff]
    %v1719 = vld [vmem:[#allocation8 + $0x58] sm:$0xff]
    %v1720 = vld [vmem:[#allocation8 + $0x60] sm:$0xff]
    %v1721 = vld [vmem:[#allocation8 + $0x68] sm:$0xff]
    %v1722 = vld [vmem:[#allocation8 + $0x70] sm:$0xff]
    %v1723 = vld [vmem:[#allocation8 + $0x78] sm:$0xff]
    %v1724 = vld [vmem:[#allocation8 + $0x80] sm:$0xff]
    %v1725 = vld [vmem:[#allocation8 + $0x88] sm:$0xff]
    %v1726 = vld [vmem:[#allocation8 + $0x90] sm:$0xff]
    %v1727 = vld [vmem:[#allocation8 + $0x98] sm:$0xff]
    %v1728 = vld [vmem:[#allocation8 + $0xa0] sm:$0xff]
    %v1729 = vld [vmem:[#allocation8 + $0xa8] sm:$0xff]
    %v1730 = vld [vmem:[#allocation8 + $0xb0] sm:$0xff]
    %v1731 = vld [vmem:[#allocation8 + $0xb8] sm:$0xff]
    %v1732 = vld [vmem:[#allocation8 + $0xc0] sm:$0xff]
    %v1733 = vld [vmem:[#allocation8 + $0xc8] sm:$0xff]
    %v1734 = vld [vmem:[#allocation8 + $0xd0] sm:$0xff]
    %v1735 = vld [vmem:[#allocation8 + $0xd8] sm:$0xff]
    %v1736 = vld [vmem:[#allocation8 + $0xe0] sm:$0xff]
    %v1737 = vld [vmem:[#allocation8 + $0xe8] sm:$0xff]
    %v1738 = vld [vmem:[#allocation8 + $0xf0] sm:$0xff]
    %v1739 = vld [vmem:[#allocation8 + $0xf8] sm:$0xff]
    %v1772 = vunpack.c.l.b16 %v1708
    %v1773 = vunpack.c.h.b16 %v1708
    %v1774 = vunpack.c.l.b16 %v1709
    %v1775 = vunpack.c.h.b16 %v1709
    %v1776 = vunpack.c.l.b16 %v1710
    %v1777 = vunpack.c.h.b16 %v1710
    %v1778 = vunpack.c.l.b16 %v1711
    %v1779 = vunpack.c.h.b16 %v1711
    %v1780 = vunpack.c.l.b16 %v1712
    %v1781 = vunpack.c.h.b16 %v1712
    %v1782 = vunpack.c.l.b16 %v1713
    %v1783 = vunpack.c.h.b16 %v1713
    %v1784 = vunpack.c.l.b16 %v1714
    %v1785 = vunpack.c.h.b16 %v1714
    %v1786 = vunpack.c.l.b16 %v1715
    %v1787 = vunpack.c.h.b16 %v1715
    %v1788 = vunpack.c.l.b16 %v1716
    %v1789 = vunpack.c.h.b16 %v1716
    %v1790 = vunpack.c.l.b16 %v1717
    %v1791 = vunpack.c.h.b16 %v1717
    %v1792 = vunpack.c.l.b16 %v1718
    %v1793 = vunpack.c.h.b16 %v1718
    %v1794 = vunpack.c.l.b16 %v1719
    %v1795 = vunpack.c.h.b16 %v1719
    %v1796 = vunpack.c.l.b16 %v1720
    %v1797 = vunpack.c.h.b16 %v1720
    %v1798 = vunpack.c.l.b16 %v1721
    %v1799 = vunpack.c.h.b16 %v1721
    %v1800 = vunpack.c.l.b16 %v1722
    %v1801 = vunpack.c.h.b16 %v1722
    %v1802 = vunpack.c.l.b16 %v1723
    %v1803 = vunpack.c.h.b16 %v1723
    %v1804 = vunpack.c.l.b16 %v1724
    %v1805 = vunpack.c.h.b16 %v1724
    %v1806 = vunpack.c.l.b16 %v1725
    %v1807 = vunpack.c.h.b16 %v1725
    %v1808 = vunpack.c.l.b16 %v1726
    %v1809 = vunpack.c.h.b16 %v1726
    %v1810 = vunpack.c.l.b16 %v1727
    %v1811 = vunpack.c.h.b16 %v1727
    %v1812 = vunpack.c.l.b16 %v1728
    %v1813 = vunpack.c.h.b16 %v1728
    %v1814 = vunpack.c.l.b16 %v1729
    %v1815 = vunpack.c.h.b16 %v1729
    %v1816 = vunpack.c.l.b16 %v1730
    %v1817 = vunpack.c.h.b16 %v1730
    %v1818 = vunpack.c.l.b16 %v1731
    %v1819 = vunpack.c.h.b16 %v1731
    %v1820 = vunpack.c.l.b16 %v1732
    %v1821 = vunpack.c.h.b16 %v1732
    %v1822 = vunpack.c.l.b16 %v1733
    %v1823 = vunpack.c.h.b16 %v1733
    %v1824 = vunpack.c.l.b16 %v1734
    %v1825 = vunpack.c.h.b16 %v1734
    %v1826 = vunpack.c.l.b16 %v1735
    %v1827 = vunpack.c.h.b16 %v1735
    %v1828 = vunpack.c.l.b16 %v1736
    %v1829 = vunpack.c.h.b16 %v1736
    %v1830 = vunpack.c.l.b16 %v1737
    %v1831 = vunpack.c.h.b16 %v1737
    %v1832 = vunpack.c.l.b16 %v1738
    %v1833 = vunpack.c.h.b16 %v1738
    %v1834 = vunpack.c.l.b16 %v1739
    %v1835 = vunpack.c.h.b16 %v1739
    %v1836 = vpack.c.b16 %v1776, %v1772
    %v1837 = vpack.c.b16 %v1777, %v1773
    %v1838 = vpack.c.b16 %v1778, %v1774
    %v1839 = vpack.c.b16 %v1779, %v1775
    %v1840 = vpack.c.b16 %v1784, %v1780
    %v1841 = vpack.c.b16 %v1785, %v1781
    %v1842 = vpack.c.b16 %v1786, %v1782
    %v1843 = vpack.c.b16 %v1787, %v1783
    %v1844 = vpack.c.b16 %v1792, %v1788
    %v1845 = vpack.c.b16 %v1793, %v1789
    %v1846 = vpack.c.b16 %v1794, %v1790
    %v1847 = vpack.c.b16 %v1795, %v1791
    %v1848 = vpack.c.b16 %v1800, %v1796
    %v1849 = vpack.c.b16 %v1801, %v1797
    %v1850 = vpack.c.b16 %v1802, %v1798
    %v1851 = vpack.c.b16 %v1803, %v1799
    %v1852 = vpack.c.b16 %v1808, %v1804
    %v1853 = vpack.c.b16 %v1809, %v1805
    %v1854 = vpack.c.b16 %v1810, %v1806
    %v1855 = vpack.c.b16 %v1811, %v1807
    %v1856 = vpack.c.b16 %v1816, %v1812
    %v1857 = vpack.c.b16 %v1817, %v1813
    %v1858 = vpack.c.b16 %v1818, %v1814
    %v1859 = vpack.c.b16 %v1819, %v1815
    %v1860 = vpack.c.b16 %v1824, %v1820
    %v1861 = vpack.c.b16 %v1825, %v1821
    %v1862 = vpack.c.b16 %v1826, %v1822
    %v1863 = vpack.c.b16 %v1827, %v1823
    %v1864 = vpack.c.b16 %v1832, %v1828
    %v1865 = vpack.c.b16 %v1833, %v1829
    %v1866 = vpack.c.b16 %v1834, %v1830
    %v1867 = vpack.c.b16 %v1835, %v1831
    %1900 = vmatprep.subr.bf16.mxu0 %v1865
    %1901 = vmatpush1.bf16.msra.mxu0 %v1864
    %1902 = vmatprep.subr.bf16.mxu0 %v1861
    %1903 = vmatpush1.bf16.msra.mxu0 %v1860
    %1904 = vmatprep.subr.bf16.mxu0 %v1857
    %1905 = vmatpush1.bf16.msra.mxu0 %v1856
    %1906 = vmatprep.subr.bf16.mxu0 %v1853
    %1907 = vmatpush1.bf16.msra.mxu0 %v1852
    %1908 = vmatprep.subr.bf16.mxu0 %v1849
    %1909 = vmatpush1.bf16.msra.mxu0 %v1848
    %1910 = vmatprep.subr.bf16.mxu0 %v1845
    %1911 = vmatpush1.bf16.msra.mxu0 %v1844
    %1912 = vmatprep.subr.bf16.mxu0 %v1841
    %1913 = vmatpush1.bf16.msra.mxu0 %v1840
    %1914 = vmatprep.subr.bf16.mxu0 %v1837
    %1915 = vmatpush1.bf16.msra.mxu0 %v1836
    %1916 = vmatprep.subr.bf16.mxu0 0
    %1917 = vmatpush2.bf16.msra.mxu0 0
    %1918 = vmatprep.subr.bf16.mxu0 0
    %1919 = vmatpush2.bf16.msra.mxu0 0
    %1920 = vmatprep.subr.bf16.mxu0 0
    %1921 = vmatpush2.bf16.msra.mxu0 0
    %1922 = vmatprep.subr.bf16.mxu0 0
    %1923 = vmatpush2.bf16.msra.mxu0 0
    %1924 = vmatprep.subr.bf16.mxu0 0
    %1925 = vmatpush2.bf16.msra.mxu0 0
    %1926 = vmatprep.subr.bf16.mxu0 0
    %1927 = vmatpush2.bf16.msra.mxu0 0
    %1928 = vmatprep.subr.bf16.mxu0 0
    %1929 = vmatpush2.bf16.msra.mxu0 0
    %1930 = vmatprep.subr.bf16.mxu0 0
    %1931 = vmatpush2.bf16.msra.mxu0 0
    %1932 = vmatprep.mubr.bf16.mxu0 0
    %1933 = vmatmul.mubr.bf16.gmra.mxu0 %v1707
    %v1934 = vpop.f32.mrf.mxu0
    %v1935 = vadd.f32 0.0, %v1934
    %v1936 = vpop.f32.mrf.mxu0
    %v1937 = vadd.f32 0.0, %v1936
    %v1938 = vpop.f32.mrf.mxu0
    %v1939 = vpop.f32.mrf.mxu0
    %1940 = vdwg.mxu0
    %1941 = vmatprep.subr.bf16.mxu0 %v1867
    %1942 = vmatpush1.bf16.msra.mxu0 %v1866
    %1943 = vmatprep.subr.bf16.mxu0 %v1863
    %1944 = vmatpush1.bf16.msra.mxu0 %v1862
    %1945 = vmatprep.subr.bf16.mxu0 %v1859
    %1946 = vmatpush1.bf16.msra.mxu0 %v1858
    %1947 = vmatprep.subr.bf16.mxu0 %v1855
    %1948 = vmatpush1.bf16.msra.mxu0 %v1854
    %1949 = vmatprep.subr.bf16.mxu0 %v1851
    %1950 = vmatpush1.bf16.msra.mxu0 %v1850
    %1951 = vmatprep.subr.bf16.mxu0 %v1847
    %1952 = vmatpush1.bf16.msra.mxu0 %v1846
    %1953 = vmatprep.subr.bf16.mxu0 %v1843
    %1954 = vmatpush1.bf16.msra.mxu0 %v1842
    %1955 = vmatprep.subr.bf16.mxu0 %v1839
    %1956 = vmatpush1.bf16.msra.mxu0 %v1838
    %1957 = vmatprep.subr.bf16.mxu0 0
    %1958 = vmatpush2.bf16.msra.mxu0 0
    %1959 = vmatprep.subr.bf16.mxu0 0
    %1960 = vmatpush2.bf16.msra.mxu0 0
    %1961 = vmatprep.subr.bf16.mxu0 0
    %1962 = vmatpush2.bf16.msra.mxu0 0
    %1963 = vmatprep.subr.bf16.mxu0 0
    %1964 = vmatpush2.bf16.msra.mxu0 0
    %1965 = vmatprep.subr.bf16.mxu0 0
    %1966 = vmatpush2.bf16.msra.mxu0 0
    %1967 = vmatprep.subr.bf16.mxu0 0
    %1968 = vmatpush2.bf16.msra.mxu0 0
    %1969 = vmatprep.subr.bf16.mxu0 0
    %1970 = vmatpush2.bf16.msra.mxu0 0
    %1971 = vmatprep.subr.bf16.mxu0 0
    %1972 = vmatpush2.bf16.msra.mxu0 0
    %1973 = vmatprep.mubr.bf16.mxu0 0
    %1974 = vmatmul.mubr.bf16.gmra.mxu0 %v1707
    %v1975 = vpop.f32.mrf.mxu0
    %v1976 = vadd.f32 0.0, %v1975
    %v1977 = vpop.f32.mrf.mxu0
    %v1978 = vadd.f32 0.0, %v1977
    %v1979 = vpop.f32.mrf.mxu0
    %v1980 = vpop.f32.mrf.mxu0
    %1981 = vdwg.mxu0
    %v1982 = vadd.f32 %v1703, %v1935
    %v1983 = vadd.f32 %v1704, %v1937
    %v1984 = vadd.f32 %v1705, %v1976
    %v1985 = vadd.f32 %v1706, %v1978
    %v1986 = vxor.u32 %v1982, 2147483648
    %v1987 = vmul.f32 %v1986, 1.442695
    %v1988 = vpow.pop %v1987
    %v1989 = vadd.f32 %v1988, 1.0
    %v1990 = vrcp.pop %v1989
    %v1991 = vmul.f32 1.0, %v1990
    %v1992 = vxor.u32 %v1983, 2147483648
    %v1993 = vmul.f32 %v1992, 1.442695
    %v1994 = vpow.pop %v1993
    %v1995 = vadd.f32 %v1994, 1.0
    %v1996 = vrcp.pop %v1995
    %v1997 = vmul.f32 1.0, %v1996
    %v1998 = vtanh.pop %v1984
    %v1999 = vxor.u32 %v1985, 2147483648
    %v2000 = vmul.f32 %v1999, 1.442695
    %v2001 = vpow.pop %v2000
    %v2002 = vadd.f32 %v2001, 1.0
    %v2003 = vrcp.pop %v2002
    %v2004 = vmul.f32 1.0, %v2003
    %v2005 = vmul.f32 %v1997, %v1699
    %v2006 = vmul.f32 %v1991, %v1998
    %v2007 = vadd.f32 %v2005, %v2006
    %v2008 = vtanh.pop %v2007
    %v2009 = vmul.f32 %v2004, %v2008
    %2010 = vst [vmem:[#allocation2 + $0x20] sm:$0xff] %v2009
    %v2011 = vld [vmem:[#allocation3 + $0xa0] sm:$0xff]
    %v2012 = vld [vmem:[#allocation3 + $0xa8] sm:$0xff]
    %v2013 = vld [vmem:[#allocation3 + $0xb0] sm:$0xff]
    %v2014 = vld [vmem:[#allocation3 + $0xb8] sm:$0xff]
    %v2015 = vpack.c.bf16 %v2009, %v2009
    %v2016 = vld [vmem:[#allocation8] sm:$0xff]
    %v2017 = vld [vmem:[#allocation8 + $0x8] sm:$0xff]
    %v2018 = vld [vmem:[#allocation8 + $0x10] sm:$0xff]
    %v2019 = vld [vmem:[#allocation8 + $0x18] sm:$0xff]
    %v2020 = vld [vmem:[#allocation8 + $0x20] sm:$0xff]
    %v2021 = vld [vmem:[#allocation8 + $0x28] sm:$0xff]
    %v2022 = vld [vmem:[#allocation8 + $0x30] sm:$0xff]
    %v2023 = vld [vmem:[#allocation8 + $0x38] sm:$0xff]
    %v2024 = vld [vmem:[#allocation8 + $0x40] sm:$0xff]
    %v2025 = vld [vmem:[#allocation8 + $0x48] sm:$0xff]
    %v2026 = vld [vmem:[#allocation8 + $0x50] sm:$0xff]
    %v2027 = vld [vmem:[#allocation8 + $0x58] sm:$0xff]
    %v2028 = vld [vmem:[#allocation8 + $0x60] sm:$0xff]
    %v2029 = vld [vmem:[#allocation8 + $0x68] sm:$0xff]
    %v2030 = vld [vmem:[#allocation8 + $0x70] sm:$0xff]
    %v2031 = vld [vmem:[#allocation8 + $0x78] sm:$0xff]
    %v2032 = vld [vmem:[#allocation8 + $0x80] sm:$0xff]
    %v2033 = vld [vmem:[#allocation8 + $0x88] sm:$0xff]
    %v2034 = vld [vmem:[#allocation8 + $0x90] sm:$0xff]
    %v2035 = vld [vmem:[#allocation8 + $0x98] sm:$0xff]
    %v2036 = vld [vmem:[#allocation8 + $0xa0] sm:$0xff]
    %v2037 = vld [vmem:[#allocation8 + $0xa8] sm:$0xff]
    %v2038 = vld [vmem:[#allocation8 + $0xb0] sm:$0xff]
    %v2039 = vld [vmem:[#allocation8 + $0xb8] sm:$0xff]
    %v2040 = vld [vmem:[#allocation8 + $0xc0] sm:$0xff]
    %v2041 = vld [vmem:[#allocation8 + $0xc8] sm:$0xff]
    %v2042 = vld [vmem:[#allocation8 + $0xd0] sm:$0xff]
    %v2043 = vld [vmem:[#allocation8 + $0xd8] sm:$0xff]
    %v2044 = vld [vmem:[#allocation8 + $0xe0] sm:$0xff]
    %v2045 = vld [vmem:[#allocation8 + $0xe8] sm:$0xff]
    %v2046 = vld [vmem:[#allocation8 + $0xf0] sm:$0xff]
    %v2047 = vld [vmem:[#allocation8 + $0xf8] sm:$0xff]
    %v2080 = vunpack.c.l.b16 %v2016
    %v2081 = vunpack.c.h.b16 %v2016
    %v2082 = vunpack.c.l.b16 %v2017
    %v2083 = vunpack.c.h.b16 %v2017
    %v2084 = vunpack.c.l.b16 %v2018
    %v2085 = vunpack.c.h.b16 %v2018
    %v2086 = vunpack.c.l.b16 %v2019
    %v2087 = vunpack.c.h.b16 %v2019
    %v2088 = vunpack.c.l.b16 %v2020
    %v2089 = vunpack.c.h.b16 %v2020
    %v2090 = vunpack.c.l.b16 %v2021
    %v2091 = vunpack.c.h.b16 %v2021
    %v2092 = vunpack.c.l.b16 %v2022
    %v2093 = vunpack.c.h.b16 %v2022
    %v2094 = vunpack.c.l.b16 %v2023
    %v2095 = vunpack.c.h.b16 %v2023
    %v2096 = vunpack.c.l.b16 %v2024
    %v2097 = vunpack.c.h.b16 %v2024
    %v2098 = vunpack.c.l.b16 %v2025
    %v2099 = vunpack.c.h.b16 %v2025
    %v2100 = vunpack.c.l.b16 %v2026
    %v2101 = vunpack.c.h.b16 %v2026
    %v2102 = vunpack.c.l.b16 %v2027
    %v2103 = vunpack.c.h.b16 %v2027
    %v2104 = vunpack.c.l.b16 %v2028
    %v2105 = vunpack.c.h.b16 %v2028
    %v2106 = vunpack.c.l.b16 %v2029
    %v2107 = vunpack.c.h.b16 %v2029
    %v2108 = vunpack.c.l.b16 %v2030
    %v2109 = vunpack.c.h.b16 %v2030
    %v2110 = vunpack.c.l.b16 %v2031
    %v2111 = vunpack.c.h.b16 %v2031
    %v2112 = vunpack.c.l.b16 %v2032
    %v2113 = vunpack.c.h.b16 %v2032
    %v2114 = vunpack.c.l.b16 %v2033
    %v2115 = vunpack.c.h.b16 %v2033
    %v2116 = vunpack.c.l.b16 %v2034
    %v2117 = vunpack.c.h.b16 %v2034
    %v2118 = vunpack.c.l.b16 %v2035
    %v2119 = vunpack.c.h.b16 %v2035
    %v2120 = vunpack.c.l.b16 %v2036
    %v2121 = vunpack.c.h.b16 %v2036
    %v2122 = vunpack.c.l.b16 %v2037
    %v2123 = vunpack.c.h.b16 %v2037
    %v2124 = vunpack.c.l.b16 %v2038
    %v2125 = vunpack.c.h.b16 %v2038
    %v2126 = vunpack.c.l.b16 %v2039
    %v2127 = vunpack.c.h.b16 %v2039
    %v2128 = vunpack.c.l.b16 %v2040
    %v2129 = vunpack.c.h.b16 %v2040
    %v2130 = vunpack.c.l.b16 %v2041
    %v2131 = vunpack.c.h.b16 %v2041
    %v2132 = vunpack.c.l.b16 %v2042
    %v2133 = vunpack.c.h.b16 %v2042
    %v2134 = vunpack.c.l.b16 %v2043
    %v2135 = vunpack.c.h.b16 %v2043
    %v2136 = vunpack.c.l.b16 %v2044
    %v2137 = vunpack.c.h.b16 %v2044
    %v2138 = vunpack.c.l.b16 %v2045
    %v2139 = vunpack.c.h.b16 %v2045
    %v2140 = vunpack.c.l.b16 %v2046
    %v2141 = vunpack.c.h.b16 %v2046
    %v2142 = vunpack.c.l.b16 %v2047
    %v2143 = vunpack.c.h.b16 %v2047
    %v2144 = vpack.c.b16 %v2084, %v2080
    %v2145 = vpack.c.b16 %v2085, %v2081
    %v2146 = vpack.c.b16 %v2086, %v2082
    %v2147 = vpack.c.b16 %v2087, %v2083
    %v2148 = vpack.c.b16 %v2092, %v2088
    %v2149 = vpack.c.b16 %v2093, %v2089
    %v2150 = vpack.c.b16 %v2094, %v2090
    %v2151 = vpack.c.b16 %v2095, %v2091
    %v2152 = vpack.c.b16 %v2100, %v2096
    %v2153 = vpack.c.b16 %v2101, %v2097
    %v2154 = vpack.c.b16 %v2102, %v2098
    %v2155 = vpack.c.b16 %v2103, %v2099
    %v2156 = vpack.c.b16 %v2108, %v2104
    %v2157 = vpack.c.b16 %v2109, %v2105
    %v2158 = vpack.c.b16 %v2110, %v2106
    %v2159 = vpack.c.b16 %v2111, %v2107
    %v2160 = vpack.c.b16 %v2116, %v2112
    %v2161 = vpack.c.b16 %v2117, %v2113
    %v2162 = vpack.c.b16 %v2118, %v2114
    %v2163 = vpack.c.b16 %v2119, %v2115
    %v2164 = vpack.c.b16 %v2124, %v2120
    %v2165 = vpack.c.b16 %v2125, %v2121
    %v2166 = vpack.c.b16 %v2126, %v2122
    %v2167 = vpack.c.b16 %v2127, %v2123
    %v2168 = vpack.c.b16 %v2132, %v2128
    %v2169 = vpack.c.b16 %v2133, %v2129
    %v2170 = vpack.c.b16 %v2134, %v2130
    %v2171 = vpack.c.b16 %v2135, %v2131
    %v2172 = vpack.c.b16 %v2140, %v2136
    %v2173 = vpack.c.b16 %v2141, %v2137
    %v2174 = vpack.c.b16 %v2142, %v2138
    %v2175 = vpack.c.b16 %v2143, %v2139
    %2208 = vmatprep.subr.bf16.mxu0 %v2173
    %2209 = vmatpush1.bf16.msra.mxu0 %v2172
    %2210 = vmatprep.subr.bf16.mxu0 %v2169
    %2211 = vmatpush1.bf16.msra.mxu0 %v2168
    %2212 = vmatprep.subr.bf16.mxu0 %v2165
    %2213 = vmatpush1.bf16.msra.mxu0 %v2164
    %2214 = vmatprep.subr.bf16.mxu0 %v2161
    %2215 = vmatpush1.bf16.msra.mxu0 %v2160
    %2216 = vmatprep.subr.bf16.mxu0 %v2157
    %2217 = vmatpush1.bf16.msra.mxu0 %v2156
    %2218 = vmatprep.subr.bf16.mxu0 %v2153
    %2219 = vmatpush1.bf16.msra.mxu0 %v2152
    %2220 = vmatprep.subr.bf16.mxu0 %v2149
    %2221 = vmatpush1.bf16.msra.mxu0 %v2148
    %2222 = vmatprep.subr.bf16.mxu0 %v2145
    %2223 = vmatpush1.bf16.msra.mxu0 %v2144
    %2224 = vmatprep.subr.bf16.mxu0 0
    %2225 = vmatpush2.bf16.msra.mxu0 0
    %2226 = vmatprep.subr.bf16.mxu0 0
    %2227 = vmatpush2.bf16.msra.mxu0 0
    %2228 = vmatprep.subr.bf16.mxu0 0
    %2229 = vmatpush2.bf16.msra.mxu0 0
    %2230 = vmatprep.subr.bf16.mxu0 0
    %2231 = vmatpush2.bf16.msra.mxu0 0
    %2232 = vmatprep.subr.bf16.mxu0 0
    %2233 = vmatpush2.bf16.msra.mxu0 0
    %2234 = vmatprep.subr.bf16.mxu0 0
    %2235 = vmatpush2.bf16.msra.mxu0 0
    %2236 = vmatprep.subr.bf16.mxu0 0
    %2237 = vmatpush2.bf16.msra.mxu0 0
    %2238 = vmatprep.subr.bf16.mxu0 0
    %2239 = vmatpush2.bf16.msra.mxu0 0
    %2240 = vmatprep.mubr.bf16.mxu0 0
    %2241 = vmatmul.mubr.bf16.gmra.mxu0 %v2015
    %v2242 = vpop.f32.mrf.mxu0
    %v2243 = vadd.f32 0.0, %v2242
    %v2244 = vpop.f32.mrf.mxu0
    %v2245 = vadd.f32 0.0, %v2244
    %v2246 = vpop.f32.mrf.mxu0
    %v2247 = vpop.f32.mrf.mxu0
    %2248 = vdwg.mxu0
    %2249 = vmatprep.subr.bf16.mxu0 %v2175
    %2250 = vmatpush1.bf16.msra.mxu0 %v2174
    %2251 = vmatprep.subr.bf16.mxu0 %v2171
    %2252 = vmatpush1.bf16.msra.mxu0 %v2170
    %2253 = vmatprep.subr.bf16.mxu0 %v2167
    %2254 = vmatpush1.bf16.msra.mxu0 %v2166
    %2255 = vmatprep.subr.bf16.mxu0 %v2163
    %2256 = vmatpush1.bf16.msra.mxu0 %v2162
    %2257 = vmatprep.subr.bf16.mxu0 %v2159
    %2258 = vmatpush1.bf16.msra.mxu0 %v2158
    %2259 = vmatprep.subr.bf16.mxu0 %v2155
    %2260 = vmatpush1.bf16.msra.mxu0 %v2154
    %2261 = vmatprep.subr.bf16.mxu0 %v2151
    %2262 = vmatpush1.bf16.msra.mxu0 %v2150
    %2263 = vmatprep.subr.bf16.mxu0 %v2147
    %2264 = vmatpush1.bf16.msra.mxu0 %v2146
    %2265 = vmatprep.subr.bf16.mxu0 0
    %2266 = vmatpush2.bf16.msra.mxu0 0
    %2267 = vmatprep.subr.bf16.mxu0 0
    %2268 = vmatpush2.bf16.msra.mxu0 0
    %2269 = vmatprep.subr.bf16.mxu0 0
    %2270 = vmatpush2.bf16.msra.mxu0 0
    %2271 = vmatprep.subr.bf16.mxu0 0
    %2272 = vmatpush2.bf16.msra.mxu0 0
    %2273 = vmatprep.subr.bf16.mxu0 0
    %2274 = vmatpush2.bf16.msra.mxu0 0
    %2275 = vmatprep.subr.bf16.mxu0 0
    %2276 = vmatpush2.bf16.msra.mxu0 0
    %2277 = vmatprep.subr.bf16.mxu0 0
    %2278 = vmatpush2.bf16.msra.mxu0 0
    %2279 = vmatprep.subr.bf16.mxu0 0
    %2280 = vmatpush2.bf16.msra.mxu0 0
    %2281 = vmatprep.mubr.bf16.mxu0 0
    %2282 = vmatmul.mubr.bf16.gmra.mxu0 %v2015
    %v2283 = vpop.f32.mrf.mxu0
    %v2284 = vadd.f32 0.0, %v2283
    %v2285 = vpop.f32.mrf.mxu0
    %v2286 = vadd.f32 0.0, %v2285
    %v2287 = vpop.f32.mrf.mxu0
    %v2288 = vpop.f32.mrf.mxu0
    %2289 = vdwg.mxu0
    %v2290 = vadd.f32 %v2011, %v2243
    %v2291 = vadd.f32 %v2012, %v2245
    %v2292 = vadd.f32 %v2013, %v2284
    %v2293 = vadd.f32 %v2014, %v2286
    %v2294 = vxor.u32 %v2290, 2147483648
    %v2295 = vmul.f32 %v2294, 1.442695
    %v2296 = vpow.pop %v2295
    %v2297 = vadd.f32 %v2296, 1.0
    %v2298 = vrcp.pop %v2297
    %v2299 = vmul.f32 1.0, %v2298
    %v2300 = vxor.u32 %v2291, 2147483648
    %v2301 = vmul.f32 %v2300, 1.442695
    %v2302 = vpow.pop %v2301
    %v2303 = vadd.f32 %v2302, 1.0
    %v2304 = vrcp.pop %v2303
    %v2305 = vmul.f32 1.0, %v2304
    %v2306 = vtanh.pop %v2292
    %v2307 = vxor.u32 %v2293, 2147483648
    %v2308 = vmul.f32 %v2307, 1.442695
    %v2309 = vpow.pop %v2308
    %v2310 = vadd.f32 %v2309, 1.0
    %v2311 = vrcp.pop %v2310
    %v2312 = vmul.f32 1.0, %v2311
    %v2313 = vmul.f32 %v2305, %v2007
    %v2314 = vmul.f32 %v2299, %v2306
    %v2315 = vadd.f32 %v2313, %v2314
    %v2316 = vtanh.pop %v2315
    %v2317 = vmul.f32 %v2312, %v2316
    %2318 = vst [vmem:[#allocation2 + $0x28] sm:$0xff] %v2317
    %v2319 = vld [vmem:[#allocation3 + $0xc0] sm:$0xff]
    %v2320 = vld [vmem:[#allocation3 + $0xc8] sm:$0xff]
    %v2321 = vld [vmem:[#allocation3 + $0xd0] sm:$0xff]
    %v2322 = vld [vmem:[#allocation3 + $0xd8] sm:$0xff]
    %v2323 = vpack.c.bf16 %v2317, %v2317
    %v2324 = vld [vmem:[#allocation8] sm:$0xff]
    %v2325 = vld [vmem:[#allocation8 + $0x8] sm:$0xff]
    %v2326 = vld [vmem:[#allocation8 + $0x10] sm:$0xff]
    %v2327 = vld [vmem:[#allocation8 + $0x18] sm:$0xff]
    %v2328 = vld [vmem:[#allocation8 + $0x20] sm:$0xff]
    %v2329 = vld [vmem:[#allocation8 + $0x28] sm:$0xff]
    %v2330 = vld [vmem:[#allocation8 + $0x30] sm:$0xff]
    %v2331 = vld [vmem:[#allocation8 + $0x38] sm:$0xff]
    %v2332 = vld [vmem:[#allocation8 + $0x40] sm:$0xff]
    %v2333 = vld [vmem:[#allocation8 + $0x48] sm:$0xff]
    %v2334 = vld [vmem:[#allocation8 + $0x50] sm:$0xff]
    %v2335 = vld [vmem:[#allocation8 + $0x58] sm:$0xff]
    %v2336 = vld [vmem:[#allocation8 + $0x60] sm:$0xff]
    %v2337 = vld [vmem:[#allocation8 + $0x68] sm:$0xff]
    %v2338 = vld [vmem:[#allocation8 + $0x70] sm:$0xff]
    %v2339 = vld [vmem:[#allocation8 + $0x78] sm:$0xff]
    %v2340 = vld [vmem:[#allocation8 + $0x80] sm:$0xff]
    %v2341 = vld [vmem:[#allocation8 + $0x88] sm:$0xff]
    %v2342 = vld [vmem:[#allocation8 + $0x90] sm:$0xff]
    %v2343 = vld [vmem:[#allocation8 + $0x98] sm:$0xff]
    %v2344 = vld [vmem:[#allocation8 + $0xa0] sm:$0xff]
    %v2345 = vld [vmem:[#allocation8 + $0xa8] sm:$0xff]
    %v2346 = vld [vmem:[#allocation8 + $0xb0] sm:$0xff]
    %v2347 = vld [vmem:[#allocation8 + $0xb8] sm:$0xff]
    %v2348 = vld [vmem:[#allocation8 + $0xc0] sm:$0xff]
    %v2349 = vld [vmem:[#allocation8 + $0xc8] sm:$0xff]
    %v2350 = vld [vmem:[#allocation8 + $0xd0] sm:$0xff]
    %v2351 = vld [vmem:[#allocation8 + $0xd8] sm:$0xff]
    %v2352 = vld [vmem:[#allocation8 + $0xe0] sm:$0xff]
    %v2353 = vld [vmem:[#allocation8 + $0xe8] sm:$0xff]
    %v2354 = vld [vmem:[#allocation8 + $0xf0] sm:$0xff]
    %v2355 = vld [vmem:[#allocation8 + $0xf8] sm:$0xff]
    %v2388 = vunpack.c.l.b16 %v2324
    %v2389 = vunpack.c.h.b16 %v2324
    %v2390 = vunpack.c.l.b16 %v2325
    %v2391 = vunpack.c.h.b16 %v2325
    %v2392 = vunpack.c.l.b16 %v2326
    %v2393 = vunpack.c.h.b16 %v2326
    %v2394 = vunpack.c.l.b16 %v2327
    %v2395 = vunpack.c.h.b16 %v2327
    %v2396 = vunpack.c.l.b16 %v2328
    %v2397 = vunpack.c.h.b16 %v2328
    %v2398 = vunpack.c.l.b16 %v2329
    %v2399 = vunpack.c.h.b16 %v2329
    %v2400 = vunpack.c.l.b16 %v2330
    %v2401 = vunpack.c.h.b16 %v2330
    %v2402 = vunpack.c.l.b16 %v2331
    %v2403 = vunpack.c.h.b16 %v2331
    %v2404 = vunpack.c.l.b16 %v2332
    %v2405 = vunpack.c.h.b16 %v2332
    %v2406 = vunpack.c.l.b16 %v2333
    %v2407 = vunpack.c.h.b16 %v2333
    %v2408 = vunpack.c.l.b16 %v2334
    %v2409 = vunpack.c.h.b16 %v2334
    %v2410 = vunpack.c.l.b16 %v2335
    %v2411 = vunpack.c.h.b16 %v2335
    %v2412 = vunpack.c.l.b16 %v2336
    %v2413 = vunpack.c.h.b16 %v2336
    %v2414 = vunpack.c.l.b16 %v2337
    %v2415 = vunpack.c.h.b16 %v2337
    %v2416 = vunpack.c.l.b16 %v2338
    %v2417 = vunpack.c.h.b16 %v2338
    %v2418 = vunpack.c.l.b16 %v2339
    %v2419 = vunpack.c.h.b16 %v2339
    %v2420 = vunpack.c.l.b16 %v2340
    %v2421 = vunpack.c.h.b16 %v2340
    %v2422 = vunpack.c.l.b16 %v2341
    %v2423 = vunpack.c.h.b16 %v2341
    %v2424 = vunpack.c.l.b16 %v2342
    %v2425 = vunpack.c.h.b16 %v2342
    %v2426 = vunpack.c.l.b16 %v2343
    %v2427 = vunpack.c.h.b16 %v2343
    %v2428 = vunpack.c.l.b16 %v2344
    %v2429 = vunpack.c.h.b16 %v2344
    %v2430 = vunpack.c.l.b16 %v2345
    %v2431 = vunpack.c.h.b16 %v2345
    %v2432 = vunpack.c.l.b16 %v2346
    %v2433 = vunpack.c.h.b16 %v2346
    %v2434 = vunpack.c.l.b16 %v2347
    %v2435 = vunpack.c.h.b16 %v2347
    %v2436 = vunpack.c.l.b16 %v2348
    %v2437 = vunpack.c.h.b16 %v2348
    %v2438 = vunpack.c.l.b16 %v2349
    %v2439 = vunpack.c.h.b16 %v2349
    %v2440 = vunpack.c.l.b16 %v2350
    %v2441 = vunpack.c.h.b16 %v2350
    %v2442 = vunpack.c.l.b16 %v2351
    %v2443 = vunpack.c.h.b16 %v2351
    %v2444 = vunpack.c.l.b16 %v2352
    %v2445 = vunpack.c.h.b16 %v2352
    %v2446 = vunpack.c.l.b16 %v2353
    %v2447 = vunpack.c.h.b16 %v2353
    %v2448 = vunpack.c.l.b16 %v2354
    %v2449 = vunpack.c.h.b16 %v2354
    %v2450 = vunpack.c.l.b16 %v2355
    %v2451 = vunpack.c.h.b16 %v2355
    %v2452 = vpack.c.b16 %v2392, %v2388
    %v2453 = vpack.c.b16 %v2393, %v2389
    %v2454 = vpack.c.b16 %v2394, %v2390
    %v2455 = vpack.c.b16 %v2395, %v2391
    %v2456 = vpack.c.b16 %v2400, %v2396
    %v2457 = vpack.c.b16 %v2401, %v2397
    %v2458 = vpack.c.b16 %v2402, %v2398
    %v2459 = vpack.c.b16 %v2403, %v2399
    %v2460 = vpack.c.b16 %v2408, %v2404
    %v2461 = vpack.c.b16 %v2409, %v2405
    %v2462 = vpack.c.b16 %v2410, %v2406
    %v2463 = vpack.c.b16 %v2411, %v2407
    %v2464 = vpack.c.b16 %v2416, %v2412
    %v2465 = vpack.c.b16 %v2417, %v2413
    %v2466 = vpack.c.b16 %v2418, %v2414
    %v2467 = vpack.c.b16 %v2419, %v2415
    %v2468 = vpack.c.b16 %v2424, %v2420
    %v2469 = vpack.c.b16 %v2425, %v2421
    %v2470 = vpack.c.b16 %v2426, %v2422
    %v2471 = vpack.c.b16 %v2427, %v2423
    %v2472 = vpack.c.b16 %v2432, %v2428
    %v2473 = vpack.c.b16 %v2433, %v2429
    %v2474 = vpack.c.b16 %v2434, %v2430
    %v2475 = vpack.c.b16 %v2435, %v2431
    %v2476 = vpack.c.b16 %v2440, %v2436
    %v2477 = vpack.c.b16 %v2441, %v2437
    %v2478 = vpack.c.b16 %v2442, %v2438
    %v2479 = vpack.c.b16 %v2443, %v2439
    %v2480 = vpack.c.b16 %v2448, %v2444
    %v2481 = vpack.c.b16 %v2449, %v2445
    %v2482 = vpack.c.b16 %v2450, %v2446
    %v2483 = vpack.c.b16 %v2451, %v2447
    %2516 = vmatprep.subr.bf16.mxu0 %v2481
    %2517 = vmatpush1.bf16.msra.mxu0 %v2480
    %2518 = vmatprep.subr.bf16.mxu0 %v2477
    %2519 = vmatpush1.bf16.msra.mxu0 %v2476
    %2520 = vmatprep.subr.bf16.mxu0 %v2473
    %2521 = vmatpush1.bf16.msra.mxu0 %v2472
    %2522 = vmatprep.subr.bf16.mxu0 %v2469
    %2523 = vmatpush1.bf16.msra.mxu0 %v2468
    %2524 = vmatprep.subr.bf16.mxu0 %v2465
    %2525 = vmatpush1.bf16.msra.mxu0 %v2464
    %2526 = vmatprep.subr.bf16.mxu0 %v2461
    %2527 = vmatpush1.bf16.msra.mxu0 %v2460
    %2528 = vmatprep.subr.bf16.mxu0 %v2457
    %2529 = vmatpush1.bf16.msra.mxu0 %v2456
    %2530 = vmatprep.subr.bf16.mxu0 %v2453
    %2531 = vmatpush1.bf16.msra.mxu0 %v2452
    %2532 = vmatprep.subr.bf16.mxu0 0
    %2533 = vmatpush2.bf16.msra.mxu0 0
    %2534 = vmatprep.subr.bf16.mxu0 0
    %2535 = vmatpush2.bf16.msra.mxu0 0
    %2536 = vmatprep.subr.bf16.mxu0 0
    %2537 = vmatpush2.bf16.msra.mxu0 0
    %2538 = vmatprep.subr.bf16.mxu0 0
    %2539 = vmatpush2.bf16.msra.mxu0 0
    %2540 = vmatprep.subr.bf16.mxu0 0
    %2541 = vmatpush2.bf16.msra.mxu0 0
    %2542 = vmatprep.subr.bf16.mxu0 0
    %2543 = vmatpush2.bf16.msra.mxu0 0
    %2544 = vmatprep.subr.bf16.mxu0 0
    %2545 = vmatpush2.bf16.msra.mxu0 0
    %2546 = vmatprep.subr.bf16.mxu0 0
    %2547 = vmatpush2.bf16.msra.mxu0 0
    %2548 = vmatprep.mubr.bf16.mxu0 0
    %2549 = vmatmul.mubr.bf16.gmra.mxu0 %v2323
    %v2550 = vpop.f32.mrf.mxu0
    %v2551 = vadd.f32 0.0, %v2550
    %v2552 = vpop.f32.mrf.mxu0
    %v2553 = vadd.f32 0.0, %v2552
    %v2554 = vpop.f32.mrf.mxu0
    %v2555 = vpop.f32.mrf.mxu0
    %2556 = vdwg.mxu0
    %2557 = vmatprep.subr.bf16.mxu0 %v2483
    %2558 = vmatpush1.bf16.msra.mxu0 %v2482
    %2559 = vmatprep.subr.bf16.mxu0 %v2479
    %2560 = vmatpush1.bf16.msra.mxu0 %v2478
    %2561 = vmatprep.subr.bf16.mxu0 %v2475
    %2562 = vmatpush1.bf16.msra.mxu0 %v2474
    %2563 = vmatprep.subr.bf16.mxu0 %v2471
    %2564 = vmatpush1.bf16.msra.mxu0 %v2470
    %2565 = vmatprep.subr.bf16.mxu0 %v2467
    %2566 = vmatpush1.bf16.msra.mxu0 %v2466
    %2567 = vmatprep.subr.bf16.mxu0 %v2463
    %2568 = vmatpush1.bf16.msra.mxu0 %v2462
    %2569 = vmatprep.subr.bf16.mxu0 %v2459
    %2570 = vmatpush1.bf16.msra.mxu0 %v2458
    %2571 = vmatprep.subr.bf16.mxu0 %v2455
    %2572 = vmatpush1.bf16.msra.mxu0 %v2454
    %2573 = vmatprep.subr.bf16.mxu0 0
    %2574 = vmatpush2.bf16.msra.mxu0 0
    %2575 = vmatprep.subr.bf16.mxu0 0
    %2576 = vmatpush2.bf16.msra.mxu0 0
    %2577 = vmatprep.subr.bf16.mxu0 0
    %2578 = vmatpush2.bf16.msra.mxu0 0
    %2579 = vmatprep.subr.bf16.mxu0 0
    %2580 = vmatpush2.bf16.msra.mxu0 0
    %2581 = vmatprep.subr.bf16.mxu0 0
    %2582 = vmatpush2.bf16.msra.mxu0 0
    %2583 = vmatprep.subr.bf16.mxu0 0
    %2584 = vmatpush2.bf16.msra.mxu0 0
    %2585 = vmatprep.subr.bf16.mxu0 0
    %2586 = vmatpush2.bf16.msra.mxu0 0
    %2587 = vmatprep.subr.bf16.mxu0 0
    %2588 = vmatpush2.bf16.msra.mxu0 0
    %2589 = vmatprep.mubr.bf16.mxu0 0
    %2590 = vmatmul.mubr.bf16.gmra.mxu0 %v2323
    %v2591 = vpop.f32.mrf.mxu0
    %v2592 = vadd.f32 0.0, %v2591
    %v2593 = vpop.f32.mrf.mxu0
    %v2594 = vadd.f32 0.0, %v2593
    %v2595 = vpop.f32.mrf.mxu0
    %v2596 = vpop.f32.mrf.mxu0
    %2597 = vdwg.mxu0
    %v2598 = vadd.f32 %v2319, %v2551
    %v2599 = vadd.f32 %v2320, %v2553
    %v2600 = vadd.f32 %v2321, %v2592
    %v2601 = vadd.f32 %v2322, %v2594
    %v2602 = vxor.u32 %v2598, 2147483648
    %v2603 = vmul.f32 %v2602, 1.442695
    %v2604 = vpow.pop %v2603
    %v2605 = vadd.f32 %v2604, 1.0
    %v2606 = vrcp.pop %v2605
    %v2607 = vmul.f32 1.0, %v2606
    %v2608 = vxor.u32 %v2599, 2147483648
    %v2609 = vmul.f32 %v2608, 1.442695
    %v2610 = vpow.pop %v2609
    %v2611 = vadd.f32 %v2610, 1.0
    %v2612 = vrcp.pop %v2611
    %v2613 = vmul.f32 1.0, %v2612
    %v2614 = vtanh.pop %v2600
    %v2615 = vxor.u32 %v2601, 2147483648
    %v2616 = vmul.f32 %v2615, 1.442695
    %v2617 = vpow.pop %v2616
    %v2618 = vadd.f32 %v2617, 1.0
    %v2619 = vrcp.pop %v2618
    %v2620 = vmul.f32 1.0, %v2619
    %v2621 = vmul.f32 %v2613, %v2315
    %v2622 = vmul.f32 %v2607, %v2614
    %v2623 = vadd.f32 %v2621, %v2622
    %v2624 = vtanh.pop %v2623
    %v2625 = vmul.f32 %v2620, %v2624
    %2626 = vst [vmem:[#allocation2 + $0x30] sm:$0xff] %v2625
    %v2627 = vld [vmem:[#allocation3 + $0xe0] sm:$0xff]
    %v2628 = vld [vmem:[#allocation3 + $0xe8] sm:$0xff]
    %v2629 = vld [vmem:[#allocation3 + $0xf0] sm:$0xff]
    %v2630 = vld [vmem:[#allocation3 + $0xf8] sm:$0xff]
    %v2631 = vpack.c.bf16 %v2625, %v2625
    %v2632 = vld [vmem:[#allocation8] sm:$0xff]
    %v2633 = vld [vmem:[#allocation8 + $0x8] sm:$0xff]
    %v2634 = vld [vmem:[#allocation8 + $0x10] sm:$0xff]
    %v2635 = vld [vmem:[#allocation8 + $0x18] sm:$0xff]
    %v2636 = vld [vmem:[#allocation8 + $0x20] sm:$0xff]
    %v2637 = vld [vmem:[#allocation8 + $0x28] sm:$0xff]
    %v2638 = vld [vmem:[#allocation8 + $0x30] sm:$0xff]
    %v2639 = vld [vmem:[#allocation8 + $0x38] sm:$0xff]
    %v2640 = vld [vmem:[#allocation8 + $0x40] sm:$0xff]
    %v2641 = vld [vmem:[#allocation8 + $0x48] sm:$0xff]
    %v2642 = vld [vmem:[#allocation8 + $0x50] sm:$0xff]
    %v2643 = vld [vmem:[#allocation8 + $0x58] sm:$0xff]
    %v2644 = vld [vmem:[#allocation8 + $0x60] sm:$0xff]
    %v2645 = vld [vmem:[#allocation8 + $0x68] sm:$0xff]
    %v2646 = vld [vmem:[#allocation8 + $0x70] sm:$0xff]
    %v2647 = vld [vmem:[#allocation8 + $0x78] sm:$0xff]
    %v2648 = vld [vmem:[#allocation8 + $0x80] sm:$0xff]
    %v2649 = vld [vmem:[#allocation8 + $0x88] sm:$0xff]
    %v2650 = vld [vmem:[#allocation8 + $0x90] sm:$0xff]
    %v2651 = vld [vmem:[#allocation8 + $0x98] sm:$0xff]
    %v2652 = vld [vmem:[#allocation8 + $0xa0] sm:$0xff]
    %v2653 = vld [vmem:[#allocation8 + $0xa8] sm:$0xff]
    %v2654 = vld [vmem:[#allocation8 + $0xb0] sm:$0xff]
    %v2655 = vld [vmem:[#allocation8 + $0xb8] sm:$0xff]
    %v2656 = vld [vmem:[#allocation8 + $0xc0] sm:$0xff]
    %v2657 = vld [vmem:[#allocation8 + $0xc8] sm:$0xff]
    %v2658 = vld [vmem:[#allocation8 + $0xd0] sm:$0xff]
    %v2659 = vld [vmem:[#allocation8 + $0xd8] sm:$0xff]
    %v2660 = vld [vmem:[#allocation8 + $0xe0] sm:$0xff]
    %v2661 = vld [vmem:[#allocation8 + $0xe8] sm:$0xff]
    %v2662 = vld [vmem:[#allocation8 + $0xf0] sm:$0xff]
    %v2663 = vld [vmem:[#allocation8 + $0xf8] sm:$0xff]
    %v2696 = vunpack.c.l.b16 %v2632
    %v2697 = vunpack.c.h.b16 %v2632
    %v2698 = vunpack.c.l.b16 %v2633
    %v2699 = vunpack.c.h.b16 %v2633
    %v2700 = vunpack.c.l.b16 %v2634
    %v2701 = vunpack.c.h.b16 %v2634
    %v2702 = vunpack.c.l.b16 %v2635
    %v2703 = vunpack.c.h.b16 %v2635
    %v2704 = vunpack.c.l.b16 %v2636
    %v2705 = vunpack.c.h.b16 %v2636
    %v2706 = vunpack.c.l.b16 %v2637
    %v2707 = vunpack.c.h.b16 %v2637
    %v2708 = vunpack.c.l.b16 %v2638
    %v2709 = vunpack.c.h.b16 %v2638
    %v2710 = vunpack.c.l.b16 %v2639
    %v2711 = vunpack.c.h.b16 %v2639
    %v2712 = vunpack.c.l.b16 %v2640
    %v2713 = vunpack.c.h.b16 %v2640
    %v2714 = vunpack.c.l.b16 %v2641
    %v2715 = vunpack.c.h.b16 %v2641
    %v2716 = vunpack.c.l.b16 %v2642
    %v2717 = vunpack.c.h.b16 %v2642
    %v2718 = vunpack.c.l.b16 %v2643
    %v2719 = vunpack.c.h.b16 %v2643
    %v2720 = vunpack.c.l.b16 %v2644
    %v2721 = vunpack.c.h.b16 %v2644
    %v2722 = vunpack.c.l.b16 %v2645
    %v2723 = vunpack.c.h.b16 %v2645
    %v2724 = vunpack.c.l.b16 %v2646
    %v2725 = vunpack.c.h.b16 %v2646
    %v2726 = vunpack.c.l.b16 %v2647
    %v2727 = vunpack.c.h.b16 %v2647
    %v2728 = vunpack.c.l.b16 %v2648
    %v2729 = vunpack.c.h.b16 %v2648
    %v2730 = vunpack.c.l.b16 %v2649
    %v2731 = vunpack.c.h.b16 %v2649
    %v2732 = vunpack.c.l.b16 %v2650
    %v2733 = vunpack.c.h.b16 %v2650
    %v2734 = vunpack.c.l.b16 %v2651
    %v2735 = vunpack.c.h.b16 %v2651
    %v2736 = vunpack.c.l.b16 %v2652
    %v2737 = vunpack.c.h.b16 %v2652
    %v2738 = vunpack.c.l.b16 %v2653
    %v2739 = vunpack.c.h.b16 %v2653
    %v2740 = vunpack.c.l.b16 %v2654
    %v2741 = vunpack.c.h.b16 %v2654
    %v2742 = vunpack.c.l.b16 %v2655
    %v2743 = vunpack.c.h.b16 %v2655
    %v2744 = vunpack.c.l.b16 %v2656
    %v2745 = vunpack.c.h.b16 %v2656
    %v2746 = vunpack.c.l.b16 %v2657
    %v2747 = vunpack.c.h.b16 %v2657
    %v2748 = vunpack.c.l.b16 %v2658
    %v2749 = vunpack.c.h.b16 %v2658
    %v2750 = vunpack.c.l.b16 %v2659
    %v2751 = vunpack.c.h.b16 %v2659
    %v2752 = vunpack.c.l.b16 %v2660
    %v2753 = vunpack.c.h.b16 %v2660
    %v2754 = vunpack.c.l.b16 %v2661
    %v2755 = vunpack.c.h.b16 %v2661
    %v2756 = vunpack.c.l.b16 %v2662
    %v2757 = vunpack.c.h.b16 %v2662
    %v2758 = vunpack.c.l.b16 %v2663
    %v2759 = vunpack.c.h.b16 %v2663
    %v2760 = vpack.c.b16 %v2700, %v2696
    %v2761 = vpack.c.b16 %v2701, %v2697
    %v2762 = vpack.c.b16 %v2702, %v2698
    %v2763 = vpack.c.b16 %v2703, %v2699
    %v2764 = vpack.c.b16 %v2708, %v2704
    %v2765 = vpack.c.b16 %v2709, %v2705
    %v2766 = vpack.c.b16 %v2710, %v2706
    %v2767 = vpack.c.b16 %v2711, %v2707
    %v2768 = vpack.c.b16 %v2716, %v2712
    %v2769 = vpack.c.b16 %v2717, %v2713
    %v2770 = vpack.c.b16 %v2718, %v2714
    %v2771 = vpack.c.b16 %v2719, %v2715
    %v2772 = vpack.c.b16 %v2724, %v2720
    %v2773 = vpack.c.b16 %v2725, %v2721
    %v2774 = vpack.c.b16 %v2726, %v2722
    %v2775 = vpack.c.b16 %v2727, %v2723
    %v2776 = vpack.c.b16 %v2732, %v2728
    %v2777 = vpack.c.b16 %v2733, %v2729
    %v2778 = vpack.c.b16 %v2734, %v2730
    %v2779 = vpack.c.b16 %v2735, %v2731
    %v2780 = vpack.c.b16 %v2740, %v2736
    %v2781 = vpack.c.b16 %v2741, %v2737
    %v2782 = vpack.c.b16 %v2742, %v2738
    %v2783 = vpack.c.b16 %v2743, %v2739
    %v2784 = vpack.c.b16 %v2748, %v2744
    %v2785 = vpack.c.b16 %v2749, %v2745
    %v2786 = vpack.c.b16 %v2750, %v2746
    %v2787 = vpack.c.b16 %v2751, %v2747
    %v2788 = vpack.c.b16 %v2756, %v2752
    %v2789 = vpack.c.b16 %v2757, %v2753
    %v2790 = vpack.c.b16 %v2758, %v2754
    %v2791 = vpack.c.b16 %v2759, %v2755
    %2824 = vmatprep.subr.bf16.mxu0 %v2789
    %2825 = vmatpush1.bf16.msra.mxu0 %v2788
    %2826 = vmatprep.subr.bf16.mxu0 %v2785
    %2827 = vmatpush1.bf16.msra.mxu0 %v2784
    %2828 = vmatprep.subr.bf16.mxu0 %v2781
    %2829 = vmatpush1.bf16.msra.mxu0 %v2780
    %2830 = vmatprep.subr.bf16.mxu0 %v2777
    %2831 = vmatpush1.bf16.msra.mxu0 %v2776
    %2832 = vmatprep.subr.bf16.mxu0 %v2773
    %2833 = vmatpush1.bf16.msra.mxu0 %v2772
    %2834 = vmatprep.subr.bf16.mxu0 %v2769
    %2835 = vmatpush1.bf16.msra.mxu0 %v2768
    %2836 = vmatprep.subr.bf16.mxu0 %v2765
    %2837 = vmatpush1.bf16.msra.mxu0 %v2764
    %2838 = vmatprep.subr.bf16.mxu0 %v2761
    %2839 = vmatpush1.bf16.msra.mxu0 %v2760
    %2840 = vmatprep.subr.bf16.mxu0 0
    %2841 = vmatpush2.bf16.msra.mxu0 0
    %2842 = vmatprep.subr.bf16.mxu0 0
    %2843 = vmatpush2.bf16.msra.mxu0 0
    %2844 = vmatprep.subr.bf16.mxu0 0
    %2845 = vmatpush2.bf16.msra.mxu0 0
    %2846 = vmatprep.subr.bf16.mxu0 0
    %2847 = vmatpush2.bf16.msra.mxu0 0
    %2848 = vmatprep.subr.bf16.mxu0 0
    %2849 = vmatpush2.bf16.msra.mxu0 0
    %2850 = vmatprep.subr.bf16.mxu0 0
    %2851 = vmatpush2.bf16.msra.mxu0 0
    %2852 = vmatprep.subr.bf16.mxu0 0
    %2853 = vmatpush2.bf16.msra.mxu0 0
    %2854 = vmatprep.subr.bf16.mxu0 0
    %2855 = vmatpush2.bf16.msra.mxu0 0
    %2856 = vmatprep.mubr.bf16.mxu0 0
    %2857 = vmatmul.mubr.bf16.gmra.mxu0 %v2631
    %v2858 = vpop.f32.mrf.mxu0
    %v2859 = vadd.f32 0.0, %v2858
    %v2860 = vpop.f32.mrf.mxu0
    %v2861 = vadd.f32 0.0, %v2860
    %v2862 = vpop.f32.mrf.mxu0
    %v2863 = vpop.f32.mrf.mxu0
    %2864 = vdwg.mxu0
    %2865 = vmatprep.subr.bf16.mxu0 %v2791
    %2866 = vmatpush1.bf16.msra.mxu0 %v2790
    %2867 = vmatprep.subr.bf16.mxu0 %v2787
    %2868 = vmatpush1.bf16.msra.mxu0 %v2786
    %2869 = vmatprep.subr.bf16.mxu0 %v2783
    %2870 = vmatpush1.bf16.msra.mxu0 %v2782
    %2871 = vmatprep.subr.bf16.mxu0 %v2779
    %2872 = vmatpush1.bf16.msra.mxu0 %v2778
    %2873 = vmatprep.subr.bf16.mxu0 %v2775
    %2874 = vmatpush1.bf16.msra.mxu0 %v2774
    %2875 = vmatprep.subr.bf16.mxu0 %v2771
    %2876 = vmatpush1.bf16.msra.mxu0 %v2770
    %2877 = vmatprep.subr.bf16.mxu0 %v2767
    %2878 = vmatpush1.bf16.msra.mxu0 %v2766
    %2879 = vmatprep.subr.bf16.mxu0 %v2763
    %2880 = vmatpush1.bf16.msra.mxu0 %v2762
    %2881 = vmatprep.subr.bf16.mxu0 0
    %2882 = vmatpush2.bf16.msra.mxu0 0
    %2883 = vmatprep.subr.bf16.mxu0 0
    %2884 = vmatpush2.bf16.msra.mxu0 0
    %2885 = vmatprep.subr.bf16.mxu0 0
    %2886 = vmatpush2.bf16.msra.mxu0 0
    %2887 = vmatprep.subr.bf16.mxu0 0
    %2888 = vmatpush2.bf16.msra.mxu0 0
    %2889 = vmatprep.subr.bf16.mxu0 0
    %2890 = vmatpush2.bf16.msra.mxu0 0
    %2891 = vmatprep.subr.bf16.mxu0 0
    %2892 = vmatpush2.bf16.msra.mxu0 0
    %2893 = vmatprep.subr.bf16.mxu0 0
    %2894 = vmatpush2.bf16.msra.mxu0 0
    %2895 = vmatprep.subr.bf16.mxu0 0
    %2896 = vmatpush2.bf16.msra.mxu0 0
    %2897 = vmatprep.mubr.bf16.mxu0 0
    %2898 = vmatmul.mubr.bf16.gmra.mxu0 %v2631
    %v2899 = vpop.f32.mrf.mxu0
    %v2900 = vadd.f32 0.0, %v2899
    %v2901 = vpop.f32.mrf.mxu0
    %v2902 = vadd.f32 0.0, %v2901
    %v2903 = vpop.f32.mrf.mxu0
    %v2904 = vpop.f32.mrf.mxu0
    %2905 = vdwg.mxu0
    %v2906 = vadd.f32 %v2627, %v2859
    %v2907 = vadd.f32 %v2628, %v2861
    %v2908 = vadd.f32 %v2629, %v2900
    %v2909 = vadd.f32 %v2630, %v2902
    %v2910 = vxor.u32 %v2906, 2147483648
    %v2911 = vmul.f32 %v2910, 1.442695
    %v2912 = vpow.pop %v2911
    %v2913 = vadd.f32 %v2912, 1.0
    %v2914 = vrcp.pop %v2913
    %v2915 = vmul.f32 1.0, %v2914
    %v2916 = vxor.u32 %v2907, 2147483648
    %v2917 = vmul.f32 %v2916, 1.442695
    %v2918 = vpow.pop %v2917
    %v2919 = vadd.f32 %v2918, 1.0
    %v2920 = vrcp.pop %v2919
    %v2921 = vmul.f32 1.0, %v2920
    %v2922 = vtanh.pop %v2908
    %v2923 = vxor.u32 %v2909, 2147483648
    %v2924 = vmul.f32 %v2923, 1.442695
    %v2925 = vpow.pop %v2924
    %v2926 = vadd.f32 %v2925, 1.0
    %v2927 = vrcp.pop %v2926
    %v2928 = vmul.f32 1.0, %v2927
    %v2929 = vmul.f32 %v2921, %v2623
    %v2930 = vmul.f32 %v2915, %v2922
    %v2931 = vadd.f32 %v2929, %v2930
    %v2932 = vtanh.pop %v2931
    %v2933 = vmul.f32 %v2928, %v2932
    %2934 = vst [vmem:[#allocation2 + $0x38] sm:$0xff] %v2933
    %v2935 = vld [vmem:[#allocation2] sm:$0xff]
    %v2936 = vld [vmem:[#allocation2 + $0x8] sm:$0xff]
    %v2937 = vld [vmem:[#allocation2 + $0x10] sm:$0xff]
    %v2938 = vld [vmem:[#allocation2 + $0x18] sm:$0xff]
    %v2939 = vld [vmem:[#allocation2 + $0x20] sm:$0xff]
    %v2940 = vld [vmem:[#allocation2 + $0x28] sm:$0xff]
    %v2941 = vld [vmem:[#allocation2 + $0x30] sm:$0xff]
    %v2942 = vld [vmem:[#allocation2 + $0x38] sm:$0xff]
    %v2943 = vld [vmem:[#allocation6] sm:$0xff]
    %v2944 = vld [vmem:[#allocation6 + $0x8] sm:$0xff]
    %v2945 = vld [vmem:[#allocation6 + $0x10] sm:$0xff]
    %v2946 = vld [vmem:[#allocation6 + $0x18] sm:$0xff]
    %v2947 = vld [vmem:[#allocation6 + $0x20] sm:$0xff]
    %v2948 = vld [vmem:[#allocation6 + $0x28] sm:$0xff]
    %v2949 = vld [vmem:[#allocation6 + $0x30] sm:$0xff]
    %v2950 = vld [vmem:[#allocation6 + $0x38] sm:$0xff]
    %v2951 = vld [vmem:[#allocation6 + $0x40] sm:$0xff]
    %v2952 = vld [vmem:[#allocation6 + $0x48] sm:$0xff]
    %v2953 = vld [vmem:[#allocation6 + $0x50] sm:$0xff]
    %v2954 = vld [vmem:[#allocation6 + $0x58] sm:$0xff]
    %v2955 = vld [vmem:[#allocation6 + $0x60] sm:$0xff]
    %v2956 = vld [vmem:[#allocation6 + $0x68] sm:$0xff]
    %v2957 = vld [vmem:[#allocation6 + $0x70] sm:$0xff]
    %v2958 = vld [vmem:[#allocation6 + $0x78] sm:$0xff]
    %v2959 = vld [vmem:[#allocation6 + $0x80] sm:$0xff]
    %v2960 = vld [vmem:[#allocation6 + $0x88] sm:$0xff]
    %v2961 = vld [vmem:[#allocation6 + $0x90] sm:$0xff]
    %v2962 = vld [vmem:[#allocation6 + $0x98] sm:$0xff]
    %v2963 = vld [vmem:[#allocation6 + $0xa0] sm:$0xff]
    %v2964 = vld [vmem:[#allocation6 + $0xa8] sm:$0xff]
    %v2965 = vld [vmem:[#allocation6 + $0xb0] sm:$0xff]
    %v2966 = vld [vmem:[#allocation6 + $0xb8] sm:$0xff]
    %v2967 = vld [vmem:[#allocation6 + $0xc0] sm:$0xff]
    %v2968 = vld [vmem:[#allocation6 + $0xc8] sm:$0xff]
    %v2969 = vld [vmem:[#allocation6 + $0xd0] sm:$0xff]
    %v2970 = vld [vmem:[#allocation6 + $0xd8] sm:$0xff]
    %v2971 = vld [vmem:[#allocation6 + $0xe0] sm:$0xff]
    %v2972 = vld [vmem:[#allocation6 + $0xe8] sm:$0xff]
    %v2973 = vld [vmem:[#allocation6 + $0xf0] sm:$0xff]
    %v2974 = vld [vmem:[#allocation6 + $0xf8] sm:$0xff]
    %v2975 = vpack.c.bf16 %v2936, %v2935
    %v2976 = vpack.c.bf16 %v2938, %v2937
    %v2977 = vpack.c.bf16 %v2940, %v2939
    %v2978 = vpack.c.bf16 %v2942, %v2941
    %s2979 = scalar_lea.vmem %s4, 4
    %v2980 = vld [vmem:[%s2979] sm:$0xf]
    %v2982 = vlaneseq
    %v2983 = vshrl.u32 %v2982, 7
    %v2984 = vsub.s32 0, %v2983
    %v2985 = vrot.slane %v2980, %v2984
    %v2986 = vlaneseq
    %v2987 = vshrl.u32 %v2986, 7
    %v2988 = vsub.s32 1, %v2987
    %v2989 = vrot.slane %v2980, %v2988
    %v2990 = vlaneseq
    %v2991 = vshrl.u32 %v2990, 7
    %v2992 = vsub.s32 2, %v2991
    %v2993 = vrot.slane %v2980, %v2992
    %v2994 = vlaneseq
    %v2995 = vshrl.u32 %v2994, 7
    %v2996 = vsub.s32 3, %v2995
    %v2997 = vrot.slane %v2980, %v2996
    %v3034 = vunpack.c.l.b16 %v2943
    %v3035 = vunpack.c.h.b16 %v2943
    %v3036 = vunpack.c.l.b16 %v2944
    %v3037 = vunpack.c.h.b16 %v2944
    %v3038 = vunpack.c.l.b16 %v2945
    %v3039 = vunpack.c.h.b16 %v2945
    %v3040 = vunpack.c.l.b16 %v2946
    %v3041 = vunpack.c.h.b16 %v2946
    %v3042 = vunpack.c.l.b16 %v2947
    %v3043 = vunpack.c.h.b16 %v2947
    %v3044 = vunpack.c.l.b16 %v2948
    %v3045 = vunpack.c.h.b16 %v2948
    %v3046 = vunpack.c.l.b16 %v2949
    %v3047 = vunpack.c.h.b16 %v2949
    %v3048 = vunpack.c.l.b16 %v2950
    %v3049 = vunpack.c.h.b16 %v2950
    %v3050 = vunpack.c.l.b16 %v2951
    %v3051 = vunpack.c.h.b16 %v2951
    %v3052 = vunpack.c.l.b16 %v2952
    %v3053 = vunpack.c.h.b16 %v2952
    %v3054 = vunpack.c.l.b16 %v2953
    %v3055 = vunpack.c.h.b16 %v2953
    %v3056 = vunpack.c.l.b16 %v2954
    %v3057 = vunpack.c.h.b16 %v2954
    %v3058 = vunpack.c.l.b16 %v2955
    %v3059 = vunpack.c.h.b16 %v2955
    %v3060 = vunpack.c.l.b16 %v2956
    %v3061 = vunpack.c.h.b16 %v2956
    %v3062 = vunpack.c.l.b16 %v2957
    %v3063 = vunpack.c.h.b16 %v2957
    %v3064 = vunpack.c.l.b16 %v2958
    %v3065 = vunpack.c.h.b16 %v2958
    %v3066 = vunpack.c.l.b16 %v2959
    %v3067 = vunpack.c.h.b16 %v2959
    %v3068 = vunpack.c.l.b16 %v2960
    %v3069 = vunpack.c.h.b16 %v2960
    %v3070 = vunpack.c.l.b16 %v2961
    %v3071 = vunpack.c.h.b16 %v2961
    %v3072 = vunpack.c.l.b16 %v2962
    %v3073 = vunpack.c.h.b16 %v2962
    %v3074 = vunpack.c.l.b16 %v2963
    %v3075 = vunpack.c.h.b16 %v2963
    %v3076 = vunpack.c.l.b16 %v2964
    %v3077 = vunpack.c.h.b16 %v2964
    %v3078 = vunpack.c.l.b16 %v2965
    %v3079 = vunpack.c.h.b16 %v2965
    %v3080 = vunpack.c.l.b16 %v2966
    %v3081 = vunpack.c.h.b16 %v2966
    %v3082 = vunpack.c.l.b16 %v2967
    %v3083 = vunpack.c.h.b16 %v2967
    %v3084 = vunpack.c.l.b16 %v2968
    %v3085 = vunpack.c.h.b16 %v2968
    %v3086 = vunpack.c.l.b16 %v2969
    %v3087 = vunpack.c.h.b16 %v2969
    %v3088 = vunpack.c.l.b16 %v2970
    %v3089 = vunpack.c.h.b16 %v2970
    %v3090 = vunpack.c.l.b16 %v2971
    %v3091 = vunpack.c.h.b16 %v2971
    %v3092 = vunpack.c.l.b16 %v2972
    %v3093 = vunpack.c.h.b16 %v2972
    %v3094 = vunpack.c.l.b16 %v2973
    %v3095 = vunpack.c.h.b16 %v2973
    %v3096 = vunpack.c.l.b16 %v2974
    %v3097 = vunpack.c.h.b16 %v2974
    %v3098 = vpack.c.b16 %v3038, %v3034
    %v3099 = vpack.c.b16 %v3039, %v3035
    %v3100 = vpack.c.b16 %v3040, %v3036
    %v3101 = vpack.c.b16 %v3041, %v3037
    %v3102 = vpack.c.b16 %v3046, %v3042
    %v3103 = vpack.c.b16 %v3047, %v3043
    %v3104 = vpack.c.b16 %v3048, %v3044
    %v3105 = vpack.c.b16 %v3049, %v3045
    %v3106 = vpack.c.b16 %v3054, %v3050
    %v3107 = vpack.c.b16 %v3055, %v3051
    %v3108 = vpack.c.b16 %v3056, %v3052
    %v3109 = vpack.c.b16 %v3057, %v3053
    %v3110 = vpack.c.b16 %v3062, %v3058
    %v3111 = vpack.c.b16 %v3063, %v3059
    %v3112 = vpack.c.b16 %v3064, %v3060
    %v3113 = vpack.c.b16 %v3065, %v3061
    %v3114 = vpack.c.b16 %v3070, %v3066
    %v3115 = vpack.c.b16 %v3071, %v3067
    %v3116 = vpack.c.b16 %v3072, %v3068
    %v3117 = vpack.c.b16 %v3073, %v3069
    %v3118 = vpack.c.b16 %v3078, %v3074
    %v3119 = vpack.c.b16 %v3079, %v3075
    %v3120 = vpack.c.b16 %v3080, %v3076
    %v3121 = vpack.c.b16 %v3081, %v3077
    %v3122 = vpack.c.b16 %v3086, %v3082
    %v3123 = vpack.c.b16 %v3087, %v3083
    %v3124 = vpack.c.b16 %v3088, %v3084
    %v3125 = vpack.c.b16 %v3089, %v3085
    %v3126 = vpack.c.b16 %v3094, %v3090
    %v3127 = vpack.c.b16 %v3095, %v3091
    %v3128 = vpack.c.b16 %v3096, %v3092
    %v3129 = vpack.c.b16 %v3097, %v3093
    %3162 = vmatprep.subr.bf16.mxu0 %v3127
    %3163 = vmatpush1.bf16.msra.mxu0 %v3126
    %3164 = vmatprep.subr.bf16.mxu0 %v3123
    %3165 = vmatpush1.bf16.msra.mxu0 %v3122
    %3166 = vmatprep.subr.bf16.mxu0 %v3119
    %3167 = vmatpush1.bf16.msra.mxu0 %v3118
    %3168 = vmatprep.subr.bf16.mxu0 %v3115
    %3169 = vmatpush1.bf16.msra.mxu0 %v3114
    %3170 = vmatprep.subr.bf16.mxu0 %v3111
    %3171 = vmatpush1.bf16.msra.mxu0 %v3110
    %3172 = vmatprep.subr.bf16.mxu0 %v3107
    %3173 = vmatpush1.bf16.msra.mxu0 %v3106
    %3174 = vmatprep.subr.bf16.mxu0 %v3103
    %3175 = vmatpush1.bf16.msra.mxu0 %v3102
    %3176 = vmatprep.subr.bf16.mxu0 %v3099
    %3177 = vmatpush1.bf16.msra.mxu0 %v3098
    %3178 = vmatprep.subr.bf16.mxu0 0
    %3179 = vmatpush2.bf16.msra.mxu0 0
    %3180 = vmatprep.subr.bf16.mxu0 0
    %3181 = vmatpush2.bf16.msra.mxu0 0
    %3182 = vmatprep.subr.bf16.mxu0 0
    %3183 = vmatpush2.bf16.msra.mxu0 0
    %3184 = vmatprep.subr.bf16.mxu0 0
    %3185 = vmatpush2.bf16.msra.mxu0 0
    %3186 = vmatprep.subr.bf16.mxu0 0
    %3187 = vmatpush2.bf16.msra.mxu0 0
    %3188 = vmatprep.subr.bf16.mxu0 0
    %3189 = vmatpush2.bf16.msra.mxu0 0
    %3190 = vmatprep.subr.bf16.mxu0 0
    %3191 = vmatpush2.bf16.msra.mxu0 0
    %3192 = vmatprep.subr.bf16.mxu0 0
    %3193 = vmatpush2.bf16.msra.mxu0 0
    %3194 = vmatprep.mubr.bf16.mxu0 0
    %3195 = vmatmul.mubr.bf16.gmra.mxu0 %v2975
    %v3196 = vpop.f32.mrf.mxu0
    %v3197 = vadd.f32 %v2985, %v3196
    %v3198 = vpop.f32.mrf.mxu0
    %v3199 = vadd.f32 %v2989, %v3198
    %v3200 = vpop.f32.mrf.mxu0
    %v3201 = vadd.f32 %v2985, %v3200
    %v3202 = vpop.f32.mrf.mxu0
    %v3203 = vadd.f32 %v2989, %v3202
    %3204 = vmatprep.mubr.bf16.mxu0 0
    %3205 = vmatmul.mubr.bf16.gmra.mxu0 %v2976
    %v3206 = vpop.f32.mrf.mxu0
    %v3207 = vadd.f32 %v2985, %v3206
    %v3208 = vpop.f32.mrf.mxu0
    %v3209 = vadd.f32 %v2989, %v3208
    %v3210 = vpop.f32.mrf.mxu0
    %v3211 = vadd.f32 %v2985, %v3210
    %v3212 = vpop.f32.mrf.mxu0
    %v3213 = vadd.f32 %v2989, %v3212
    %3214 = vmatprep.mubr.bf16.mxu0 0
    %3215 = vmatmul.mubr.bf16.gmra.mxu0 %v2977
    %v3216 = vpop.f32.mrf.mxu0
    %v3217 = vadd.f32 %v2985, %v3216
    %v3218 = vpop.f32.mrf.mxu0
    %v3219 = vadd.f32 %v2989, %v3218
    %v3220 = vpop.f32.mrf.mxu0
    %v3221 = vadd.f32 %v2985, %v3220
    %v3222 = vpop.f32.mrf.mxu0
    %v3223 = vadd.f32 %v2989, %v3222
    %3224 = vmatprep.mubr.bf16.mxu0 0
    %3225 = vmatmul.mubr.bf16.gmra.mxu0 %v2978
    %v3226 = vpop.f32.mrf.mxu0
    %v3227 = vadd.f32 %v2985, %v3226
    %v3228 = vpop.f32.mrf.mxu0
    %v3229 = vadd.f32 %v2989, %v3228
    %v3230 = vpop.f32.mrf.mxu0
    %v3231 = vadd.f32 %v2985, %v3230
    %v3232 = vpop.f32.mrf.mxu0
    %v3233 = vadd.f32 %v2989, %v3232
    %3234 = vdwg.mxu0
    %3235 = vmatprep.subr.bf16.mxu0 %v3129
    %3236 = vmatpush1.bf16.msra.mxu0 %v3128
    %3237 = vmatprep.subr.bf16.mxu0 %v3125
    %3238 = vmatpush1.bf16.msra.mxu0 %v3124
    %3239 = vmatprep.subr.bf16.mxu0 %v3121
    %3240 = vmatpush1.bf16.msra.mxu0 %v3120
    %3241 = vmatprep.subr.bf16.mxu0 %v3117
    %3242 = vmatpush1.bf16.msra.mxu0 %v3116
    %3243 = vmatprep.subr.bf16.mxu0 %v3113
    %3244 = vmatpush1.bf16.msra.mxu0 %v3112
    %3245 = vmatprep.subr.bf16.mxu0 %v3109
    %3246 = vmatpush1.bf16.msra.mxu0 %v3108
    %3247 = vmatprep.subr.bf16.mxu0 %v3105
    %3248 = vmatpush1.bf16.msra.mxu0 %v3104
    %3249 = vmatprep.subr.bf16.mxu0 %v3101
    %3250 = vmatpush1.bf16.msra.mxu0 %v3100
    %3251 = vmatprep.subr.bf16.mxu0 0
    %3252 = vmatpush2.bf16.msra.mxu0 0
    %3253 = vmatprep.subr.bf16.mxu0 0
    %3254 = vmatpush2.bf16.msra.mxu0 0
    %3255 = vmatprep.subr.bf16.mxu0 0
    %3256 = vmatpush2.bf16.msra.mxu0 0
    %3257 = vmatprep.subr.bf16.mxu0 0
    %3258 = vmatpush2.bf16.msra.mxu0 0
    %3259 = vmatprep.subr.bf16.mxu0 0
    %3260 = vmatpush2.bf16.msra.mxu0 0
    %3261 = vmatprep.subr.bf16.mxu0 0
    %3262 = vmatpush2.bf16.msra.mxu0 0
    %3263 = vmatprep.subr.bf16.mxu0 0
    %3264 = vmatpush2.bf16.msra.mxu0 0
    %3265 = vmatprep.subr.bf16.mxu0 0
    %3266 = vmatpush2.bf16.msra.mxu0 0
    %3267 = vmatprep.mubr.bf16.mxu0 0
    %3268 = vmatmul.mubr.bf16.gmra.mxu0 %v2975
    %v3269 = vpop.f32.mrf.mxu0
    %v3270 = vadd.f32 %v2993, %v3269
    %v3271 = vpop.f32.mrf.mxu0
    %v3272 = vadd.f32 %v2997, %v3271
    %v3273 = vpop.f32.mrf.mxu0
    %v3274 = vadd.f32 %v2993, %v3273
    %v3275 = vpop.f32.mrf.mxu0
    %v3276 = vadd.f32 %v2997, %v3275
    %3277 = vmatprep.mubr.bf16.mxu0 0
    %3278 = vmatmul.mubr.bf16.gmra.mxu0 %v2976
    %v3279 = vpop.f32.mrf.mxu0
    %v3280 = vadd.f32 %v2993, %v3279
    %v3281 = vpop.f32.mrf.mxu0
    %v3282 = vadd.f32 %v2997, %v3281
    %v3283 = vpop.f32.mrf.mxu0
    %v3284 = vadd.f32 %v2993, %v3283
    %v3285 = vpop.f32.mrf.mxu0
    %v3286 = vadd.f32 %v2997, %v3285
    %3287 = vmatprep.mubr.bf16.mxu0 0
    %3288 = vmatmul.mubr.bf16.gmra.mxu0 %v2977
    %v3289 = vpop.f32.mrf.mxu0
    %v3290 = vadd.f32 %v2993, %v3289
    %v3291 = vpop.f32.mrf.mxu0
    %v3292 = vadd.f32 %v2997, %v3291
    %v3293 = vpop.f32.mrf.mxu0
    %v3294 = vadd.f32 %v2993, %v3293
    %v3295 = vpop.f32.mrf.mxu0
    %v3296 = vadd.f32 %v2997, %v3295
    %3297 = vmatprep.mubr.bf16.mxu0 0
    %3298 = vmatmul.mubr.bf16.gmra.mxu0 %v2978
    %v3299 = vpop.f32.mrf.mxu0
    %v3300 = vadd.f32 %v2993, %v3299
    %v3301 = vpop.f32.mrf.mxu0
    %v3302 = vadd.f32 %v2997, %v3301
    %v3303 = vpop.f32.mrf.mxu0
    %v3304 = vadd.f32 %v2993, %v3303
    %v3305 = vpop.f32.mrf.mxu0
    %v3306 = vadd.f32 %v2997, %v3305
    %3307 = vdwg.mxu0
    %3308 = vst [vmem:[#allocation3] sm:$0xff] %v3197
    %3309 = vst [vmem:[#allocation3 + $0x8] sm:$0xff] %v3199
    %3310 = vst [vmem:[#allocation3 + $0x10] sm:$0xff] %v3270
    %3311 = vst [vmem:[#allocation3 + $0x18] sm:$0xff] %v3272
    %3312 = vst [vmem:[#allocation3 + $0x20] sm:$0xff] %v3201
    %3313 = vst [vmem:[#allocation3 + $0x28] sm:$0xff] %v3203
    %3314 = vst [vmem:[#allocation3 + $0x30] sm:$0xff] %v3274
    %3315 = vst [vmem:[#allocation3 + $0x38] sm:$0xff] %v3276
    %3316 = vst [vmem:[#allocation3 + $0x40] sm:$0xff] %v3207
    %3317 = vst [vmem:[#allocation3 + $0x48] sm:$0xff] %v3209
    %3318 = vst [vmem:[#allocation3 + $0x50] sm:$0xff] %v3280
    %3319 = vst [vmem:[#allocation3 + $0x58] sm:$0xff] %v3282
    %3320 = vst [vmem:[#allocation3 + $0x60] sm:$0xff] %v3211
    %3321 = vst [vmem:[#allocation3 + $0x68] sm:$0xff] %v3213
    %3322 = vst [vmem:[#allocation3 + $0x70] sm:$0xff] %v3284
    %3323 = vst [vmem:[#allocation3 + $0x78] sm:$0xff] %v3286
    %3324 = vst [vmem:[#allocation3 + $0x80] sm:$0xff] %v3217
    %3325 = vst [vmem:[#allocation3 + $0x88] sm:$0xff] %v3219
    %3326 = vst [vmem:[#allocation3 + $0x90] sm:$0xff] %v3290
    %3327 = vst [vmem:[#allocation3 + $0x98] sm:$0xff] %v3292
    %3328 = vst [vmem:[#allocation3 + $0xa0] sm:$0xff] %v3221
    %3329 = vst [vmem:[#allocation3 + $0xa8] sm:$0xff] %v3223
    %3330 = vst [vmem:[#allocation3 + $0xb0] sm:$0xff] %v3294
    %3331 = vst [vmem:[#allocation3 + $0xb8] sm:$0xff] %v3296
    %3332 = vst [vmem:[#allocation3 + $0xc0] sm:$0xff] %v3227
    %3333 = vst [vmem:[#allocation3 + $0xc8] sm:$0xff] %v3229
    %3334 = vst [vmem:[#allocation3 + $0xd0] sm:$0xff] %v3300
    %3335 = vst [vmem:[#allocation3 + $0xd8] sm:$0xff] %v3302
    %3336 = vst [vmem:[#allocation3 + $0xe0] sm:$0xff] %v3231
    %3337 = vst [vmem:[#allocation3 + $0xe8] sm:$0xff] %v3233
    %3338 = vst [vmem:[#allocation3 + $0xf0] sm:$0xff] %v3304
    %3339 = vst [vmem:[#allocation3 + $0xf8] sm:$0xff] %v3306
    %v3340 = vld [vmem:[#allocation3] sm:$0xff]
    %v3341 = vld [vmem:[#allocation3 + $0x8] sm:$0xff]
    %v3342 = vld [vmem:[#allocation3 + $0x10] sm:$0xff]
    %v3343 = vld [vmem:[#allocation3 + $0x18] sm:$0xff]
    %s3344 = scalar_lea.vmem [#allocation8], 256
    %v3345 = vld [vmem:[%s3344] sm:$0xff]
    %v3346 = vld [vmem:[%s3344 + $0x8] sm:$0xff]
    %v3347 = vld [vmem:[%s3344 + $0x10] sm:$0xff]
    %v3348 = vld [vmem:[%s3344 + $0x18] sm:$0xff]
    %v3349 = vld [vmem:[%s3344 + $0x20] sm:$0xff]
    %v3350 = vld [vmem:[%s3344 + $0x28] sm:$0xff]
    %v3351 = vld [vmem:[%s3344 + $0x30] sm:$0xff]
    %v3352 = vld [vmem:[%s3344 + $0x38] sm:$0xff]
    %v3353 = vld [vmem:[%s3344 + $0x40] sm:$0xff]
    %v3354 = vld [vmem:[%s3344 + $0x48] sm:$0xff]
    %v3355 = vld [vmem:[%s3344 + $0x50] sm:$0xff]
    %v3356 = vld [vmem:[%s3344 + $0x58] sm:$0xff]
    %v3357 = vld [vmem:[%s3344 + $0x60] sm:$0xff]
    %v3358 = vld [vmem:[%s3344 + $0x68] sm:$0xff]
    %v3359 = vld [vmem:[%s3344 + $0x70] sm:$0xff]
    %v3360 = vld [vmem:[%s3344 + $0x78] sm:$0xff]
    %v3361 = vld [vmem:[%s3344 + $0x80] sm:$0xff]
    %v3362 = vld [vmem:[%s3344 + $0x88] sm:$0xff]
    %v3363 = vld [vmem:[%s3344 + $0x90] sm:$0xff]
    %v3364 = vld [vmem:[%s3344 + $0x98] sm:$0xff]
    %v3365 = vld [vmem:[%s3344 + $0xa0] sm:$0xff]
    %v3366 = vld [vmem:[%s3344 + $0xa8] sm:$0xff]
    %v3367 = vld [vmem:[%s3344 + $0xb0] sm:$0xff]
    %v3368 = vld [vmem:[%s3344 + $0xb8] sm:$0xff]
    %v3369 = vld [vmem:[%s3344 + $0xc0] sm:$0xff]
    %v3370 = vld [vmem:[%s3344 + $0xc8] sm:$0xff]
    %v3371 = vld [vmem:[%s3344 + $0xd0] sm:$0xff]
    %v3372 = vld [vmem:[%s3344 + $0xd8] sm:$0xff]
    %v3373 = vld [vmem:[%s3344 + $0xe0] sm:$0xff]
    %v3374 = vld [vmem:[%s3344 + $0xe8] sm:$0xff]
    %v3375 = vld [vmem:[%s3344 + $0xf0] sm:$0xff]
    %v3376 = vld [vmem:[%s3344 + $0xf8] sm:$0xff]
    %v3409 = vunpack.c.l.b16 %v3345
    %v3410 = vunpack.c.h.b16 %v3345
    %v3411 = vunpack.c.l.b16 %v3346
    %v3412 = vunpack.c.h.b16 %v3346
    %v3413 = vunpack.c.l.b16 %v3347
    %v3414 = vunpack.c.h.b16 %v3347
    %v3415 = vunpack.c.l.b16 %v3348
    %v3416 = vunpack.c.h.b16 %v3348
    %v3417 = vunpack.c.l.b16 %v3349
    %v3418 = vunpack.c.h.b16 %v3349
    %v3419 = vunpack.c.l.b16 %v3350
    %v3420 = vunpack.c.h.b16 %v3350
    %v3421 = vunpack.c.l.b16 %v3351
    %v3422 = vunpack.c.h.b16 %v3351
    %v3423 = vunpack.c.l.b16 %v3352
    %v3424 = vunpack.c.h.b16 %v3352
    %v3425 = vunpack.c.l.b16 %v3353
    %v3426 = vunpack.c.h.b16 %v3353
    %v3427 = vunpack.c.l.b16 %v3354
    %v3428 = vunpack.c.h.b16 %v3354
    %v3429 = vunpack.c.l.b16 %v3355
    %v3430 = vunpack.c.h.b16 %v3355
    %v3431 = vunpack.c.l.b16 %v3356
    %v3432 = vunpack.c.h.b16 %v3356
    %v3433 = vunpack.c.l.b16 %v3357
    %v3434 = vunpack.c.h.b16 %v3357
    %v3435 = vunpack.c.l.b16 %v3358
    %v3436 = vunpack.c.h.b16 %v3358
    %v3437 = vunpack.c.l.b16 %v3359
    %v3438 = vunpack.c.h.b16 %v3359
    %v3439 = vunpack.c.l.b16 %v3360
    %v3440 = vunpack.c.h.b16 %v3360
    %v3441 = vunpack.c.l.b16 %v3361
    %v3442 = vunpack.c.h.b16 %v3361
    %v3443 = vunpack.c.l.b16 %v3362
    %v3444 = vunpack.c.h.b16 %v3362
    %v3445 = vunpack.c.l.b16 %v3363
    %v3446 = vunpack.c.h.b16 %v3363
    %v3447 = vunpack.c.l.b16 %v3364
    %v3448 = vunpack.c.h.b16 %v3364
    %v3449 = vunpack.c.l.b16 %v3365
    %v3450 = vunpack.c.h.b16 %v3365
    %v3451 = vunpack.c.l.b16 %v3366
    %v3452 = vunpack.c.h.b16 %v3366
    %v3453 = vunpack.c.l.b16 %v3367
    %v3454 = vunpack.c.h.b16 %v3367
    %v3455 = vunpack.c.l.b16 %v3368
    %v3456 = vunpack.c.h.b16 %v3368
    %v3457 = vunpack.c.l.b16 %v3369
    %v3458 = vunpack.c.h.b16 %v3369
    %v3459 = vunpack.c.l.b16 %v3370
    %v3460 = vunpack.c.h.b16 %v3370
    %v3461 = vunpack.c.l.b16 %v3371
    %v3462 = vunpack.c.h.b16 %v3371
    %v3463 = vunpack.c.l.b16 %v3372
    %v3464 = vunpack.c.h.b16 %v3372
    %v3465 = vunpack.c.l.b16 %v3373
    %v3466 = vunpack.c.h.b16 %v3373
    %v3467 = vunpack.c.l.b16 %v3374
    %v3468 = vunpack.c.h.b16 %v3374
    %v3469 = vunpack.c.l.b16 %v3375
    %v3470 = vunpack.c.h.b16 %v3375
    %v3471 = vunpack.c.l.b16 %v3376
    %v3472 = vunpack.c.h.b16 %v3376
    %v3473 = vpack.c.b16 %v3413, %v3409
    %v3474 = vpack.c.b16 %v3414, %v3410
    %v3475 = vpack.c.b16 %v3415, %v3411
    %v3476 = vpack.c.b16 %v3416, %v3412
    %v3477 = vpack.c.b16 %v3421, %v3417
    %v3478 = vpack.c.b16 %v3422, %v3418
    %v3479 = vpack.c.b16 %v3423, %v3419
    %v3480 = vpack.c.b16 %v3424, %v3420
    %v3481 = vpack.c.b16 %v3429, %v3425
    %v3482 = vpack.c.b16 %v3430, %v3426
    %v3483 = vpack.c.b16 %v3431, %v3427
    %v3484 = vpack.c.b16 %v3432, %v3428
    %v3485 = vpack.c.b16 %v3437, %v3433
    %v3486 = vpack.c.b16 %v3438, %v3434
    %v3487 = vpack.c.b16 %v3439, %v3435
    %v3488 = vpack.c.b16 %v3440, %v3436
    %v3489 = vpack.c.b16 %v3445, %v3441
    %v3490 = vpack.c.b16 %v3446, %v3442
    %v3491 = vpack.c.b16 %v3447, %v3443
    %v3492 = vpack.c.b16 %v3448, %v3444
    %v3493 = vpack.c.b16 %v3453, %v3449
    %v3494 = vpack.c.b16 %v3454, %v3450
    %v3495 = vpack.c.b16 %v3455, %v3451
    %v3496 = vpack.c.b16 %v3456, %v3452
    %v3497 = vpack.c.b16 %v3461, %v3457
    %v3498 = vpack.c.b16 %v3462, %v3458
    %v3499 = vpack.c.b16 %v3463, %v3459
    %v3500 = vpack.c.b16 %v3464, %v3460
    %v3501 = vpack.c.b16 %v3469, %v3465
    %v3502 = vpack.c.b16 %v3470, %v3466
    %v3503 = vpack.c.b16 %v3471, %v3467
    %v3504 = vpack.c.b16 %v3472, %v3468
    %3537 = vmatprep.subr.bf16.mxu0 %v3502
    %3538 = vmatpush1.bf16.msra.mxu0 %v3501
    %3539 = vmatprep.subr.bf16.mxu0 %v3498
    %3540 = vmatpush1.bf16.msra.mxu0 %v3497
    %3541 = vmatprep.subr.bf16.mxu0 %v3494
    %3542 = vmatpush1.bf16.msra.mxu0 %v3493
    %3543 = vmatprep.subr.bf16.mxu0 %v3490
    %3544 = vmatpush1.bf16.msra.mxu0 %v3489
    %3545 = vmatprep.subr.bf16.mxu0 %v3486
    %3546 = vmatpush1.bf16.msra.mxu0 %v3485
    %3547 = vmatprep.subr.bf16.mxu0 %v3482
    %3548 = vmatpush1.bf16.msra.mxu0 %v3481
    %3549 = vmatprep.subr.bf16.mxu0 %v3478
    %3550 = vmatpush1.bf16.msra.mxu0 %v3477
    %3551 = vmatprep.subr.bf16.mxu0 %v3474
    %3552 = vmatpush1.bf16.msra.mxu0 %v3473
    %3553 = vmatprep.subr.bf16.mxu0 0
    %3554 = vmatpush2.bf16.msra.mxu0 0
    %3555 = vmatprep.subr.bf16.mxu0 0
    %3556 = vmatpush2.bf16.msra.mxu0 0
    %3557 = vmatprep.subr.bf16.mxu0 0
    %3558 = vmatpush2.bf16.msra.mxu0 0
    %3559 = vmatprep.subr.bf16.mxu0 0
    %3560 = vmatpush2.bf16.msra.mxu0 0
    %3561 = vmatprep.subr.bf16.mxu0 0
    %3562 = vmatpush2.bf16.msra.mxu0 0
    %3563 = vmatprep.subr.bf16.mxu0 0
    %3564 = vmatpush2.bf16.msra.mxu0 0
    %3565 = vmatprep.subr.bf16.mxu0 0
    %3566 = vmatpush2.bf16.msra.mxu0 0
    %3567 = vmatprep.subr.bf16.mxu0 0
    %3568 = vmatpush2.bf16.msra.mxu0 0
    %3569 = vmatprep.mubr.bf16.mxu0 0
    %3570 = vmatmul.mubr.bf16.gmra.mxu0 0
    %v3571 = vpop.f32.mrf.mxu0
    %v3572 = vadd.f32 0.0, %v3571
    %v3573 = vpop.f32.mrf.mxu0
    %v3574 = vadd.f32 0.0, %v3573
    %v3575 = vpop.f32.mrf.mxu0
    %v3576 = vpop.f32.mrf.mxu0
    %3577 = vdwg.mxu0
    %3578 = vmatprep.subr.bf16.mxu0 %v3504
    %3579 = vmatpush1.bf16.msra.mxu0 %v3503
    %3580 = vmatprep.subr.bf16.mxu0 %v3500
    %3581 = vmatpush1.bf16.msra.mxu0 %v3499
    %3582 = vmatprep.subr.bf16.mxu0 %v3496
    %3583 = vmatpush1.bf16.msra.mxu0 %v3495
    %3584 = vmatprep.subr.bf16.mxu0 %v3492
    %3585 = vmatpush1.bf16.msra.mxu0 %v3491
    %3586 = vmatprep.subr.bf16.mxu0 %v3488
    %3587 = vmatpush1.bf16.msra.mxu0 %v3487
    %3588 = vmatprep.subr.bf16.mxu0 %v3484
    %3589 = vmatpush1.bf16.msra.mxu0 %v3483
    %3590 = vmatprep.subr.bf16.mxu0 %v3480
    %3591 = vmatpush1.bf16.msra.mxu0 %v3479
    %3592 = vmatprep.subr.bf16.mxu0 %v3476
    %3593 = vmatpush1.bf16.msra.mxu0 %v3475
    %3594 = vmatprep.subr.bf16.mxu0 0
    %3595 = vmatpush2.bf16.msra.mxu0 0
    %3596 = vmatprep.subr.bf16.mxu0 0
    %3597 = vmatpush2.bf16.msra.mxu0 0
    %3598 = vmatprep.subr.bf16.mxu0 0
    %3599 = vmatpush2.bf16.msra.mxu0 0
    %3600 = vmatprep.subr.bf16.mxu0 0
    %3601 = vmatpush2.bf16.msra.mxu0 0
    %3602 = vmatprep.subr.bf16.mxu0 0
    %3603 = vmatpush2.bf16.msra.mxu0 0
    %3604 = vmatprep.subr.bf16.mxu0 0
    %3605 = vmatpush2.bf16.msra.mxu0 0
    %3606 = vmatprep.subr.bf16.mxu0 0
    %3607 = vmatpush2.bf16.msra.mxu0 0
    %3608 = vmatprep.subr.bf16.mxu0 0
    %3609 = vmatpush2.bf16.msra.mxu0 0
    %3610 = vmatprep.mubr.bf16.mxu0 0
    %3611 = vmatmul.mubr.bf16.gmra.mxu0 0
    %v3612 = vpop.f32.mrf.mxu0
    %v3613 = vadd.f32 0.0, %v3612
    %v3614 = vpop.f32.mrf.mxu0
    %v3615 = vadd.f32 0.0, %v3614
    %v3616 = vpop.f32.mrf.mxu0
    %v3617 = vpop.f32.mrf.mxu0
    %3618 = vdwg.mxu0
    %v3619 = vadd.f32 %v3340, %v3572
    %v3620 = vadd.f32 %v3341, %v3574
    %v3621 = vadd.f32 %v3342, %v3613
    %v3622 = vadd.f32 %v3343, %v3615
    %v3623 = vxor.u32 %v3619, 2147483648
    %v3624 = vmul.f32 %v3623, 1.442695
    %v3625 = vpow.pop %v3624
    %v3626 = vadd.f32 %v3625, 1.0
    %v3627 = vrcp.pop %v3626
    %v3628 = vmul.f32 1.0, %v3627
    %v3629 = vxor.u32 %v3620, 2147483648
    %v3630 = vmul.f32 %v3629, 1.442695
    %v3631 = vpow.pop %v3630
    %v3632 = vadd.f32 %v3631, 1.0
    %v3633 = vrcp.pop %v3632
    %v3634 = vmul.f32 1.0, %v3633
    %v3635 = vtanh.pop %v3621
    %v3636 = vxor.u32 %v3622, 2147483648
    %v3637 = vmul.f32 %v3636, 1.442695
    %v3638 = vpow.pop %v3637
    %v3639 = vadd.f32 %v3638, 1.0
    %v3640 = vrcp.pop %v3639
    %v3641 = vmul.f32 1.0, %v3640
    %v3642 = vmul.f32 %v3634, 0.0
    %v3643 = vmul.f32 %v3628, %v3635
    %v3644 = vadd.f32 %v3642, %v3643
    %v3645 = vtanh.pop %v3644
    %v3646 = vmul.f32 %v3641, %v3645
    %v3647 = vld [vmem:[#allocation3 + $0x20] sm:$0xff]
    %v3648 = vld [vmem:[#allocation3 + $0x28] sm:$0xff]
    %v3649 = vld [vmem:[#allocation3 + $0x30] sm:$0xff]
    %v3650 = vld [vmem:[#allocation3 + $0x38] sm:$0xff]
    %v3651 = vpack.c.bf16 %v3646, %v3646
    %3652 = vmatprep.subr.bf16.mxu0 %v3502
    %3653 = vmatpush1.bf16.msra.mxu0 %v3501
    %3654 = vmatprep.subr.bf16.mxu0 %v3498
    %3655 = vmatpush1.bf16.msra.mxu0 %v3497
    %3656 = vmatprep.subr.bf16.mxu0 %v3494
    %3657 = vmatpush1.bf16.msra.mxu0 %v3493
    %3658 = vmatprep.subr.bf16.mxu0 %v3490
    %3659 = vmatpush1.bf16.msra.mxu0 %v3489
    %3660 = vmatprep.subr.bf16.mxu0 %v3486
    %3661 = vmatpush1.bf16.msra.mxu0 %v3485
    %3662 = vmatprep.subr.bf16.mxu0 %v3482
    %3663 = vmatpush1.bf16.msra.mxu0 %v3481
    %3664 = vmatprep.subr.bf16.mxu0 %v3478
    %3665 = vmatpush1.bf16.msra.mxu0 %v3477
    %3666 = vmatprep.subr.bf16.mxu0 %v3474
    %3667 = vmatpush1.bf16.msra.mxu0 %v3473
    %3668 = vmatprep.subr.bf16.mxu0 0
    %3669 = vmatpush2.bf16.msra.mxu0 0
    %3670 = vmatprep.subr.bf16.mxu0 0
    %3671 = vmatpush2.bf16.msra.mxu0 0
    %3672 = vmatprep.subr.bf16.mxu0 0
    %3673 = vmatpush2.bf16.msra.mxu0 0
    %3674 = vmatprep.subr.bf16.mxu0 0
    %3675 = vmatpush2.bf16.msra.mxu0 0
    %3676 = vmatprep.subr.bf16.mxu0 0
    %3677 = vmatpush2.bf16.msra.mxu0 0
    %3678 = vmatprep.subr.bf16.mxu0 0
    %3679 = vmatpush2.bf16.msra.mxu0 0
    %3680 = vmatprep.subr.bf16.mxu0 0
    %3681 = vmatpush2.bf16.msra.mxu0 0
    %3682 = vmatprep.subr.bf16.mxu0 0
    %3683 = vmatpush2.bf16.msra.mxu0 0
    %3684 = vmatprep.mubr.bf16.mxu0 0
    %3685 = vmatmul.mubr.bf16.gmra.mxu0 %v3651
    %v3686 = vpop.f32.mrf.mxu0
    %v3687 = vadd.f32 0.0, %v3686
    %v3688 = vpop.f32.mrf.mxu0
    %v3689 = vadd.f32 0.0, %v3688
    %v3690 = vpop.f32.mrf.mxu0
    %v3691 = vpop.f32.mrf.mxu0
    %3692 = vdwg.mxu0
    %3693 = vmatprep.subr.bf16.mxu0 %v3504
    %3694 = vmatpush1.bf16.msra.mxu0 %v3503
    %3695 = vmatprep.subr.bf16.mxu0 %v3500
    %3696 = vmatpush1.bf16.msra.mxu0 %v3499
    %3697 = vmatprep.subr.bf16.mxu0 %v3496
    %3698 = vmatpush1.bf16.msra.mxu0 %v3495
    %3699 = vmatprep.subr.bf16.mxu0 %v3492
    %3700 = vmatpush1.bf16.msra.mxu0 %v3491
    %3701 = vmatprep.subr.bf16.mxu0 %v3488
    %3702 = vmatpush1.bf16.msra.mxu0 %v3487
    %3703 = vmatprep.subr.bf16.mxu0 %v3484
    %3704 = vmatpush1.bf16.msra.mxu0 %v3483
    %3705 = vmatprep.subr.bf16.mxu0 %v3480
    %3706 = vmatpush1.bf16.msra.mxu0 %v3479
    %3707 = vmatprep.subr.bf16.mxu0 %v3476
    %3708 = vmatpush1.bf16.msra.mxu0 %v3475
    %3709 = vmatprep.subr.bf16.mxu0 0
    %3710 = vmatpush2.bf16.msra.mxu0 0
    %3711 = vmatprep.subr.bf16.mxu0 0
    %3712 = vmatpush2.bf16.msra.mxu0 0
    %3713 = vmatprep.subr.bf16.mxu0 0
    %3714 = vmatpush2.bf16.msra.mxu0 0
    %3715 = vmatprep.subr.bf16.mxu0 0
    %3716 = vmatpush2.bf16.msra.mxu0 0
    %3717 = vmatprep.subr.bf16.mxu0 0
    %3718 = vmatpush2.bf16.msra.mxu0 0
    %3719 = vmatprep.subr.bf16.mxu0 0
    %3720 = vmatpush2.bf16.msra.mxu0 0
    %3721 = vmatprep.subr.bf16.mxu0 0
    %3722 = vmatpush2.bf16.msra.mxu0 0
    %3723 = vmatprep.subr.bf16.mxu0 0
    %3724 = vmatpush2.bf16.msra.mxu0 0
    %3725 = vmatprep.mubr.bf16.mxu0 0
    %3726 = vmatmul.mubr.bf16.gmra.mxu0 %v3651
    %v3727 = vpop.f32.mrf.mxu0
    %v3728 = vadd.f32 0.0, %v3727
    %v3729 = vpop.f32.mrf.mxu0
    %v3730 = vadd.f32 0.0, %v3729
    %v3731 = vpop.f32.mrf.mxu0
    %v3732 = vpop.f32.mrf.mxu0
    %3733 = vdwg.mxu0
    %v3734 = vadd.f32 %v3647, %v3687
    %v3735 = vadd.f32 %v3648, %v3689
    %v3736 = vadd.f32 %v3649, %v3728
    %v3737 = vadd.f32 %v3650, %v3730
    %v3738 = vxor.u32 %v3734, 2147483648
    %v3739 = vmul.f32 %v3738, 1.442695
    %v3740 = vpow.pop %v3739
    %v3741 = vadd.f32 %v3740, 1.0
    %v3742 = vrcp.pop %v3741
    %v3743 = vmul.f32 1.0, %v3742
    %v3744 = vxor.u32 %v3735, 2147483648
    %v3745 = vmul.f32 %v3744, 1.442695
    %v3746 = vpow.pop %v3745
    %v3747 = vadd.f32 %v3746, 1.0
    %v3748 = vrcp.pop %v3747
    %v3749 = vmul.f32 1.0, %v3748
    %v3750 = vtanh.pop %v3736
    %v3751 = vxor.u32 %v3737, 2147483648
    %v3752 = vmul.f32 %v3751, 1.442695
    %v3753 = vpow.pop %v3752
    %v3754 = vadd.f32 %v3753, 1.0
    %v3755 = vrcp.pop %v3754
    %v3756 = vmul.f32 1.0, %v3755
    %v3757 = vmul.f32 %v3749, %v3644
    %v3758 = vmul.f32 %v3743, %v3750
    %v3759 = vadd.f32 %v3757, %v3758
    %v3760 = vtanh.pop %v3759
    %v3761 = vmul.f32 %v3756, %v3760
    %v3762 = vld [vmem:[#allocation3 + $0x40] sm:$0xff]
    %v3763 = vld [vmem:[#allocation3 + $0x48] sm:$0xff]
    %v3764 = vld [vmem:[#allocation3 + $0x50] sm:$0xff]
    %v3765 = vld [vmem:[#allocation3 + $0x58] sm:$0xff]
    %v3766 = vpack.c.bf16 %v3761, %v3761
    %3767 = vmatprep.subr.bf16.mxu0 %v3502
    %3768 = vmatpush1.bf16.msra.mxu0 %v3501
    %3769 = vmatprep.subr.bf16.mxu0 %v3498
    %3770 = vmatpush1.bf16.msra.mxu0 %v3497
    %3771 = vmatprep.subr.bf16.mxu0 %v3494
    %3772 = vmatpush1.bf16.msra.mxu0 %v3493
    %3773 = vmatprep.subr.bf16.mxu0 %v3490
    %3774 = vmatpush1.bf16.msra.mxu0 %v3489
    %3775 = vmatprep.subr.bf16.mxu0 %v3486
    %3776 = vmatpush1.bf16.msra.mxu0 %v3485
    %3777 = vmatprep.subr.bf16.mxu0 %v3482
    %3778 = vmatpush1.bf16.msra.mxu0 %v3481
    %3779 = vmatprep.subr.bf16.mxu0 %v3478
    %3780 = vmatpush1.bf16.msra.mxu0 %v3477
    %3781 = vmatprep.subr.bf16.mxu0 %v3474
    %3782 = vmatpush1.bf16.msra.mxu0 %v3473
    %3783 = vmatprep.subr.bf16.mxu0 0
    %3784 = vmatpush2.bf16.msra.mxu0 0
    %3785 = vmatprep.subr.bf16.mxu0 0
    %3786 = vmatpush2.bf16.msra.mxu0 0
    %3787 = vmatprep.subr.bf16.mxu0 0
    %3788 = vmatpush2.bf16.msra.mxu0 0
    %3789 = vmatprep.subr.bf16.mxu0 0
    %3790 = vmatpush2.bf16.msra.mxu0 0
    %3791 = vmatprep.subr.bf16.mxu0 0
    %3792 = vmatpush2.bf16.msra.mxu0 0
    %3793 = vmatprep.subr.bf16.mxu0 0
    %3794 = vmatpush2.bf16.msra.mxu0 0
    %3795 = vmatprep.subr.bf16.mxu0 0
    %3796 = vmatpush2.bf16.msra.mxu0 0
    %3797 = vmatprep.subr.bf16.mxu0 0
    %3798 = vmatpush2.bf16.msra.mxu0 0
    %3799 = vmatprep.mubr.bf16.mxu0 0
    %3800 = vmatmul.mubr.bf16.gmra.mxu0 %v3766
    %v3801 = vpop.f32.mrf.mxu0
    %v3802 = vadd.f32 0.0, %v3801
    %v3803 = vpop.f32.mrf.mxu0
    %v3804 = vadd.f32 0.0, %v3803
    %v3805 = vpop.f32.mrf.mxu0
    %v3806 = vpop.f32.mrf.mxu0
    %3807 = vdwg.mxu0
    %3808 = vmatprep.subr.bf16.mxu0 %v3504
    %3809 = vmatpush1.bf16.msra.mxu0 %v3503
    %3810 = vmatprep.subr.bf16.mxu0 %v3500
    %3811 = vmatpush1.bf16.msra.mxu0 %v3499
    %3812 = vmatprep.subr.bf16.mxu0 %v3496
    %3813 = vmatpush1.bf16.msra.mxu0 %v3495
    %3814 = vmatprep.subr.bf16.mxu0 %v3492
    %3815 = vmatpush1.bf16.msra.mxu0 %v3491
    %3816 = vmatprep.subr.bf16.mxu0 %v3488
    %3817 = vmatpush1.bf16.msra.mxu0 %v3487
    %3818 = vmatprep.subr.bf16.mxu0 %v3484
    %3819 = vmatpush1.bf16.msra.mxu0 %v3483
    %3820 = vmatprep.subr.bf16.mxu0 %v3480
    %3821 = vmatpush1.bf16.msra.mxu0 %v3479
    %3822 = vmatprep.subr.bf16.mxu0 %v3476
    %3823 = vmatpush1.bf16.msra.mxu0 %v3475
    %3824 = vmatprep.subr.bf16.mxu0 0
    %3825 = vmatpush2.bf16.msra.mxu0 0
    %3826 = vmatprep.subr.bf16.mxu0 0
    %3827 = vmatpush2.bf16.msra.mxu0 0
    %3828 = vmatprep.subr.bf16.mxu0 0
    %3829 = vmatpush2.bf16.msra.mxu0 0
    %3830 = vmatprep.subr.bf16.mxu0 0
    %3831 = vmatpush2.bf16.msra.mxu0 0
    %3832 = vmatprep.subr.bf16.mxu0 0
    %3833 = vmatpush2.bf16.msra.mxu0 0
    %3834 = vmatprep.subr.bf16.mxu0 0
    %3835 = vmatpush2.bf16.msra.mxu0 0
    %3836 = vmatprep.subr.bf16.mxu0 0
    %3837 = vmatpush2.bf16.msra.mxu0 0
    %3838 = vmatprep.subr.bf16.mxu0 0
    %3839 = vmatpush2.bf16.msra.mxu0 0
    %3840 = vmatprep.mubr.bf16.mxu0 0
    %3841 = vmatmul.mubr.bf16.gmra.mxu0 %v3766
    %v3842 = vpop.f32.mrf.mxu0
    %v3843 = vadd.f32 0.0, %v3842
    %v3844 = vpop.f32.mrf.mxu0
    %v3845 = vadd.f32 0.0, %v3844
    %v3846 = vpop.f32.mrf.mxu0
    %v3847 = vpop.f32.mrf.mxu0
    %3848 = vdwg.mxu0
    %v3849 = vadd.f32 %v3762, %v3802
    %v3850 = vadd.f32 %v3763, %v3804
    %v3851 = vadd.f32 %v3764, %v3843
    %v3852 = vadd.f32 %v3765, %v3845
    %v3853 = vxor.u32 %v3849, 2147483648
    %v3854 = vmul.f32 %v3853, 1.442695
    %v3855 = vpow.pop %v3854
    %v3856 = vadd.f32 %v3855, 1.0
    %v3857 = vrcp.pop %v3856
    %v3858 = vmul.f32 1.0, %v3857
    %v3859 = vxor.u32 %v3850, 2147483648
    %v3860 = vmul.f32 %v3859, 1.442695
    %v3861 = vpow.pop %v3860
    %v3862 = vadd.f32 %v3861, 1.0
    %v3863 = vrcp.pop %v3862
    %v3864 = vmul.f32 1.0, %v3863
    %v3865 = vtanh.pop %v3851
    %v3866 = vxor.u32 %v3852, 2147483648
    %v3867 = vmul.f32 %v3866, 1.442695
    %v3868 = vpow.pop %v3867
    %v3869 = vadd.f32 %v3868, 1.0
    %v3870 = vrcp.pop %v3869
    %v3871 = vmul.f32 1.0, %v3870
    %v3872 = vmul.f32 %v3864, %v3759
    %v3873 = vmul.f32 %v3858, %v3865
    %v3874 = vadd.f32 %v3872, %v3873
    %v3875 = vtanh.pop %v3874
    %v3876 = vmul.f32 %v3871, %v3875
    %v3877 = vld [vmem:[#allocation3 + $0x60] sm:$0xff]
    %v3878 = vld [vmem:[#allocation3 + $0x68] sm:$0xff]
    %v3879 = vld [vmem:[#allocation3 + $0x70] sm:$0xff]
    %v3880 = vld [vmem:[#allocation3 + $0x78] sm:$0xff]
    %v3881 = vpack.c.bf16 %v3876, %v3876
    %3882 = vmatprep.subr.bf16.mxu0 %v3502
    %3883 = vmatpush1.bf16.msra.mxu0 %v3501
    %3884 = vmatprep.subr.bf16.mxu0 %v3498
    %3885 = vmatpush1.bf16.msra.mxu0 %v3497
    %3886 = vmatprep.subr.bf16.mxu0 %v3494
    %3887 = vmatpush1.bf16.msra.mxu0 %v3493
    %3888 = vmatprep.subr.bf16.mxu0 %v3490
    %3889 = vmatpush1.bf16.msra.mxu0 %v3489
    %3890 = vmatprep.subr.bf16.mxu0 %v3486
    %3891 = vmatpush1.bf16.msra.mxu0 %v3485
    %3892 = vmatprep.subr.bf16.mxu0 %v3482
    %3893 = vmatpush1.bf16.msra.mxu0 %v3481
    %3894 = vmatprep.subr.bf16.mxu0 %v3478
    %3895 = vmatpush1.bf16.msra.mxu0 %v3477
    %3896 = vmatprep.subr.bf16.mxu0 %v3474
    %3897 = vmatpush1.bf16.msra.mxu0 %v3473
    %3898 = vmatprep.subr.bf16.mxu0 0
    %3899 = vmatpush2.bf16.msra.mxu0 0
    %3900 = vmatprep.subr.bf16.mxu0 0
    %3901 = vmatpush2.bf16.msra.mxu0 0
    %3902 = vmatprep.subr.bf16.mxu0 0
    %3903 = vmatpush2.bf16.msra.mxu0 0
    %3904 = vmatprep.subr.bf16.mxu0 0
    %3905 = vmatpush2.bf16.msra.mxu0 0
    %3906 = vmatprep.subr.bf16.mxu0 0
    %3907 = vmatpush2.bf16.msra.mxu0 0
    %3908 = vmatprep.subr.bf16.mxu0 0
    %3909 = vmatpush2.bf16.msra.mxu0 0
    %3910 = vmatprep.subr.bf16.mxu0 0
    %3911 = vmatpush2.bf16.msra.mxu0 0
    %3912 = vmatprep.subr.bf16.mxu0 0
    %3913 = vmatpush2.bf16.msra.mxu0 0
    %3914 = vmatprep.mubr.bf16.mxu0 0
    %3915 = vmatmul.mubr.bf16.gmra.mxu0 %v3881
    %v3916 = vpop.f32.mrf.mxu0
    %v3917 = vadd.f32 0.0, %v3916
    %v3918 = vpop.f32.mrf.mxu0
    %v3919 = vadd.f32 0.0, %v3918
    %v3920 = vpop.f32.mrf.mxu0
    %v3921 = vpop.f32.mrf.mxu0
    %3922 = vdwg.mxu0
    %3923 = vmatprep.subr.bf16.mxu0 %v3504
    %3924 = vmatpush1.bf16.msra.mxu0 %v3503
    %3925 = vmatprep.subr.bf16.mxu0 %v3500
    %3926 = vmatpush1.bf16.msra.mxu0 %v3499
    %3927 = vmatprep.subr.bf16.mxu0 %v3496
    %3928 = vmatpush1.bf16.msra.mxu0 %v3495
    %3929 = vmatprep.subr.bf16.mxu0 %v3492
    %3930 = vmatpush1.bf16.msra.mxu0 %v3491
    %3931 = vmatprep.subr.bf16.mxu0 %v3488
    %3932 = vmatpush1.bf16.msra.mxu0 %v3487
    %3933 = vmatprep.subr.bf16.mxu0 %v3484
    %3934 = vmatpush1.bf16.msra.mxu0 %v3483
    %3935 = vmatprep.subr.bf16.mxu0 %v3480
    %3936 = vmatpush1.bf16.msra.mxu0 %v3479
    %3937 = vmatprep.subr.bf16.mxu0 %v3476
    %3938 = vmatpush1.bf16.msra.mxu0 %v3475
    %3939 = vmatprep.subr.bf16.mxu0 0
    %3940 = vmatpush2.bf16.msra.mxu0 0
    %3941 = vmatprep.subr.bf16.mxu0 0
    %3942 = vmatpush2.bf16.msra.mxu0 0
    %3943 = vmatprep.subr.bf16.mxu0 0
    %3944 = vmatpush2.bf16.msra.mxu0 0
    %3945 = vmatprep.subr.bf16.mxu0 0
    %3946 = vmatpush2.bf16.msra.mxu0 0
    %3947 = vmatprep.subr.bf16.mxu0 0
    %3948 = vmatpush2.bf16.msra.mxu0 0
    %3949 = vmatprep.subr.bf16.mxu0 0
    %3950 = vmatpush2.bf16.msra.mxu0 0
    %3951 = vmatprep.subr.bf16.mxu0 0
    %3952 = vmatpush2.bf16.msra.mxu0 0
    %3953 = vmatprep.subr.bf16.mxu0 0
    %3954 = vmatpush2.bf16.msra.mxu0 0
    %3955 = vmatprep.mubr.bf16.mxu0 0
    %3956 = vmatmul.mubr.bf16.gmra.mxu0 %v3881
    %v3957 = vpop.f32.mrf.mxu0
    %v3958 = vadd.f32 0.0, %v3957
    %v3959 = vpop.f32.mrf.mxu0
    %v3960 = vadd.f32 0.0, %v3959
    %v3961 = vpop.f32.mrf.mxu0
    %v3962 = vpop.f32.mrf.mxu0
    %3963 = vdwg.mxu0
    %v3964 = vadd.f32 %v3877, %v3917
    %v3965 = vadd.f32 %v3878, %v3919
    %v3966 = vadd.f32 %v3879, %v3958
    %v3967 = vadd.f32 %v3880, %v3960
    %v3968 = vxor.u32 %v3964, 2147483648
    %v3969 = vmul.f32 %v3968, 1.442695
    %v3970 = vpow.pop %v3969
    %v3971 = vadd.f32 %v3970, 1.0
    %v3972 = vrcp.pop %v3971
    %v3973 = vmul.f32 1.0, %v3972
    %v3974 = vxor.u32 %v3965, 2147483648
    %v3975 = vmul.f32 %v3974, 1.442695
    %v3976 = vpow.pop %v3975
    %v3977 = vadd.f32 %v3976, 1.0
    %v3978 = vrcp.pop %v3977
    %v3979 = vmul.f32 1.0, %v3978
    %v3980 = vtanh.pop %v3966
    %v3981 = vxor.u32 %v3967, 2147483648
    %v3982 = vmul.f32 %v3981, 1.442695
    %v3983 = vpow.pop %v3982
    %v3984 = vadd.f32 %v3983, 1.0
    %v3985 = vrcp.pop %v3984
    %v3986 = vmul.f32 1.0, %v3985
    %v3987 = vmul.f32 %v3979, %v3874
    %v3988 = vmul.f32 %v3973, %v3980
    %v3989 = vadd.f32 %v3987, %v3988
    %v3990 = vtanh.pop %v3989
    %v3991 = vmul.f32 %v3986, %v3990
    %v3992 = vld [vmem:[#allocation3 + $0x80] sm:$0xff]
    %v3993 = vld [vmem:[#allocation3 + $0x88] sm:$0xff]
    %v3994 = vld [vmem:[#allocation3 + $0x90] sm:$0xff]
    %v3995 = vld [vmem:[#allocation3 + $0x98] sm:$0xff]
    %v3996 = vpack.c.bf16 %v3991, %v3991
    %3997 = vmatprep.subr.bf16.mxu0 %v3502
    %3998 = vmatpush1.bf16.msra.mxu0 %v3501
    %3999 = vmatprep.subr.bf16.mxu0 %v3498
    %4000 = vmatpush1.bf16.msra.mxu0 %v3497
    %4001 = vmatprep.subr.bf16.mxu0 %v3494
    %4002 = vmatpush1.bf16.msra.mxu0 %v3493
    %4003 = vmatprep.subr.bf16.mxu0 %v3490
    %4004 = vmatpush1.bf16.msra.mxu0 %v3489
    %4005 = vmatprep.subr.bf16.mxu0 %v3486
    %4006 = vmatpush1.bf16.msra.mxu0 %v3485
    %4007 = vmatprep.subr.bf16.mxu0 %v3482
    %4008 = vmatpush1.bf16.msra.mxu0 %v3481
    %4009 = vmatprep.subr.bf16.mxu0 %v3478
    %4010 = vmatpush1.bf16.msra.mxu0 %v3477
    %4011 = vmatprep.subr.bf16.mxu0 %v3474
    %4012 = vmatpush1.bf16.msra.mxu0 %v3473
    %4013 = vmatprep.subr.bf16.mxu0 0
    %4014 = vmatpush2.bf16.msra.mxu0 0
    %4015 = vmatprep.subr.bf16.mxu0 0
    %4016 = vmatpush2.bf16.msra.mxu0 0
    %4017 = vmatprep.subr.bf16.mxu0 0
    %4018 = vmatpush2.bf16.msra.mxu0 0
    %4019 = vmatprep.subr.bf16.mxu0 0
    %4020 = vmatpush2.bf16.msra.mxu0 0
    %4021 = vmatprep.subr.bf16.mxu0 0
    %4022 = vmatpush2.bf16.msra.mxu0 0
    %4023 = vmatprep.subr.bf16.mxu0 0
    %4024 = vmatpush2.bf16.msra.mxu0 0
    %4025 = vmatprep.subr.bf16.mxu0 0
    %4026 = vmatpush2.bf16.msra.mxu0 0
    %4027 = vmatprep.subr.bf16.mxu0 0
    %4028 = vmatpush2.bf16.msra.mxu0 0
    %4029 = vmatprep.mubr.bf16.mxu0 0
    %4030 = vmatmul.mubr.bf16.gmra.mxu0 %v3996
    %v4031 = vpop.f32.mrf.mxu0
    %v4032 = vadd.f32 0.0, %v4031
    %v4033 = vpop.f32.mrf.mxu0
    %v4034 = vadd.f32 0.0, %v4033
    %v4035 = vpop.f32.mrf.mxu0
    %v4036 = vpop.f32.mrf.mxu0
    %4037 = vdwg.mxu0
    %4038 = vmatprep.subr.bf16.mxu0 %v3504
    %4039 = vmatpush1.bf16.msra.mxu0 %v3503
    %4040 = vmatprep.subr.bf16.mxu0 %v3500
    %4041 = vmatpush1.bf16.msra.mxu0 %v3499
    %4042 = vmatprep.subr.bf16.mxu0 %v3496
    %4043 = vmatpush1.bf16.msra.mxu0 %v3495
    %4044 = vmatprep.subr.bf16.mxu0 %v3492
    %4045 = vmatpush1.bf16.msra.mxu0 %v3491
    %4046 = vmatprep.subr.bf16.mxu0 %v3488
    %4047 = vmatpush1.bf16.msra.mxu0 %v3487
    %4048 = vmatprep.subr.bf16.mxu0 %v3484
    %4049 = vmatpush1.bf16.msra.mxu0 %v3483
    %4050 = vmatprep.subr.bf16.mxu0 %v3480
    %4051 = vmatpush1.bf16.msra.mxu0 %v3479
    %4052 = vmatprep.subr.bf16.mxu0 %v3476
    %4053 = vmatpush1.bf16.msra.mxu0 %v3475
    %4054 = vmatprep.subr.bf16.mxu0 0
    %4055 = vmatpush2.bf16.msra.mxu0 0
    %4056 = vmatprep.subr.bf16.mxu0 0
    %4057 = vmatpush2.bf16.msra.mxu0 0
    %4058 = vmatprep.subr.bf16.mxu0 0
    %4059 = vmatpush2.bf16.msra.mxu0 0
    %4060 = vmatprep.subr.bf16.mxu0 0
    %4061 = vmatpush2.bf16.msra.mxu0 0
    %4062 = vmatprep.subr.bf16.mxu0 0
    %4063 = vmatpush2.bf16.msra.mxu0 0
    %4064 = vmatprep.subr.bf16.mxu0 0
    %4065 = vmatpush2.bf16.msra.mxu0 0
    %4066 = vmatprep.subr.bf16.mxu0 0
    %4067 = vmatpush2.bf16.msra.mxu0 0
    %4068 = vmatprep.subr.bf16.mxu0 0
    %4069 = vmatpush2.bf16.msra.mxu0 0
    %4070 = vmatprep.mubr.bf16.mxu0 0
    %4071 = vmatmul.mubr.bf16.gmra.mxu0 %v3996
    %v4072 = vpop.f32.mrf.mxu0
    %v4073 = vadd.f32 0.0, %v4072
    %v4074 = vpop.f32.mrf.mxu0
    %v4075 = vadd.f32 0.0, %v4074
    %v4076 = vpop.f32.mrf.mxu0
    %v4077 = vpop.f32.mrf.mxu0
    %4078 = vdwg.mxu0
    %v4079 = vadd.f32 %v3992, %v4032
    %v4080 = vadd.f32 %v3993, %v4034
    %v4081 = vadd.f32 %v3994, %v4073
    %v4082 = vadd.f32 %v3995, %v4075
    %v4083 = vxor.u32 %v4079, 2147483648
    %v4084 = vmul.f32 %v4083, 1.442695
    %v4085 = vpow.pop %v4084
    %v4086 = vadd.f32 %v4085, 1.0
    %v4087 = vrcp.pop %v4086
    %v4088 = vmul.f32 1.0, %v4087
    %v4089 = vxor.u32 %v4080, 2147483648
    %v4090 = vmul.f32 %v4089, 1.442695
    %v4091 = vpow.pop %v4090
    %v4092 = vadd.f32 %v4091, 1.0
    %v4093 = vrcp.pop %v4092
    %v4094 = vmul.f32 1.0, %v4093
    %v4095 = vtanh.pop %v4081
    %v4096 = vxor.u32 %v4082, 2147483648
    %v4097 = vmul.f32 %v4096, 1.442695
    %v4098 = vpow.pop %v4097
    %v4099 = vadd.f32 %v4098, 1.0
    %v4100 = vrcp.pop %v4099
    %v4101 = vmul.f32 1.0, %v4100
    %v4102 = vmul.f32 %v4094, %v3989
    %v4103 = vmul.f32 %v4088, %v4095
    %v4104 = vadd.f32 %v4102, %v4103
    %v4105 = vtanh.pop %v4104
    %v4106 = vmul.f32 %v4101, %v4105
    %v4107 = vld [vmem:[#allocation3 + $0xa0] sm:$0xff]
    %v4108 = vld [vmem:[#allocation3 + $0xa8] sm:$0xff]
    %v4109 = vld [vmem:[#allocation3 + $0xb0] sm:$0xff]
    %v4110 = vld [vmem:[#allocation3 + $0xb8] sm:$0xff]
    %v4111 = vpack.c.bf16 %v4106, %v4106
    %4112 = vmatprep.subr.bf16.mxu0 %v3502
    %4113 = vmatpush1.bf16.msra.mxu0 %v3501
    %4114 = vmatprep.subr.bf16.mxu0 %v3498
    %4115 = vmatpush1.bf16.msra.mxu0 %v3497
    %4116 = vmatprep.subr.bf16.mxu0 %v3494
    %4117 = vmatpush1.bf16.msra.mxu0 %v3493
    %4118 = vmatprep.subr.bf16.mxu0 %v3490
    %4119 = vmatpush1.bf16.msra.mxu0 %v3489
    %4120 = vmatprep.subr.bf16.mxu0 %v3486
    %4121 = vmatpush1.bf16.msra.mxu0 %v3485
    %4122 = vmatprep.subr.bf16.mxu0 %v3482
    %4123 = vmatpush1.bf16.msra.mxu0 %v3481
    %4124 = vmatprep.subr.bf16.mxu0 %v3478
    %4125 = vmatpush1.bf16.msra.mxu0 %v3477
    %4126 = vmatprep.subr.bf16.mxu0 %v3474
    %4127 = vmatpush1.bf16.msra.mxu0 %v3473
    %4128 = vmatprep.subr.bf16.mxu0 0
    %4129 = vmatpush2.bf16.msra.mxu0 0
    %4130 = vmatprep.subr.bf16.mxu0 0
    %4131 = vmatpush2.bf16.msra.mxu0 0
    %4132 = vmatprep.subr.bf16.mxu0 0
    %4133 = vmatpush2.bf16.msra.mxu0 0
    %4134 = vmatprep.subr.bf16.mxu0 0
    %4135 = vmatpush2.bf16.msra.mxu0 0
    %4136 = vmatprep.subr.bf16.mxu0 0
    %4137 = vmatpush2.bf16.msra.mxu0 0
    %4138 = vmatprep.subr.bf16.mxu0 0
    %4139 = vmatpush2.bf16.msra.mxu0 0
    %4140 = vmatprep.subr.bf16.mxu0 0
    %4141 = vmatpush2.bf16.msra.mxu0 0
    %4142 = vmatprep.subr.bf16.mxu0 0
    %4143 = vmatpush2.bf16.msra.mxu0 0
    %4144 = vmatprep.mubr.bf16.mxu0 0
    %4145 = vmatmul.mubr.bf16.gmra.mxu0 %v4111
    %v4146 = vpop.f32.mrf.mxu0
    %v4147 = vadd.f32 0.0, %v4146
    %v4148 = vpop.f32.mrf.mxu0
    %v4149 = vadd.f32 0.0, %v4148
    %v4150 = vpop.f32.mrf.mxu0
    %v4151 = vpop.f32.mrf.mxu0
    %4152 = vdwg.mxu0
    %4153 = vmatprep.subr.bf16.mxu0 %v3504
    %4154 = vmatpush1.bf16.msra.mxu0 %v3503
    %4155 = vmatprep.subr.bf16.mxu0 %v3500
    %4156 = vmatpush1.bf16.msra.mxu0 %v3499
    %4157 = vmatprep.subr.bf16.mxu0 %v3496
    %4158 = vmatpush1.bf16.msra.mxu0 %v3495
    %4159 = vmatprep.subr.bf16.mxu0 %v3492
    %4160 = vmatpush1.bf16.msra.mxu0 %v3491
    %4161 = vmatprep.subr.bf16.mxu0 %v3488
    %4162 = vmatpush1.bf16.msra.mxu0 %v3487
    %4163 = vmatprep.subr.bf16.mxu0 %v3484
    %4164 = vmatpush1.bf16.msra.mxu0 %v3483
    %4165 = vmatprep.subr.bf16.mxu0 %v3480
    %4166 = vmatpush1.bf16.msra.mxu0 %v3479
    %4167 = vmatprep.subr.bf16.mxu0 %v3476
    %4168 = vmatpush1.bf16.msra.mxu0 %v3475
    %4169 = vmatprep.subr.bf16.mxu0 0
    %4170 = vmatpush2.bf16.msra.mxu0 0
    %4171 = vmatprep.subr.bf16.mxu0 0
    %4172 = vmatpush2.bf16.msra.mxu0 0
    %4173 = vmatprep.subr.bf16.mxu0 0
    %4174 = vmatpush2.bf16.msra.mxu0 0
    %4175 = vmatprep.subr.bf16.mxu0 0
    %4176 = vmatpush2.bf16.msra.mxu0 0
    %4177 = vmatprep.subr.bf16.mxu0 0
    %4178 = vmatpush2.bf16.msra.mxu0 0
    %4179 = vmatprep.subr.bf16.mxu0 0
    %4180 = vmatpush2.bf16.msra.mxu0 0
    %4181 = vmatprep.subr.bf16.mxu0 0
    %4182 = vmatpush2.bf16.msra.mxu0 0
    %4183 = vmatprep.subr.bf16.mxu0 0
    %4184 = vmatpush2.bf16.msra.mxu0 0
    %4185 = vmatprep.mubr.bf16.mxu0 0
    %4186 = vmatmul.mubr.bf16.gmra.mxu0 %v4111
    %v4187 = vpop.f32.mrf.mxu0
    %v4188 = vadd.f32 0.0, %v4187
    %v4189 = vpop.f32.mrf.mxu0
    %v4190 = vadd.f32 0.0, %v4189
    %v4191 = vpop.f32.mrf.mxu0
    %v4192 = vpop.f32.mrf.mxu0
    %4193 = vdwg.mxu0
    %v4194 = vadd.f32 %v4107, %v4147
    %v4195 = vadd.f32 %v4108, %v4149
    %v4196 = vadd.f32 %v4109, %v4188
    %v4197 = vadd.f32 %v4110, %v4190
    %v4198 = vxor.u32 %v4194, 2147483648
    %v4199 = vmul.f32 %v4198, 1.442695
    %v4200 = vpow.pop %v4199
    %v4201 = vadd.f32 %v4200, 1.0
    %v4202 = vrcp.pop %v4201
    %v4203 = vmul.f32 1.0, %v4202
    %v4204 = vxor.u32 %v4195, 2147483648
    %v4205 = vmul.f32 %v4204, 1.442695
    %v4206 = vpow.pop %v4205
    %v4207 = vadd.f32 %v4206, 1.0
    %v4208 = vrcp.pop %v4207
    %v4209 = vmul.f32 1.0, %v4208
    %v4210 = vtanh.pop %v4196
    %v4211 = vxor.u32 %v4197, 2147483648
    %v4212 = vmul.f32 %v4211, 1.442695
    %v4213 = vpow.pop %v4212
    %v4214 = vadd.f32 %v4213, 1.0
    %v4215 = vrcp.pop %v4214
    %v4216 = vmul.f32 1.0, %v4215
    %v4217 = vmul.f32 %v4209, %v4104
    %v4218 = vmul.f32 %v4203, %v4210
    %v4219 = vadd.f32 %v4217, %v4218
    %v4220 = vtanh.pop %v4219
    %v4221 = vmul.f32 %v4216, %v4220
    %v4222 = vld [vmem:[#allocation3 + $0xc0] sm:$0xff]
    %v4223 = vld [vmem:[#allocation3 + $0xc8] sm:$0xff]
    %v4224 = vld [vmem:[#allocation3 + $0xd0] sm:$0xff]
    %v4225 = vld [vmem:[#allocation3 + $0xd8] sm:$0xff]
    %v4226 = vpack.c.bf16 %v4221, %v4221
    %4227 = vmatprep.subr.bf16.mxu0 %v3502
    %4228 = vmatpush1.bf16.msra.mxu0 %v3501
    %4229 = vmatprep.subr.bf16.mxu0 %v3498
    %4230 = vmatpush1.bf16.msra.mxu0 %v3497
    %4231 = vmatprep.subr.bf16.mxu0 %v3494
    %4232 = vmatpush1.bf16.msra.mxu0 %v3493
    %4233 = vmatprep.subr.bf16.mxu0 %v3490
    %4234 = vmatpush1.bf16.msra.mxu0 %v3489
    %4235 = vmatprep.subr.bf16.mxu0 %v3486
    %4236 = vmatpush1.bf16.msra.mxu0 %v3485
    %4237 = vmatprep.subr.bf16.mxu0 %v3482
    %4238 = vmatpush1.bf16.msra.mxu0 %v3481
    %4239 = vmatprep.subr.bf16.mxu0 %v3478
    %4240 = vmatpush1.bf16.msra.mxu0 %v3477
    %4241 = vmatprep.subr.bf16.mxu0 %v3474
    %4242 = vmatpush1.bf16.msra.mxu0 %v3473
    %4243 = vmatprep.subr.bf16.mxu0 0
    %4244 = vmatpush2.bf16.msra.mxu0 0
    %4245 = vmatprep.subr.bf16.mxu0 0
    %4246 = vmatpush2.bf16.msra.mxu0 0
    %4247 = vmatprep.subr.bf16.mxu0 0
    %4248 = vmatpush2.bf16.msra.mxu0 0
    %4249 = vmatprep.subr.bf16.mxu0 0
    %4250 = vmatpush2.bf16.msra.mxu0 0
    %4251 = vmatprep.subr.bf16.mxu0 0
    %4252 = vmatpush2.bf16.msra.mxu0 0
    %4253 = vmatprep.subr.bf16.mxu0 0
    %4254 = vmatpush2.bf16.msra.mxu0 0
    %4255 = vmatprep.subr.bf16.mxu0 0
    %4256 = vmatpush2.bf16.msra.mxu0 0
    %4257 = vmatprep.subr.bf16.mxu0 0
    %4258 = vmatpush2.bf16.msra.mxu0 0
    %4259 = vmatprep.mubr.bf16.mxu0 0
    %4260 = vmatmul.mubr.bf16.gmra.mxu0 %v4226
    %v4261 = vpop.f32.mrf.mxu0
    %v4262 = vadd.f32 0.0, %v4261
    %v4263 = vpop.f32.mrf.mxu0
    %v4264 = vadd.f32 0.0, %v4263
    %v4265 = vpop.f32.mrf.mxu0
    %v4266 = vpop.f32.mrf.mxu0
    %4267 = vdwg.mxu0
    %4268 = vmatprep.subr.bf16.mxu0 %v3504
    %4269 = vmatpush1.bf16.msra.mxu0 %v3503
    %4270 = vmatprep.subr.bf16.mxu0 %v3500
    %4271 = vmatpush1.bf16.msra.mxu0 %v3499
    %4272 = vmatprep.subr.bf16.mxu0 %v3496
    %4273 = vmatpush1.bf16.msra.mxu0 %v3495
    %4274 = vmatprep.subr.bf16.mxu0 %v3492
    %4275 = vmatpush1.bf16.msra.mxu0 %v3491
    %4276 = vmatprep.subr.bf16.mxu0 %v3488
    %4277 = vmatpush1.bf16.msra.mxu0 %v3487
    %4278 = vmatprep.subr.bf16.mxu0 %v3484
    %4279 = vmatpush1.bf16.msra.mxu0 %v3483
    %4280 = vmatprep.subr.bf16.mxu0 %v3480
    %4281 = vmatpush1.bf16.msra.mxu0 %v3479
    %4282 = vmatprep.subr.bf16.mxu0 %v3476
    %4283 = vmatpush1.bf16.msra.mxu0 %v3475
    %4284 = vmatprep.subr.bf16.mxu0 0
    %4285 = vmatpush2.bf16.msra.mxu0 0
    %4286 = vmatprep.subr.bf16.mxu0 0
    %4287 = vmatpush2.bf16.msra.mxu0 0
    %4288 = vmatprep.subr.bf16.mxu0 0
    %4289 = vmatpush2.bf16.msra.mxu0 0
    %4290 = vmatprep.subr.bf16.mxu0 0
    %4291 = vmatpush2.bf16.msra.mxu0 0
    %4292 = vmatprep.subr.bf16.mxu0 0
    %4293 = vmatpush2.bf16.msra.mxu0 0
    %4294 = vmatprep.subr.bf16.mxu0 0
    %4295 = vmatpush2.bf16.msra.mxu0 0
    %4296 = vmatprep.subr.bf16.mxu0 0
    %4297 = vmatpush2.bf16.msra.mxu0 0
    %4298 = vmatprep.subr.bf16.mxu0 0
    %4299 = vmatpush2.bf16.msra.mxu0 0
    %4300 = vmatprep.mubr.bf16.mxu0 0
    %4301 = vmatmul.mubr.bf16.gmra.mxu0 %v4226
    %v4302 = vpop.f32.mrf.mxu0
    %v4303 = vadd.f32 0.0, %v4302
    %v4304 = vpop.f32.mrf.mxu0
    %v4305 = vadd.f32 0.0, %v4304
    %v4306 = vpop.f32.mrf.mxu0
    %v4307 = vpop.f32.mrf.mxu0
    %4308 = vdwg.mxu0
    %v4309 = vadd.f32 %v4222, %v4262
    %v4310 = vadd.f32 %v4223, %v4264
    %v4311 = vadd.f32 %v4224, %v4303
    %v4312 = vadd.f32 %v4225, %v4305
    %v4313 = vxor.u32 %v4309, 2147483648
    %v4314 = vmul.f32 %v4313, 1.442695
    %v4315 = vpow.pop %v4314
    %v4316 = vadd.f32 %v4315, 1.0
    %v4317 = vrcp.pop %v4316
    %v4318 = vmul.f32 1.0, %v4317
    %v4319 = vxor.u32 %v4310, 2147483648
    %v4320 = vmul.f32 %v4319, 1.442695
    %v4321 = vpow.pop %v4320
    %v4322 = vadd.f32 %v4321, 1.0
    %v4323 = vrcp.pop %v4322
    %v4324 = vmul.f32 1.0, %v4323
    %v4325 = vtanh.pop %v4311
    %v4326 = vxor.u32 %v4312, 2147483648
    %v4327 = vmul.f32 %v4326, 1.442695
    %v4328 = vpow.pop %v4327
    %v4329 = vadd.f32 %v4328, 1.0
    %v4330 = vrcp.pop %v4329
    %v4331 = vmul.f32 1.0, %v4330
    %v4332 = vmul.f32 %v4324, %v4219
    %v4333 = vmul.f32 %v4318, %v4325
    %v4334 = vadd.f32 %v4332, %v4333
    %v4335 = vtanh.pop %v4334
    %v4336 = vmul.f32 %v4331, %v4335
    %v4337 = vld [vmem:[#allocation3 + $0xe0] sm:$0xff]
    %v4338 = vld [vmem:[#allocation3 + $0xe8] sm:$0xff]
    %v4339 = vld [vmem:[#allocation3 + $0xf0] sm:$0xff]
    %v4340 = vld [vmem:[#allocation3 + $0xf8] sm:$0xff]
    %v4341 = vpack.c.bf16 %v4336, %v4336
    %4342 = vmatprep.subr.bf16.mxu0 %v3502
    %4343 = vmatpush1.bf16.msra.mxu0 %v3501
    %4344 = vmatprep.subr.bf16.mxu0 %v3498
    %4345 = vmatpush1.bf16.msra.mxu0 %v3497
    %4346 = vmatprep.subr.bf16.mxu0 %v3494
    %4347 = vmatpush1.bf16.msra.mxu0 %v3493
    %4348 = vmatprep.subr.bf16.mxu0 %v3490
    %4349 = vmatpush1.bf16.msra.mxu0 %v3489
    %4350 = vmatprep.subr.bf16.mxu0 %v3486
    %4351 = vmatpush1.bf16.msra.mxu0 %v3485
    %4352 = vmatprep.subr.bf16.mxu0 %v3482
    %4353 = vmatpush1.bf16.msra.mxu0 %v3481
    %4354 = vmatprep.subr.bf16.mxu0 %v3478
    %4355 = vmatpush1.bf16.msra.mxu0 %v3477
    %4356 = vmatprep.subr.bf16.mxu0 %v3474
    %4357 = vmatpush1.bf16.msra.mxu0 %v3473
    %4358 = vmatprep.subr.bf16.mxu0 0
    %4359 = vmatpush2.bf16.msra.mxu0 0
    %4360 = vmatprep.subr.bf16.mxu0 0
    %4361 = vmatpush2.bf16.msra.mxu0 0
    %4362 = vmatprep.subr.bf16.mxu0 0
    %4363 = vmatpush2.bf16.msra.mxu0 0
    %4364 = vmatprep.subr.bf16.mxu0 0
    %4365 = vmatpush2.bf16.msra.mxu0 0
    %4366 = vmatprep.subr.bf16.mxu0 0
    %4367 = vmatpush2.bf16.msra.mxu0 0
    %4368 = vmatprep.subr.bf16.mxu0 0
    %4369 = vmatpush2.bf16.msra.mxu0 0
    %4370 = vmatprep.subr.bf16.mxu0 0
    %4371 = vmatpush2.bf16.msra.mxu0 0
    %4372 = vmatprep.subr.bf16.mxu0 0
    %4373 = vmatpush2.bf16.msra.mxu0 0
    %4374 = vmatprep.mubr.bf16.mxu0 0
    %4375 = vmatmul.mubr.bf16.gmra.mxu0 %v4341
    %v4376 = vpop.f32.mrf.mxu0
    %v4377 = vadd.f32 0.0, %v4376
    %v4378 = vpop.f32.mrf.mxu0
    %v4379 = vadd.f32 0.0, %v4378
    %v4380 = vpop.f32.mrf.mxu0
    %v4381 = vpop.f32.mrf.mxu0
    %4382 = vdwg.mxu0
    %4383 = vmatprep.subr.bf16.mxu0 %v3504
    %4384 = vmatpush1.bf16.msra.mxu0 %v3503
    %4385 = vmatprep.subr.bf16.mxu0 %v3500
    %4386 = vmatpush1.bf16.msra.mxu0 %v3499
    %4387 = vmatprep.subr.bf16.mxu0 %v3496
    %4388 = vmatpush1.bf16.msra.mxu0 %v3495
    %4389 = vmatprep.subr.bf16.mxu0 %v3492
    %4390 = vmatpush1.bf16.msra.mxu0 %v3491
    %4391 = vmatprep.subr.bf16.mxu0 %v3488
    %4392 = vmatpush1.bf16.msra.mxu0 %v3487
    %4393 = vmatprep.subr.bf16.mxu0 %v3484
    %4394 = vmatpush1.bf16.msra.mxu0 %v3483
    %4395 = vmatprep.subr.bf16.mxu0 %v3480
    %4396 = vmatpush1.bf16.msra.mxu0 %v3479
    %4397 = vmatprep.subr.bf16.mxu0 %v3476
    %4398 = vmatpush1.bf16.msra.mxu0 %v3475
    %4399 = vmatprep.subr.bf16.mxu0 0
    %4400 = vmatpush2.bf16.msra.mxu0 0
    %4401 = vmatprep.subr.bf16.mxu0 0
    %4402 = vmatpush2.bf16.msra.mxu0 0
    %4403 = vmatprep.subr.bf16.mxu0 0
    %4404 = vmatpush2.bf16.msra.mxu0 0
    %4405 = vmatprep.subr.bf16.mxu0 0
    %4406 = vmatpush2.bf16.msra.mxu0 0
    %4407 = vmatprep.subr.bf16.mxu0 0
    %4408 = vmatpush2.bf16.msra.mxu0 0
    %4409 = vmatprep.subr.bf16.mxu0 0
    %4410 = vmatpush2.bf16.msra.mxu0 0
    %4411 = vmatprep.subr.bf16.mxu0 0
    %4412 = vmatpush2.bf16.msra.mxu0 0
    %4413 = vmatprep.subr.bf16.mxu0 0
    %4414 = vmatpush2.bf16.msra.mxu0 0
    %4415 = vmatprep.mubr.bf16.mxu0 0
    %4416 = vmatmul.mubr.bf16.gmra.mxu0 %v4341
    %v4417 = vpop.f32.mrf.mxu0
    %v4418 = vadd.f32 0.0, %v4417
    %v4419 = vpop.f32.mrf.mxu0
    %v4420 = vadd.f32 0.0, %v4419
    %v4421 = vpop.f32.mrf.mxu0
    %v4422 = vpop.f32.mrf.mxu0
    %4423 = vdwg.mxu0
    %v4424 = vadd.f32 %v4337, %v4377
    %v4425 = vadd.f32 %v4338, %v4379
    %v4426 = vadd.f32 %v4339, %v4418
    %v4427 = vadd.f32 %v4340, %v4420
    %v4428 = vxor.u32 %v4424, 2147483648
    %v4429 = vmul.f32 %v4428, 1.442695
    %v4430 = vpow.pop %v4429
    %v4431 = vadd.f32 %v4430, 1.0
    %v4432 = vrcp.pop %v4431
    %v4433 = vmul.f32 1.0, %v4432
    %v4434 = vxor.u32 %v4425, 2147483648
    %v4435 = vmul.f32 %v4434, 1.442695
    %v4436 = vpow.pop %v4435
    %v4437 = vadd.f32 %v4436, 1.0
    %v4438 = vrcp.pop %v4437
    %v4439 = vmul.f32 1.0, %v4438
    %v4440 = vtanh.pop %v4426
    %v4441 = vxor.u32 %v4427, 2147483648
    %v4442 = vmul.f32 %v4441, 1.442695
    %v4443 = vpow.pop %v4442
    %v4444 = vadd.f32 %v4443, 1.0
    %v4445 = vrcp.pop %v4444
    %v4446 = vmul.f32 1.0, %v4445
    %v4447 = vmul.f32 %v4439, %v4334
    %v4448 = vmul.f32 %v4433, %v4440
    %v4449 = vadd.f32 %v4447, %v4448
    %v4450 = vtanh.pop %v4449
    %v4451 = vmul.f32 %v4446, %v4450
    %v4452 = vpack.c.bf16 %v4451, %v4451
    %v4453 = vld [vmem:[%s5] sm:$0xf]
    %v4454 = vld [vmem:[%s5 + $0x4] sm:$0xf]
    %v4455 = vld [vmem:[%s5 + $0x8] sm:$0xf]
    %v4456 = vld [vmem:[%s5 + $0xc] sm:$0xf]
    %v4457 = vld [vmem:[%s5 + $0x10] sm:$0xf]
    %v4458 = vld [vmem:[%s5 + $0x14] sm:$0xf]
    %v4459 = vld [vmem:[%s5 + $0x18] sm:$0xf]
    %v4460 = vld [vmem:[%s5 + $0x1c] sm:$0xf]
    %v4461 = vld [vmem:[%s5 + $0x20] sm:$0xf]
    %v4462 = vld [vmem:[%s5 + $0x24] sm:$0xf]
    %v4463 = vld [vmem:[%s5 + $0x28] sm:$0xf]
    %v4464 = vld [vmem:[%s5 + $0x2c] sm:$0xf]
    %v4465 = vld [vmem:[%s5 + $0x30] sm:$0xf]
    %v4466 = vld [vmem:[%s5 + $0x34] sm:$0xf]
    %v4467 = vld [vmem:[%s5 + $0x38] sm:$0xf]
    %v4468 = vld [vmem:[%s5 + $0x3c] sm:$0xf]
    %v4469 = vld [vmem:[%s6] sm:$0x1]
    %v4471 = vlaneseq
    %v4472 = vshrl.u32 %v4471, 7
    %v4473 = vsub.s32 0, %v4472
    %v4474 = vrot.slane %v4469, %v4473
    %v4492 = vunpack.c.l.b16 %v4453
    %v4493 = vunpack.c.l.b16 %v4454
    %v4494 = vunpack.c.l.b16 %v4455
    %v4495 = vunpack.c.l.b16 %v4456
    %v4496 = vunpack.c.l.b16 %v4457
    %v4497 = vunpack.c.l.b16 %v4458
    %v4498 = vunpack.c.l.b16 %v4459
    %v4499 = vunpack.c.l.b16 %v4460
    %v4500 = vunpack.c.l.b16 %v4461
    %v4501 = vunpack.c.l.b16 %v4462
    %v4502 = vunpack.c.l.b16 %v4463
    %v4503 = vunpack.c.l.b16 %v4464
    %v4504 = vunpack.c.l.b16 %v4465
    %v4505 = vunpack.c.l.b16 %v4466
    %v4506 = vunpack.c.l.b16 %v4467
    %v4507 = vunpack.c.l.b16 %v4468
    %v4508 = vpack.c.b16 %v4493, %v4492
    %v4509 = vpack.c.b16 %v4495, %v4494
    %v4510 = vpack.c.b16 %v4497, %v4496
    %v4511 = vpack.c.b16 %v4499, %v4498
    %v4512 = vpack.c.b16 %v4501, %v4500
    %v4513 = vpack.c.b16 %v4503, %v4502
    %v4514 = vpack.c.b16 %v4505, %v4504
    %v4515 = vpack.c.b16 %v4507, %v4506
    %4524 = vmatprep.subr.bf16.mxu0 0
    %4525 = vmatpush1.bf16.msra.mxu0 %v4515
    %4526 = vmatprep.subr.bf16.mxu0 0
    %4527 = vmatpush1.bf16.msra.mxu0 %v4514
    %4528 = vmatprep.subr.bf16.mxu0 0
    %4529 = vmatpush1.bf16.msra.mxu0 %v4513
    %4530 = vmatprep.subr.bf16.mxu0 0
    %4531 = vmatpush1.bf16.msra.mxu0 %v4512
    %4532 = vmatprep.subr.bf16.mxu0 0
    %4533 = vmatpush1.bf16.msra.mxu0 %v4511
    %4534 = vmatprep.subr.bf16.mxu0 0
    %4535 = vmatpush1.bf16.msra.mxu0 %v4510
    %4536 = vmatprep.subr.bf16.mxu0 0
    %4537 = vmatpush1.bf16.msra.mxu0 %v4509
    %4538 = vmatprep.subr.bf16.mxu0 0
    %4539 = vmatpush1.bf16.msra.mxu0 %v4508
    %4540 = vmatprep.subr.bf16.mxu0 0
    %4541 = vmatpush2.bf16.msra.mxu0 0
    %4542 = vmatprep.subr.bf16.mxu0 0
    %4543 = vmatpush2.bf16.msra.mxu0 0
    %4544 = vmatprep.subr.bf16.mxu0 0
    %4545 = vmatpush2.bf16.msra.mxu0 0
    %4546 = vmatprep.subr.bf16.mxu0 0
    %4547 = vmatpush2.bf16.msra.mxu0 0
    %4548 = vmatprep.subr.bf16.mxu0 0
    %4549 = vmatpush2.bf16.msra.mxu0 0
    %4550 = vmatprep.subr.bf16.mxu0 0
    %4551 = vmatpush2.bf16.msra.mxu0 0
    %4552 = vmatprep.subr.bf16.mxu0 0
    %4553 = vmatpush2.bf16.msra.mxu0 0
    %4554 = vmatprep.subr.bf16.mxu0 0
    %4555 = vmatpush2.bf16.msra.mxu0 0
    %4556 = vmatprep.mubr.bf16.mxu0 0
    %4557 = vmatmul.mubr.bf16.gmra.mxu0 %v4452
    %v4558 = vpop.f32.mrf.mxu0
    %v4559 = vadd.f32 %v4474, %v4558
    %v4560 = vpop.f32.mrf.mxu0
    %v4561 = vpop.f32.mrf.mxu0
    %v4562 = vpop.f32.mrf.mxu0
    %4563 = vdwg.mxu0
    %4564 = vst [vmem:[%s7] sm:$0xff] %v4559
    // Predicated region
    $region42: #{lstm_model_forward.1} parent=1 // pred_check
      _
    $region43: #{lstm_model_forward.1} parent=1 // pred_check_branch
      %4566 = sbr.rel (0) target = $region45
    $region44: #{lstm_model_forward.1} parent=1 // pred_region
      _
    $region45: #{lstm_model_forward.1} parent=1 // pred_fallthru
      _
    // Predicated region
    $region46: #{lstm_model_forward.1} parent=1 // pred_check
      _
    $region47: #{lstm_model_forward.1} parent=1 // pred_check_branch
      %4568 = sbr.rel (0) target = $region49
    $region48: #{lstm_model_forward.1} parent=1 // pred_region
      _
    $region49: #{lstm_model_forward.1} parent=1 // pred_fallthru
      _
    %4569 = vsyncpa [#allocation5], 1
    %4570 = vsyncpa [#allocation7], 1

</llo_original>
